<compile_context>
chip_gen: v6e
topology: v6e:2x2x1
jax: 0.10.0
libtpu: 0.0.40
codegen_flags: <defaults>
</compile_context>

<pallas_src>
import functools

import jax
import jax.numpy as jnp
import numpy as np
from jax.experimental import pallas as pl
from jax.experimental.pallas import tpu as pltpu


def _round_up(x, m):
    return ((x + m - 1) // m) * m


def _pow_pos(x, a):
    # x >= 0, a > 0: x**a == exp(a*log(x)); 0**a -> exp(-inf) == 0 (forward ok).
    return jnp.exp(a * jnp.log(x))


def _gru_mmm_kernel(
    # sequence inputs, time-major flat: row r = t*BB + b   (f32)
    xm_ref, xc_ref,                    # (TB, M), (TB, C)
    # causal encoder (layer-1 pre-folded); bf16 weights / f32 biases
    w1_ref, be1_ref,                   # (M, M), (1, M)
    we2_ref, be2_ref,                  # (M, M), (1, M)
    wnx_ref, wnh_ref, bn_ref,          # (M, M), (M, M), (1, M)
    # GRU: operands (media|ctrl) fused along K, gates (r,z,n) fused along N
    wih_ref, bih_ref,                  # (M+C, 3Hp) bf16, (1, 3Hp) f32 (bhh_r/z folded in)
    whh_ref, bhhn_ref,                 # (Hp, 3Hp) bf16, (1, Hp) f32 (n-gate bhh)
    # heads / saturation params
    ww_ref, bw_ref,                    # (Hp, M) bf16, (1, M) f32
    alpha_ref, ha_ref, alg_ref,        # (1, M) f32 each: clip(alpha), clip(a), a*log(clip(g))
    wc_ref, bc_ref,                    # (C, Hp) bf16, (1, Hp) f32
    h0_ref,                            # (1, Hp) f32
    # output: packed lane-dense slab [wpos(M) | contrib(M) | y(1) | zeros]
    out_ref,                           # (TB, P) f32
    # scratch
    hist_s,                            # (TB, Hp) f32 GRU hidden history
    *, T,
):
    TB, M = xm_ref.shape
    BB = TB // T
    Hp = whh_ref.shape[0]
    P = out_ref.shape[-1]
    f32, bf16 = jnp.float32, jnp.bfloat16

    def dot(a, b):
        return jnp.dot(a, b, preferred_element_type=f32)

    xm = xm_ref[...]                                   # (TB, M) f32
    xc = xc_ref[...]                                   # (TB, C) f32
    xm_b = xm.astype(bf16)

    # ---- CausalEncoder (layer-1 folded into one matmul), batched over T*BB ----
    he = jnp.maximum(dot(xm_b, w1_ref[...]) + be1_ref[...], 0.0)
    he = jnp.maximum(dot(he.astype(bf16), we2_ref[...]) + be2_ref[...], 0.0)
    z_enc = jnp.maximum(
        dot(xm_b, wnx_ref[...]) + dot(he.astype(bf16), wnh_ref[...]) + bn_ref[...], 0.0)

    # ---- adstock recursion (f32 carry stays in vregs) + per-channel max -------
    # TODO(synk): for long horizons (T >~ 50) stream ad[t] through a VMEM scratch
    #             with lax.fori_loop instead of holding T vreg tiles live.
    alpha = alpha_ref[...]                             # (1, M) pre-clipped
    ad = [xm[0:BB, :]]
    cmax = ad[0]
    for t in range(1, T):                              # static full unroll
        cur = xm[t * BB:(t + 1) * BB, :] + alpha * ad[-1]
        ad.append(cur)
        cmax = jnp.maximum(cmax, cur)

    # ---- hill saturation, fully in-register (no VMEM staging round-trip) ------
    #   num/(num + g^a)  ==  sigmoid(a*log(ad_norm) - a*log(g)); divides removed.
    log_cmax = jnp.log(jnp.maximum(cmax, 1e-6))        # (BB, M)
    logn = [jnp.log(jnp.maximum(a_t, 0.0)) - log_cmax for a_t in ad]
    logn_full = jnp.concatenate(logn, axis=0) if T > 1 else logn[0]   # (TB, M)
    hill = jax.nn.sigmoid(ha_ref[...] * logn_full - alg_ref[...])     # (TB, M) f32
    media_in = hill + z_enc                                           # (TB, M) f32

    # ---- GRU input projection: all timesteps / gates / operands in ONE dot ----
    gru_in = jnp.concatenate([media_in, xc], axis=-1).astype(bf16)    # (TB, M+C)
    gates_x = dot(gru_in, wih_ref[...]) + bih_ref[...]                # (TB, 3Hp) f32

    # ---- sequential GRU recurrence --------------------------------------------
    # TODO(synk): hold whh resident in MXU weight staging across the T serial
    #             steps via pltpu.matmul_push_rhs/matmul_acc_lhs once vetted.
    whh = whh_ref[...]                                 # (Hp, 3Hp) bf16, hoisted
    bhh_n = bhhn_ref[...]                              # (1, Hp) f32
    h = jnp.broadcast_to(h0_ref[...], (BB, Hp))        # (BB, Hp) f32
    for t in range(T):                                 # static full unroll
        gx = gates_x[t * BB:(t + 1) * BB, :]           # (BB, 3Hp) aligned slice
        gh = dot(h.astype(bf16), whh)                  # (BB, 3Hp) f32
        r = jax.nn.sigmoid(gx[:, 0:Hp] + gh[:, 0:Hp])
        z = jax.nn.sigmoid(gx[:, Hp:2 * Hp] + gh[:, Hp:2 * Hp])
        n = jnp.tanh(gx[:, 2 * Hp:] + r * (gh[:, 2 * Hp:] + bhh_n))
        h = (1.0 - z) * n + z * h
        hist_s[t * BB:(t + 1) * BB, :] = h             # aligned full-tile store

    # ---- post-recurrence batched heads; one lane-dense packed store -----------
    wpos = jax.nn.softplus(dot(hist_s[...].astype(bf16), ww_ref[...]) + bw_ref[...])  # (TB, M)
    if T > 1:  # t=0 blend done in-register (matches w_pos[:, 0, :] in the module)
        blend = 0.5 * wpos[BB:2 * BB, :] + 0.5 * wpos[0:BB, :]
        wpos = jnp.concatenate([blend, wpos[BB:, :]], axis=0)

    contrib = hill * wpos                                             # (TB, M)
    media_term = jnp.sum(contrib, axis=-1, keepdims=True)             # (TB, 1)
    ctrl = jnp.maximum(dot(xc.astype(bf16), wc_ref[...]) + bc_ref[...], 0.0)  # (TB, Hp)
    y = media_term + jnp.sum(ctrl, axis=-1, keepdims=True) * 0.3      # (TB, 1)

    pad = jnp.zeros((TB, P - (2 * M + 1)), f32)
    out_ref[...] = jnp.concatenate([wpos, contrib, y, pad], axis=-1)  # full-width store


def gru_causal_mmm_forward(Xm, Xc, R, p, *, batch_block=None):
    """Returns (y_scaled (B,T), w_pos (B,T,M), media_contrib_scaled (B,T,M))."""
    del R  # TODO(synk): the reference module embeds region index 0 for every batch
    #                    element, so the region term is the constant added below.
    B, T, M = Xm.shape
    C = Xc.shape[-1]
    H = p["whh"].shape[-1]
    Hp = _round_up(H, 128)               # lane-dense hidden dim (64 -> 128)
    f32, bf16 = jnp.float32, jnp.bfloat16

    if batch_block is None:
        BB = min(_round_up(B, 8), 128)   # grow batch rows toward MXU row count
        if B > 8 and -(-B // BB) < 2:    # v7x: prefer >=2 blocks so both TCs get work
            BB = _round_up(-(-B // 2), 8)
    else:
        BB = batch_block
    Bgrid = -(-B // BB)
    Bp = Bgrid * BB
    TB = T * BB
    P = _round_up(2 * M + 1, 128)        # packed output slab width (lane-dense)

    def to_blocks(x):                    # (B,T,F) -> (Bgrid*TB, F), time-major per block
        F = x.shape[-1]
        xp = jnp.pad(x.astype(f32), ((0, Bp - B), (0, 0), (0, 0)))
        return xp.reshape(Bgrid, BB, T, F).transpose(0, 2, 1, 3).reshape(Bgrid * TB, F)

    def from_blocks(z):                  # inverse; drop batch padding
        F = z.shape[-1]
        return z.reshape(Bgrid, T, BB, F).transpose(0, 2, 1, 3).reshape(Bp, T, F)[:B]

    pad_cols = lambda w: jnp.pad(w.astype(f32), ((0, 0), (0, Hp - H)))
    pad_vec = lambda v: jnp.pad(v.astype(f32), (0, Hp - H)).reshape(1, Hp)

    # Encoder layer-1 fold:  X@A.T@We1s + X@A@We1r == X @ (A.T@We1s + A@We1r).
    A = p["A"].astype(f32)
    w1 = (A.T @ p["we1"][0].astype(f32) + A @ p["we1"][1].astype(f32)).astype(bf16)

    # GRU weights: fuse (media|ctrl) along K and gates (r,z,n) along N; zero-pad
    # H -> Hp (zero padding keeps the padded hidden lanes identically zero).
    wih_g = [jnp.concatenate([p["wih_m"][g], p["wih_c"][g]], axis=0) for g in range(3)]
    wih_f = jnp.concatenate([pad_cols(w) for w in wih_g], axis=1).astype(bf16)   # (M+C, 3Hp)
    whh_f = jnp.concatenate(
        [jnp.pad(p["whh"][g].astype(f32), ((0, Hp - H), (0, Hp - H))) for g in range(3)],
        axis=1).astype(bf16)                                                     # (Hp, 3Hp)
    bih_f = jnp.concatenate(                                                     # (1, 3Hp)
        [pad_vec(p["bih"][0] + p["bhh"][0]),       # r: fold bhh_r into bih_r
         pad_vec(p["bih"][1] + p["bhh"][1]),       # z: fold bhh_z into bih_z
         pad_vec(p["bih"][2])], axis=1)            # n: bhh_n must stay inside r*( )
    bhh_n = pad_vec(p["bhh"][2])                                                 # (1, Hp)

    ww_p = jnp.pad(p["ww"].astype(f32), ((0, Hp - H), (0, 0))).astype(bf16)      # (Hp, M)
    wc_p = pad_cols(p["wc"]).astype(bf16)                                        # (C, Hp)
    bc_p = pad_vec(p["bc"])
    h0_p = pad_vec(p["h0"])

    alpha_c = jnp.clip(p["alpha"].astype(f32), 0.0, 1.0).reshape(1, M)
    hill_a = jnp.clip(p["hill_a"].astype(f32), 0.1, 3.0).reshape(1, M)
    hill_g = jnp.clip(p["hill_g"].astype(f32), 0.1, 2.0).reshape(1, M)
    a_log_g = hill_a * jnp.log(hill_g)

    inputs = [
        to_blocks(Xm), to_blocks(Xc),
        w1, p["be1"].reshape(1, M).astype(f32),
        p["we2"].astype(bf16), p["be2"].reshape(1, M).astype(f32),
        p["wn"][0].astype(bf16), p["wn"][1].astype(bf16), p["bn"].reshape(1, M).astype(f32),
        wih_f, bih_f, whh_f, bhh_n,
        ww_p, p["bw"].reshape(1, M).astype(f32),
        alpha_c, hill_a, a_log_g,
        wc_p, bc_p, h0_p,
    ]

    def seq_spec(F):
        return pl.BlockSpec((TB, F), lambda i: (i, 0))

    def full_spec(arr):
        nd = arr.ndim
        return pl.BlockSpec(tuple(arr.shape), lambda i, _nd=nd: (0,) * _nd)

    in_specs = [seq_spec(M), seq_spec(C)] + [full_spec(a) for a in inputs[2:]]

    packed = pl.pallas_call(
        functools.partial(_gru_mmm_kernel, T=T),
        out_shape=jax.ShapeDtypeStruct((Bgrid * TB, P), f32),
        grid=(Bgrid,),
        in_specs=in_specs,
        out_specs=seq_spec(P),
        scratch_shapes=[pltpu.VMEM((TB, Hp), f32)],   # GRU hidden history
        compiler_params=pltpu.CompilerParams(dimension_semantics=("parallel",)),
    )(*inputs)

    packed = from_blocks(packed)                              # (B, T, P)
    w_pos = packed[..., 0:M]
    contrib = packed[..., M:2 * M]
    cbias = jnp.sum(p["reg_emb"][0]) * 0.3 + p["bias"][0]     # constant region-0 term + bias
    y = packed[..., 2 * M] + cbias                            # (B, T)
    return y, w_pos, contrib


# ------------------------- deterministic parameter init -------------------------
def init_params(key, n_media=10, ctrl_dim=15, hidden=64, n_regions=2):
    M, C, H = n_media, ctrl_dim, hidden
    ks = jax.random.split(key, 16)

    def u(k, shape, scale):
        return jax.random.uniform(k, shape, jnp.float32, -scale, scale)

    return dict(
        A=(jax.random.uniform(ks[0], (M, M)) < 0.3).astype(jnp.float32),
        we1=u(ks[1], (2, M, M), 0.3),            # edge Linear(2M,M), split & transposed
        be1=jnp.zeros((M,), jnp.float32),
        we2=u(ks[2], (M, M), 0.3),               # edge Linear(M,M)
        be2=jnp.zeros((M,), jnp.float32),
        wn=u(ks[3], (2, M, M), 0.3),             # node Linear(2M,M), split & transposed
        bn=jnp.zeros((M,), jnp.float32),
        wih_m=u(ks[4], (3, M, H), 0.15),         # GRU W_ih (media part), gates r,z,n
        wih_c=u(ks[5], (3, C, H), 0.15),         # GRU W_ih (ctrl part)
        whh=u(ks[6], (3, H, H), 0.12),           # GRU W_hh
        bih=u(ks[7], (3, H), 0.1),
        bhh=u(ks[8], (3, H), 0.1),
        ww=u(ks[9], (H, M), 0.03),               # w_raw (xavier, gain 0.1 -> small)
        bw=jnp.zeros((M,), jnp.float32),
        alpha=jnp.full((M,), 0.5, jnp.float32),
        hill_a=jax.random.uniform(ks[10], (M,), jnp.float32, 0.6, 1.4),  # rand*0.8+0.6
        hill_g=jax.random.uniform(ks[11], (M,), jnp.float32, 0.1, 0.4),  # rand*0.3+0.1
        wc=u(ks[12], (C, H), 0.2),               # ctrl_mlp
        bc=jnp.zeros((H,), jnp.float32),
        reg_emb=jax.random.normal(ks[13], (n_regions, H), jnp.float32),
        bias=jnp.zeros((1,), jnp.float32),
        h0=jnp.zeros((H,), jnp.float32),
    )


# ------------------------- pure-JAX reference (for checking) --------------------
def reference_forward(Xm, Xc, R, p):
    del R
    B, T, M = Xm.shape
    H = p["whh"].shape[-1]
    A = p["A"]

    def enc(x):  # (B,M)
        send, recv = x @ A.T, x @ A
        he = jax.nn.relu(send @ p["we1"][0] + recv @ p["we1"][1] + p["be1"])
        he = jax.nn.relu(he @ p["we2"] + p["be2"])
        return jax.nn.relu(x @ p["wn"][0] + he @ p["wn"][1] + p["bn"])

    Z = jnp.stack([enc(Xm[:, t]) for t in range(T)], axis=1)      # (B,T,M)

    alpha = jnp.clip(p["alpha"], 0.0, 1.0)
    ad = [Xm[:, 0]]
    for t in range(1, T):
        ad.append(Xm[:, t] + alpha * ad[-1])
    ad = jnp.stack(ad, axis=1)
    cmax = jnp.maximum(jnp.max(ad, axis=1, keepdims=True), 1e-6)
    ad_norm = ad / cmax
    a = jnp.clip(p["hill_a"], 0.1, 3.0)
    g = jnp.clip(p["hill_g"], 0.1, 2.0)
    num = _pow_pos(jnp.maximum(ad_norm, 0.0), a)
    hill = num / (num + _pow_pos(g, a) + 1e-8)

    media_in = hill + Z
    h = jnp.broadcast_to(p["h0"], (B, H))
    hs = []
    for t in range(T):
        x_t, c_t = media_in[:, t], Xc[:, t]
        i_r = x_t @ p["wih_m"][0] + c_t @ p["wih_c"][0] + p["bih"][0]
        i_z = x_t @ p["wih_m"][1] + c_t @ p["wih_c"][1] + p["bih"][1]
        i_n = x_t @ p["wih_m"][2] + c_t @ p["wih_c"][2] + p["bih"][2]
        h_r = h @ p["whh"][0] + p["bhh"][0]
        h_z = h @ p["whh"][1] + p["bhh"][1]
        h_n = h @ p["whh"][2] + p["bhh"][2]
        r = jax.nn.sigmoid(i_r + h_r)
        zg = jax.nn.sigmoid(i_z + h_z)
        n = jnp.tanh(i_n + r * h_n)
        h = (1.0 - zg) * n + zg * h
        hs.append(h)
    h_seq = jnp.stack(hs, axis=1)                                  # (B,T,H)

    w_pos = jax.nn.softplus(h_seq @ p["ww"] + p["bw"])
    if T > 1:
        w_pos = w_pos.at[:, 0].set(0.5 * w_pos[:, 1] + 0.5 * w_pos[:, 0])
    contrib = hill * w_pos
    media_term = contrib.sum(-1)
    ctrl_term = jax.nn.relu(Xc @ p["wc"] + p["bc"]).sum(-1) * 0.3
    reg_term = jnp.sum(p["reg_emb"][0]) * 0.3
    y = media_term + ctrl_term + reg_term + p["bias"][0]
    return y, w_pos, contrib


if __name__ == "__main__":
    B, T, M, C, H, NREG = 2, 8, 10, 15, 64, 2
    key = jax.random.PRNGKey(0)
    kp, kx, kc = jax.random.split(key, 3)

    params = init_params(kp, n_media=M, ctrl_dim=C, hidden=H, n_regions=NREG)
    Xm = jnp.abs(jax.random.normal(kx, (B, T, M), jnp.float32))   # media spend >= 0
    Xc = jax.random.normal(kc, (B, T, C), jnp.float32)
    R = jnp.zeros((B,), jnp.int32)

    fwd = jax.jit(gru_causal_mmm_forward)
    y, w_pos, contrib = fwd(Xm, Xc, R, params)
    jax.block_until_ready((y, w_pos, contrib))

    assert y.shape == (B, T) and w_pos.shape == (B, T, M) and contrib.shape == (B, T, M)

    y_ref, w_ref, c_ref = reference_forward(Xm, Xc, R, params)
    # bf16 MXU operands (f32 accumulation) + hill sigmoid rewrite -> compare at 1e-2.
    np.testing.assert_allclose(np.asarray(y), np.asarray(y_ref), rtol=1e-2, atol=1e-2)
    np.testing.assert_allclose(np.asarray(w_pos), np.asarray(w_ref), rtol=1e-2, atol=1e-2)
    np.testing.assert_allclose(np.asarray(contrib), np.asarray(c_ref), rtol=1e-2, atol=1e-2)

    print("KERNEL_OK")
</pallas_src>

<mosaic_0001>
module attributes {stable_mosaic.version = 11 : i64} {
  func.func @_gru_mmm_kernel(%arg0: i32, %arg1: memref<64x10xf32, #tpu.memory_space<vmem>>, %arg2: memref<64x15xf32, #tpu.memory_space<vmem>>, %arg3: memref<10x10xbf16, #tpu.memory_space<vmem>>, %arg4: memref<1x10xf32, #tpu.memory_space<vmem>>, %arg5: memref<10x10xbf16, #tpu.memory_space<vmem>>, %arg6: memref<1x10xf32, #tpu.memory_space<vmem>>, %arg7: memref<10x10xbf16, #tpu.memory_space<vmem>>, %arg8: memref<10x10xbf16, #tpu.memory_space<vmem>>, %arg9: memref<1x10xf32, #tpu.memory_space<vmem>>, %arg10: memref<25x384xbf16, #tpu.memory_space<vmem>>, %arg11: memref<1x384xf32, #tpu.memory_space<vmem>>, %arg12: memref<128x384xbf16, #tpu.memory_space<vmem>>, %arg13: memref<1x128xf32, #tpu.memory_space<vmem>>, %arg14: memref<128x10xbf16, #tpu.memory_space<vmem>>, %arg15: memref<1x10xf32, #tpu.memory_space<vmem>>, %arg16: memref<1x10xf32, #tpu.memory_space<vmem>>, %arg17: memref<1x10xf32, #tpu.memory_space<vmem>>, %arg18: memref<1x10xf32, #tpu.memory_space<vmem>>, %arg19: memref<15x128xbf16, #tpu.memory_space<vmem>>, %arg20: memref<1x128xf32, #tpu.memory_space<vmem>>, %arg21: memref<1x128xf32, #tpu.memory_space<vmem>>, %arg22: memref<64x128xf32, #tpu.memory_space<vmem>>, %arg23: memref<64x128xf32, #tpu.memory_space<vmem>>) attributes {dimension_semantics = [#tpu.dimension_semantics<parallel>], iteration_bounds = array<i64: 1>, scalar_prefetch = 0 : i64, scratch_operands = 1 : i64, tpu.core_type = #tpu.core_type<tc>, window_params = [{transform_indices = @transform_0, window_bounds = array<i64: 64, 10>}, {transform_indices = @transform_1, window_bounds = array<i64: 64, 15>}, {pipeline_mode = #tpu.pipeline_mode<synchronous>, transform_indices = @transform_2, window_bounds = array<i64: 10, 10>}, {pipeline_mode = #tpu.pipeline_mode<synchronous>, transform_indices = @transform_3, window_bounds = array<i64: 1, 10>}, {pipeline_mode = #tpu.pipeline_mode<synchronous>, transform_indices = @transform_4, window_bounds = array<i64: 10, 10>}, {pipeline_mode = #tpu.pipeline_mode<synchronous>, transform_indices = @transform_5, window_bounds = array<i64: 1, 10>}, {pipeline_mode = #tpu.pipeline_mode<synchronous>, transform_indices = @transform_6, window_bounds = array<i64: 10, 10>}, {pipeline_mode = #tpu.pipeline_mode<synchronous>, transform_indices = @transform_7, window_bounds = array<i64: 10, 10>}, {pipeline_mode = #tpu.pipeline_mode<synchronous>, transform_indices = @transform_8, window_bounds = array<i64: 1, 10>}, {pipeline_mode = #tpu.pipeline_mode<synchronous>, transform_indices = @transform_9, window_bounds = array<i64: 25, 384>}, {pipeline_mode = #tpu.pipeline_mode<synchronous>, transform_indices = @transform_10, window_bounds = array<i64: 1, 384>}, {pipeline_mode = #tpu.pipeline_mode<synchronous>, transform_indices = @transform_11, window_bounds = array<i64: 128, 384>}, {pipeline_mode = #tpu.pipeline_mode<synchronous>, transform_indices = @transform_12, window_bounds = array<i64: 1, 128>}, {pipeline_mode = #tpu.pipeline_mode<synchronous>, transform_indices = @transform_13, window_bounds = array<i64: 128, 10>}, {pipeline_mode = #tpu.pipeline_mode<synchronous>, transform_indices = @transform_14, window_bounds = array<i64: 1, 10>}, {pipeline_mode = #tpu.pipeline_mode<synchronous>, transform_indices = @transform_15, window_bounds = array<i64: 1, 10>}, {pipeline_mode = #tpu.pipeline_mode<synchronous>, transform_indices = @transform_16, window_bounds = array<i64: 1, 10>}, {pipeline_mode = #tpu.pipeline_mode<synchronous>, transform_indices = @transform_17, window_bounds = array<i64: 1, 10>}, {pipeline_mode = #tpu.pipeline_mode<synchronous>, transform_indices = @transform_18, window_bounds = array<i64: 15, 128>}, {pipeline_mode = #tpu.pipeline_mode<synchronous>, transform_indices = @transform_19, window_bounds = array<i64: 1, 128>}, {pipeline_mode = #tpu.pipeline_mode<synchronous>, transform_indices = @transform_20, window_bounds = array<i64: 1, 128>}, {transform_indices = @transform_21, window_bounds = array<i64: 64, 128>}]} {
    %c0 = arith.constant 0 : index
    %c0_0 = arith.constant 0 : index
    %0 = vector.load %arg1[%c0, %c0_0] : memref<64x10xf32, #tpu.memory_space<vmem>>, vector<64x10xf32>
    %c0_1 = arith.constant 0 : index
    %c0_2 = arith.constant 0 : index
    %1 = vector.load %arg2[%c0_1, %c0_2] : memref<64x15xf32, #tpu.memory_space<vmem>>, vector<64x15xf32>
    %2 = arith.truncf %0 : vector<64x10xf32> to vector<64x10xbf16>
    %c0_3 = arith.constant 0 : index
    %c0_4 = arith.constant 0 : index
    %3 = vector.load %arg3[%c0_3, %c0_4] : memref<10x10xbf16, #tpu.memory_space<vmem>>, vector<10x10xbf16>
    %cst = arith.constant dense<0.000000e+00> : vector<64x10xf32>
    %4 = tpu.matmul %2, %3, %cst {dimension_numbers = #tpu.dot_dimension_numbers<[1], [0], [0], [1], [0, 0, 1, 1], [], []>} : vector<64x10xbf16>, vector<10x10xbf16>, vector<64x10xf32> -> vector<64x10xf32>
    %c0_5 = arith.constant 0 : index
    %c0_6 = arith.constant 0 : index
    %5 = vector.load %arg4[%c0_5, %c0_6] : memref<1x10xf32, #tpu.memory_space<vmem>>, vector<1x10xf32>
    %6 = vector.broadcast %5 : vector<1x10xf32> to vector<64x10xf32>
    %7 = arith.addf %4, %6 : vector<64x10xf32>
    %cst_7 = arith.constant 0.000000e+00 : f32
    %8 = vector.broadcast %cst_7 : f32 to vector<64x10xf32>
    %9 = arith.maximumf %7, %8 : vector<64x10xf32>
    %10 = arith.truncf %9 : vector<64x10xf32> to vector<64x10xbf16>
    %c0_8 = arith.constant 0 : index
    %c0_9 = arith.constant 0 : index
    %11 = vector.load %arg5[%c0_8, %c0_9] : memref<10x10xbf16, #tpu.memory_space<vmem>>, vector<10x10xbf16>
    %cst_10 = arith.constant dense<0.000000e+00> : vector<64x10xf32>
    %12 = tpu.matmul %10, %11, %cst_10 {dimension_numbers = #tpu.dot_dimension_numbers<[1], [0], [0], [1], [0, 0, 1, 1], [], []>} : vector<64x10xbf16>, vector<10x10xbf16>, vector<64x10xf32> -> vector<64x10xf32>
    %c0_11 = arith.constant 0 : index
    %c0_12 = arith.constant 0 : index
    %13 = vector.load %arg6[%c0_11, %c0_12] : memref<1x10xf32, #tpu.memory_space<vmem>>, vector<1x10xf32>
    %14 = vector.broadcast %13 : vector<1x10xf32> to vector<64x10xf32>
    %15 = arith.addf %12, %14 : vector<64x10xf32>
    %cst_13 = arith.constant 0.000000e+00 : f32
    %16 = vector.broadcast %cst_13 : f32 to vector<64x10xf32>
    %17 = arith.maximumf %15, %16 : vector<64x10xf32>
    %c0_14 = arith.constant 0 : index
    %c0_15 = arith.constant 0 : index
    %18 = vector.load %arg7[%c0_14, %c0_15] : memref<10x10xbf16, #tpu.memory_space<vmem>>, vector<10x10xbf16>
    %cst_16 = arith.constant dense<0.000000e+00> : vector<64x10xf32>
    %19 = tpu.matmul %2, %18, %cst_16 {dimension_numbers = #tpu.dot_dimension_numbers<[1], [0], [0], [1], [0, 0, 1, 1], [], []>} : vector<64x10xbf16>, vector<10x10xbf16>, vector<64x10xf32> -> vector<64x10xf32>
    %20 = arith.truncf %17 : vector<64x10xf32> to vector<64x10xbf16>
    %c0_17 = arith.constant 0 : index
    %c0_18 = arith.constant 0 : index
    %21 = vector.load %arg8[%c0_17, %c0_18] : memref<10x10xbf16, #tpu.memory_space<vmem>>, vector<10x10xbf16>
    %cst_19 = arith.constant dense<0.000000e+00> : vector<64x10xf32>
    %22 = tpu.matmul %20, %21, %cst_19 {dimension_numbers = #tpu.dot_dimension_numbers<[1], [0], [0], [1], [0, 0, 1, 1], [], []>} : vector<64x10xbf16>, vector<10x10xbf16>, vector<64x10xf32> -> vector<64x10xf32>
    %23 = arith.addf %19, %22 : vector<64x10xf32>
    %c0_20 = arith.constant 0 : index
    %c0_21 = arith.constant 0 : index
    %24 = vector.load %arg9[%c0_20, %c0_21] : memref<1x10xf32, #tpu.memory_space<vmem>>, vector<1x10xf32>
    %25 = vector.broadcast %24 : vector<1x10xf32> to vector<64x10xf32>
    %26 = arith.addf %23, %25 : vector<64x10xf32>
    %cst_22 = arith.constant 0.000000e+00 : f32
    %27 = vector.broadcast %cst_22 : f32 to vector<64x10xf32>
    %28 = arith.maximumf %26, %27 : vector<64x10xf32>
    %c0_23 = arith.constant 0 : index
    %c0_24 = arith.constant 0 : index
    %29 = vector.load %arg16[%c0_23, %c0_24] : memref<1x10xf32, #tpu.memory_space<vmem>>, vector<1x10xf32>
    %30 = vector.extract_strided_slice %0 {offsets = [0, 0], sizes = [8, 10], strides = [1, 1]} : vector<64x10xf32> to vector<8x10xf32>
    %31 = vector.extract_strided_slice %0 {offsets = [8, 0], sizes = [8, 10], strides = [1, 1]} : vector<64x10xf32> to vector<8x10xf32>
    %32 = vector.broadcast %29 : vector<1x10xf32> to vector<8x10xf32>
    %33 = arith.mulf %32, %30 : vector<8x10xf32>
    %34 = arith.addf %31, %33 : vector<8x10xf32>
    %35 = arith.maximumf %30, %34 : vector<8x10xf32>
    %36 = vector.extract_strided_slice %0 {offsets = [16, 0], sizes = [8, 10], strides = [1, 1]} : vector<64x10xf32> to vector<8x10xf32>
    %37 = vector.broadcast %29 : vector<1x10xf32> to vector<8x10xf32>
    %38 = arith.mulf %37, %34 : vector<8x10xf32>
    %39 = arith.addf %36, %38 : vector<8x10xf32>
    %40 = arith.maximumf %35, %39 : vector<8x10xf32>
    %41 = vector.extract_strided_slice %0 {offsets = [24, 0], sizes = [8, 10], strides = [1, 1]} : vector<64x10xf32> to vector<8x10xf32>
    %42 = vector.broadcast %29 : vector<1x10xf32> to vector<8x10xf32>
    %43 = arith.mulf %42, %39 : vector<8x10xf32>
    %44 = arith.addf %41, %43 : vector<8x10xf32>
    %45 = arith.maximumf %40, %44 : vector<8x10xf32>
    %46 = vector.extract_strided_slice %0 {offsets = [32, 0], sizes = [8, 10], strides = [1, 1]} : vector<64x10xf32> to vector<8x10xf32>
    %47 = vector.broadcast %29 : vector<1x10xf32> to vector<8x10xf32>
    %48 = arith.mulf %47, %44 : vector<8x10xf32>
    %49 = arith.addf %46, %48 : vector<8x10xf32>
    %50 = arith.maximumf %45, %49 : vector<8x10xf32>
    %51 = vector.extract_strided_slice %0 {offsets = [40, 0], sizes = [8, 10], strides = [1, 1]} : vector<64x10xf32> to vector<8x10xf32>
    %52 = vector.broadcast %29 : vector<1x10xf32> to vector<8x10xf32>
    %53 = arith.mulf %52, %49 : vector<8x10xf32>
    %54 = arith.addf %51, %53 : vector<8x10xf32>
    %55 = arith.maximumf %50, %54 : vector<8x10xf32>
    %56 = vector.extract_strided_slice %0 {offsets = [48, 0], sizes = [8, 10], strides = [1, 1]} : vector<64x10xf32> to vector<8x10xf32>
    %57 = vector.broadcast %29 : vector<1x10xf32> to vector<8x10xf32>
    %58 = arith.mulf %57, %54 : vector<8x10xf32>
    %59 = arith.addf %56, %58 : vector<8x10xf32>
    %60 = arith.maximumf %55, %59 : vector<8x10xf32>
    %61 = vector.extract_strided_slice %0 {offsets = [56, 0], sizes = [8, 10], strides = [1, 1]} : vector<64x10xf32> to vector<8x10xf32>
    %62 = vector.broadcast %29 : vector<1x10xf32> to vector<8x10xf32>
    %63 = arith.mulf %62, %59 : vector<8x10xf32>
    %64 = arith.addf %61, %63 : vector<8x10xf32>
    %65 = arith.maximumf %60, %64 : vector<8x10xf32>
    %cst_25 = arith.constant 9.99999997E-7 : f32
    %66 = vector.broadcast %cst_25 : f32 to vector<8x10xf32>
    %67 = arith.maximumf %65, %66 : vector<8x10xf32>
    %68 = math.log %67 : vector<8x10xf32>
    %cst_26 = arith.constant 0.000000e+00 : f32
    %69 = vector.broadcast %cst_26 : f32 to vector<8x10xf32>
    %70 = arith.maximumf %30, %69 : vector<8x10xf32>
    %71 = math.log %70 : vector<8x10xf32>
    %72 = arith.subf %71, %68 : vector<8x10xf32>
    %cst_27 = arith.constant 0.000000e+00 : f32
    %73 = vector.broadcast %cst_27 : f32 to vector<8x10xf32>
    %74 = arith.maximumf %34, %73 : vector<8x10xf32>
    %75 = math.log %74 : vector<8x10xf32>
    %76 = arith.subf %75, %68 : vector<8x10xf32>
    %cst_28 = arith.constant 0.000000e+00 : f32
    %77 = vector.broadcast %cst_28 : f32 to vector<8x10xf32>
    %78 = arith.maximumf %39, %77 : vector<8x10xf32>
    %79 = math.log %78 : vector<8x10xf32>
    %80 = arith.subf %79, %68 : vector<8x10xf32>
    %cst_29 = arith.constant 0.000000e+00 : f32
    %81 = vector.broadcast %cst_29 : f32 to vector<8x10xf32>
    %82 = arith.maximumf %44, %81 : vector<8x10xf32>
    %83 = math.log %82 : vector<8x10xf32>
    %84 = arith.subf %83, %68 : vector<8x10xf32>
    %cst_30 = arith.constant 0.000000e+00 : f32
    %85 = vector.broadcast %cst_30 : f32 to vector<8x10xf32>
    %86 = arith.maximumf %49, %85 : vector<8x10xf32>
    %87 = math.log %86 : vector<8x10xf32>
    %88 = arith.subf %87, %68 : vector<8x10xf32>
    %cst_31 = arith.constant 0.000000e+00 : f32
    %89 = vector.broadcast %cst_31 : f32 to vector<8x10xf32>
    %90 = arith.maximumf %54, %89 : vector<8x10xf32>
    %91 = math.log %90 : vector<8x10xf32>
    %92 = arith.subf %91, %68 : vector<8x10xf32>
    %cst_32 = arith.constant 0.000000e+00 : f32
    %93 = vector.broadcast %cst_32 : f32 to vector<8x10xf32>
    %94 = arith.maximumf %59, %93 : vector<8x10xf32>
    %95 = math.log %94 : vector<8x10xf32>
    %96 = arith.subf %95, %68 : vector<8x10xf32>
    %cst_33 = arith.constant 0.000000e+00 : f32
    %97 = vector.broadcast %cst_33 : f32 to vector<8x10xf32>
    %98 = arith.maximumf %64, %97 : vector<8x10xf32>
    %99 = math.log %98 : vector<8x10xf32>
    %100 = arith.subf %99, %68 : vector<8x10xf32>
    %101 = tpu.concatenate %72, %76, %80, %84, %88, %92, %96, %100 in 0 : vector<8x10xf32>, vector<8x10xf32>, vector<8x10xf32>, vector<8x10xf32>, vector<8x10xf32>, vector<8x10xf32>, vector<8x10xf32>, vector<8x10xf32> -> vector<64x10xf32>
    %c0_34 = arith.constant 0 : index
    %c0_35 = arith.constant 0 : index
    %102 = vector.load %arg17[%c0_34, %c0_35] : memref<1x10xf32, #tpu.memory_space<vmem>>, vector<1x10xf32>
    %103 = vector.broadcast %102 : vector<1x10xf32> to vector<64x10xf32>
    %104 = arith.mulf %103, %101 : vector<64x10xf32>
    %c0_36 = arith.constant 0 : index
    %c0_37 = arith.constant 0 : index
    %105 = vector.load %arg18[%c0_36, %c0_37] : memref<1x10xf32, #tpu.memory_space<vmem>>, vector<1x10xf32>
    %106 = vector.broadcast %105 : vector<1x10xf32> to vector<64x10xf32>
    %107 = arith.subf %104, %106 : vector<64x10xf32>
    %108 = arith.negf %107 : vector<64x10xf32>
    %109 = math.exp %108 : vector<64x10xf32>
    %cst_38 = arith.constant 1.000000e+00 : f32
    %110 = vector.broadcast %cst_38 : f32 to vector<64x10xf32>
    %111 = arith.addf %110, %109 : vector<64x10xf32>
    %112 = arith.divf %110, %111 : vector<64x10xf32>
    %113 = arith.addf %112, %28 : vector<64x10xf32>
    %114 = tpu.concatenate %113, %1 in 1 : vector<64x10xf32>, vector<64x15xf32> -> vector<64x25xf32>
    %115 = arith.truncf %114 : vector<64x25xf32> to vector<64x25xbf16>
    %c0_39 = arith.constant 0 : index
    %c0_40 = arith.constant 0 : index
    %116 = vector.load %arg10[%c0_39, %c0_40] : memref<25x384xbf16, #tpu.memory_space<vmem>>, vector<25x384xbf16>
    %cst_41 = arith.constant dense<0.000000e+00> : vector<64x384xf32>
    %117 = tpu.matmul %115, %116, %cst_41 {dimension_numbers = #tpu.dot_dimension_numbers<[1], [0], [0], [1], [0, 0, 1, 1], [], []>} : vector<64x25xbf16>, vector<25x384xbf16>, vector<64x384xf32> -> vector<64x384xf32>
    %c0_42 = arith.constant 0 : index
    %c0_43 = arith.constant 0 : index
    %118 = vector.load %arg11[%c0_42, %c0_43] : memref<1x384xf32, #tpu.memory_space<vmem>>, vector<1x384xf32>
    %119 = vector.broadcast %118 : vector<1x384xf32> to vector<64x384xf32>
    %120 = arith.addf %117, %119 : vector<64x384xf32>
    %c0_44 = arith.constant 0 : index
    %c0_45 = arith.constant 0 : index
    %121 = vector.load %arg12[%c0_44, %c0_45] : memref<128x384xbf16, #tpu.memory_space<vmem>>, vector<128x384xbf16>
    %c0_46 = arith.constant 0 : index
    %c0_47 = arith.constant 0 : index
    %122 = vector.load %arg13[%c0_46, %c0_47] : memref<1x128xf32, #tpu.memory_space<vmem>>, vector<1x128xf32>
    %c0_48 = arith.constant 0 : index
    %c0_49 = arith.constant 0 : index
    %123 = vector.load %arg21[%c0_48, %c0_49] : memref<1x128xf32, #tpu.memory_space<vmem>>, vector<1x128xf32>
    %124 = vector.shape_cast %123 : vector<1x128xf32> to vector<1x128xf32>
    %125 = vector.broadcast %124 : vector<1x128xf32> to vector<8x128xf32>
    %126 = vector.extract_strided_slice %120 {offsets = [0, 0], sizes = [8, 384], strides = [1, 1]} : vector<64x384xf32> to vector<8x384xf32>
    %127 = arith.truncf %125 : vector<8x128xf32> to vector<8x128xbf16>
    %cst_50 = arith.constant dense<0.000000e+00> : vector<8x384xf32>
    %128 = tpu.matmul %127, %121, %cst_50 {dimension_numbers = #tpu.dot_dimension_numbers<[1], [0], [0], [1], [0, 0, 1, 1], [], []>} : vector<8x128xbf16>, vector<128x384xbf16>, vector<8x384xf32> -> vector<8x384xf32>
    %129 = vector.extract_strided_slice %126 {offsets = [0, 0], sizes = [8, 128], strides = [1, 1]} : vector<8x384xf32> to vector<8x128xf32>
    %130 = vector.extract_strided_slice %128 {offsets = [0, 0], sizes = [8, 128], strides = [1, 1]} : vector<8x384xf32> to vector<8x128xf32>
    %131 = arith.addf %129, %130 : vector<8x128xf32>
    %132 = arith.negf %131 : vector<8x128xf32>
    %133 = math.exp %132 : vector<8x128xf32>
    %cst_51 = arith.constant 1.000000e+00 : f32
    %134 = vector.broadcast %cst_51 : f32 to vector<8x128xf32>
    %135 = arith.addf %134, %133 : vector<8x128xf32>
    %136 = arith.divf %134, %135 : vector<8x128xf32>
    %137 = vector.extract_strided_slice %126 {offsets = [0, 128], sizes = [8, 128], strides = [1, 1]} : vector<8x384xf32> to vector<8x128xf32>
    %138 = vector.extract_strided_slice %128 {offsets = [0, 128], sizes = [8, 128], strides = [1, 1]} : vector<8x384xf32> to vector<8x128xf32>
    %139 = arith.addf %137, %138 : vector<8x128xf32>
    %140 = arith.negf %139 : vector<8x128xf32>
    %141 = math.exp %140 : vector<8x128xf32>
    %cst_52 = arith.constant 1.000000e+00 : f32
    %142 = vector.broadcast %cst_52 : f32 to vector<8x128xf32>
    %143 = arith.addf %142, %141 : vector<8x128xf32>
    %144 = arith.divf %142, %143 : vector<8x128xf32>
    %145 = vector.extract_strided_slice %126 {offsets = [0, 256], sizes = [8, 128], strides = [1, 1]} : vector<8x384xf32> to vector<8x128xf32>
    %146 = vector.extract_strided_slice %128 {offsets = [0, 256], sizes = [8, 128], strides = [1, 1]} : vector<8x384xf32> to vector<8x128xf32>
    %147 = vector.broadcast %122 : vector<1x128xf32> to vector<8x128xf32>
    %148 = arith.addf %146, %147 : vector<8x128xf32>
    %149 = arith.mulf %136, %148 : vector<8x128xf32>
    %150 = arith.addf %145, %149 : vector<8x128xf32>
    %151 = math.tanh %150 : vector<8x128xf32>
    %cst_53 = arith.constant 1.000000e+00 : f32
    %152 = vector.broadcast %cst_53 : f32 to vector<8x128xf32>
    %153 = arith.subf %152, %144 : vector<8x128xf32>
    %154 = arith.mulf %153, %151 : vector<8x128xf32>
    %155 = arith.mulf %144, %125 : vector<8x128xf32>
    %156 = arith.addf %154, %155 : vector<8x128xf32>
    %c0_54 = arith.constant 0 : index
    %c0_55 = arith.constant 0 : index
    %157 = vector.load %arg23[%c0_54, %c0_55] : memref<64x128xf32, #tpu.memory_space<vmem>>, vector<8x128xf32>
    tpu.vector_store %arg23[%c0_54, %c0_55], %156 {strides = array<i32>} : memref<64x128xf32, #tpu.memory_space<vmem>>, vector<8x128xf32>,
    %158 = vector.extract_strided_slice %120 {offsets = [8, 0], sizes = [8, 384], strides = [1, 1]} : vector<64x384xf32> to vector<8x384xf32>
    %159 = arith.truncf %156 : vector<8x128xf32> to vector<8x128xbf16>
    %cst_56 = arith.constant dense<0.000000e+00> : vector<8x384xf32>
    %160 = tpu.matmul %159, %121, %cst_56 {dimension_numbers = #tpu.dot_dimension_numbers<[1], [0], [0], [1], [0, 0, 1, 1], [], []>} : vector<8x128xbf16>, vector<128x384xbf16>, vector<8x384xf32> -> vector<8x384xf32>
    %161 = vector.extract_strided_slice %158 {offsets = [0, 0], sizes = [8, 128], strides = [1, 1]} : vector<8x384xf32> to vector<8x128xf32>
    %162 = vector.extract_strided_slice %160 {offsets = [0, 0], sizes = [8, 128], strides = [1, 1]} : vector<8x384xf32> to vector<8x128xf32>
    %163 = arith.addf %161, %162 : vector<8x128xf32>
    %164 = arith.negf %163 : vector<8x128xf32>
    %165 = math.exp %164 : vector<8x128xf32>
    %cst_57 = arith.constant 1.000000e+00 : f32
    %166 = vector.broadcast %cst_57 : f32 to vector<8x128xf32>
    %167 = arith.addf %166, %165 : vector<8x128xf32>
    %168 = arith.divf %166, %167 : vector<8x128xf32>
    %169 = vector.extract_strided_slice %158 {offsets = [0, 128], sizes = [8, 128], strides = [1, 1]} : vector<8x384xf32> to vector<8x128xf32>
    %170 = vector.extract_strided_slice %160 {offsets = [0, 128], sizes = [8, 128], strides = [1, 1]} : vector<8x384xf32> to vector<8x128xf32>
    %171 = arith.addf %169, %170 : vector<8x128xf32>
    %172 = arith.negf %171 : vector<8x128xf32>
    %173 = math.exp %172 : vector<8x128xf32>
    %cst_58 = arith.constant 1.000000e+00 : f32
    %174 = vector.broadcast %cst_58 : f32 to vector<8x128xf32>
    %175 = arith.addf %174, %173 : vector<8x128xf32>
    %176 = arith.divf %174, %175 : vector<8x128xf32>
    %177 = vector.extract_strided_slice %158 {offsets = [0, 256], sizes = [8, 128], strides = [1, 1]} : vector<8x384xf32> to vector<8x128xf32>
    %178 = vector.extract_strided_slice %160 {offsets = [0, 256], sizes = [8, 128], strides = [1, 1]} : vector<8x384xf32> to vector<8x128xf32>
    %179 = vector.broadcast %122 : vector<1x128xf32> to vector<8x128xf32>
    %180 = arith.addf %178, %179 : vector<8x128xf32>
    %181 = arith.mulf %168, %180 : vector<8x128xf32>
    %182 = arith.addf %177, %181 : vector<8x128xf32>
    %183 = math.tanh %182 : vector<8x128xf32>
    %cst_59 = arith.constant 1.000000e+00 : f32
    %184 = vector.broadcast %cst_59 : f32 to vector<8x128xf32>
    %185 = arith.subf %184, %176 : vector<8x128xf32>
    %186 = arith.mulf %185, %183 : vector<8x128xf32>
    %187 = arith.mulf %176, %156 : vector<8x128xf32>
    %188 = arith.addf %186, %187 : vector<8x128xf32>
    %c8 = arith.constant 8 : index
    %c0_60 = arith.constant 0 : index
    %189 = vector.load %arg23[%c8, %c0_60] : memref<64x128xf32, #tpu.memory_space<vmem>>, vector<8x128xf32>
    tpu.vector_store %arg23[%c8, %c0_60], %188 {strides = array<i32>} : memref<64x128xf32, #tpu.memory_space<vmem>>, vector<8x128xf32>,
    %190 = vector.extract_strided_slice %120 {offsets = [16, 0], sizes = [8, 384], strides = [1, 1]} : vector<64x384xf32> to vector<8x384xf32>
    %191 = arith.truncf %188 : vector<8x128xf32> to vector<8x128xbf16>
    %cst_61 = arith.constant dense<0.000000e+00> : vector<8x384xf32>
    %192 = tpu.matmul %191, %121, %cst_61 {dimension_numbers = #tpu.dot_dimension_numbers<[1], [0], [0], [1], [0, 0, 1, 1], [], []>} : vector<8x128xbf16>, vector<128x384xbf16>, vector<8x384xf32> -> vector<8x384xf32>
    %193 = vector.extract_strided_slice %190 {offsets = [0, 0], sizes = [8, 128], strides = [1, 1]} : vector<8x384xf32> to vector<8x128xf32>
    %194 = vector.extract_strided_slice %192 {offsets = [0, 0], sizes = [8, 128], strides = [1, 1]} : vector<8x384xf32> to vector<8x128xf32>
    %195 = arith.addf %193, %194 : vector<8x128xf32>
    %196 = arith.negf %195 : vector<8x128xf32>
    %197 = math.exp %196 : vector<8x128xf32>
    %cst_62 = arith.constant 1.000000e+00 : f32
    %198 = vector.broadcast %cst_62 : f32 to vector<8x128xf32>
    %199 = arith.addf %198, %197 : vector<8x128xf32>
    %200 = arith.divf %198, %199 : vector<8x128xf32>
    %201 = vector.extract_strided_slice %190 {offsets = [0, 128], sizes = [8, 128], strides = [1, 1]} : vector<8x384xf32> to vector<8x128xf32>
    %202 = vector.extract_strided_slice %192 {offsets = [0, 128], sizes = [8, 128], strides = [1, 1]} : vector<8x384xf32> to vector<8x128xf32>
    %203 = arith.addf %201, %202 : vector<8x128xf32>
    %204 = arith.negf %203 : vector<8x128xf32>
    %205 = math.exp %204 : vector<8x128xf32>
    %cst_63 = arith.constant 1.000000e+00 : f32
    %206 = vector.broadcast %cst_63 : f32 to vector<8x128xf32>
    %207 = arith.addf %206, %205 : vector<8x128xf32>
    %208 = arith.divf %206, %207 : vector<8x128xf32>
    %209 = vector.extract_strided_slice %190 {offsets = [0, 256], sizes = [8, 128], strides = [1, 1]} : vector<8x384xf32> to vector<8x128xf32>
    %210 = vector.extract_strided_slice %192 {offsets = [0, 256], sizes = [8, 128], strides = [1, 1]} : vector<8x384xf32> to vector<8x128xf32>
    %211 = vector.broadcast %122 : vector<1x128xf32> to vector<8x128xf32>
    %212 = arith.addf %210, %211 : vector<8x128xf32>
    %213 = arith.mulf %200, %212 : vector<8x128xf32>
    %214 = arith.addf %209, %213 : vector<8x128xf32>
    %215 = math.tanh %214 : vector<8x128xf32>
    %cst_64 = arith.constant 1.000000e+00 : f32
    %216 = vector.broadcast %cst_64 : f32 to vector<8x128xf32>
    %217 = arith.subf %216, %208 : vector<8x128xf32>
    %218 = arith.mulf %217, %215 : vector<8x128xf32>
    %219 = arith.mulf %208, %188 : vector<8x128xf32>
    %220 = arith.addf %218, %219 : vector<8x128xf32>
    %c16 = arith.constant 16 : index
    %c0_65 = arith.constant 0 : index
    %221 = vector.load %arg23[%c16, %c0_65] : memref<64x128xf32, #tpu.memory_space<vmem>>, vector<8x128xf32>
    tpu.vector_store %arg23[%c16, %c0_65], %220 {strides = array<i32>} : memref<64x128xf32, #tpu.memory_space<vmem>>, vector<8x128xf32>,
    %222 = vector.extract_strided_slice %120 {offsets = [24, 0], sizes = [8, 384], strides = [1, 1]} : vector<64x384xf32> to vector<8x384xf32>
    %223 = arith.truncf %220 : vector<8x128xf32> to vector<8x128xbf16>
    %cst_66 = arith.constant dense<0.000000e+00> : vector<8x384xf32>
    %224 = tpu.matmul %223, %121, %cst_66 {dimension_numbers = #tpu.dot_dimension_numbers<[1], [0], [0], [1], [0, 0, 1, 1], [], []>} : vector<8x128xbf16>, vector<128x384xbf16>, vector<8x384xf32> -> vector<8x384xf32>
    %225 = vector.extract_strided_slice %222 {offsets = [0, 0], sizes = [8, 128], strides = [1, 1]} : vector<8x384xf32> to vector<8x128xf32>
    %226 = vector.extract_strided_slice %224 {offsets = [0, 0], sizes = [8, 128], strides = [1, 1]} : vector<8x384xf32> to vector<8x128xf32>
    %227 = arith.addf %225, %226 : vector<8x128xf32>
    %228 = arith.negf %227 : vector<8x128xf32>
    %229 = math.exp %228 : vector<8x128xf32>
    %cst_67 = arith.constant 1.000000e+00 : f32
    %230 = vector.broadcast %cst_67 : f32 to vector<8x128xf32>
    %231 = arith.addf %230, %229 : vector<8x128xf32>
    %232 = arith.divf %230, %231 : vector<8x128xf32>
    %233 = vector.extract_strided_slice %222 {offsets = [0, 128], sizes = [8, 128], strides = [1, 1]} : vector<8x384xf32> to vector<8x128xf32>
    %234 = vector.extract_strided_slice %224 {offsets = [0, 128], sizes = [8, 128], strides = [1, 1]} : vector<8x384xf32> to vector<8x128xf32>
    %235 = arith.addf %233, %234 : vector<8x128xf32>
    %236 = arith.negf %235 : vector<8x128xf32>
    %237 = math.exp %236 : vector<8x128xf32>
    %cst_68 = arith.constant 1.000000e+00 : f32
    %238 = vector.broadcast %cst_68 : f32 to vector<8x128xf32>
    %239 = arith.addf %238, %237 : vector<8x128xf32>
    %240 = arith.divf %238, %239 : vector<8x128xf32>
    %241 = vector.extract_strided_slice %222 {offsets = [0, 256], sizes = [8, 128], strides = [1, 1]} : vector<8x384xf32> to vector<8x128xf32>
    %242 = vector.extract_strided_slice %224 {offsets = [0, 256], sizes = [8, 128], strides = [1, 1]} : vector<8x384xf32> to vector<8x128xf32>
    %243 = vector.broadcast %122 : vector<1x128xf32> to vector<8x128xf32>
    %244 = arith.addf %242, %243 : vector<8x128xf32>
    %245 = arith.mulf %232, %244 : vector<8x128xf32>
    %246 = arith.addf %241, %245 : vector<8x128xf32>
    %247 = math.tanh %246 : vector<8x128xf32>
    %cst_69 = arith.constant 1.000000e+00 : f32
    %248 = vector.broadcast %cst_69 : f32 to vector<8x128xf32>
    %249 = arith.subf %248, %240 : vector<8x128xf32>
    %250 = arith.mulf %249, %247 : vector<8x128xf32>
    %251 = arith.mulf %240, %220 : vector<8x128xf32>
    %252 = arith.addf %250, %251 : vector<8x128xf32>
    %c24 = arith.constant 24 : index
    %c0_70 = arith.constant 0 : index
    %253 = vector.load %arg23[%c24, %c0_70] : memref<64x128xf32, #tpu.memory_space<vmem>>, vector<8x128xf32>
    tpu.vector_store %arg23[%c24, %c0_70], %252 {strides = array<i32>} : memref<64x128xf32, #tpu.memory_space<vmem>>, vector<8x128xf32>,
    %254 = vector.extract_strided_slice %120 {offsets = [32, 0], sizes = [8, 384], strides = [1, 1]} : vector<64x384xf32> to vector<8x384xf32>
    %255 = arith.truncf %252 : vector<8x128xf32> to vector<8x128xbf16>
    %cst_71 = arith.constant dense<0.000000e+00> : vector<8x384xf32>
    %256 = tpu.matmul %255, %121, %cst_71 {dimension_numbers = #tpu.dot_dimension_numbers<[1], [0], [0], [1], [0, 0, 1, 1], [], []>} : vector<8x128xbf16>, vector<128x384xbf16>, vector<8x384xf32> -> vector<8x384xf32>
    %257 = vector.extract_strided_slice %254 {offsets = [0, 0], sizes = [8, 128], strides = [1, 1]} : vector<8x384xf32> to vector<8x128xf32>
    %258 = vector.extract_strided_slice %256 {offsets = [0, 0], sizes = [8, 128], strides = [1, 1]} : vector<8x384xf32> to vector<8x128xf32>
    %259 = arith.addf %257, %258 : vector<8x128xf32>
    %260 = arith.negf %259 : vector<8x128xf32>
    %261 = math.exp %260 : vector<8x128xf32>
    %cst_72 = arith.constant 1.000000e+00 : f32
    %262 = vector.broadcast %cst_72 : f32 to vector<8x128xf32>
    %263 = arith.addf %262, %261 : vector<8x128xf32>
    %264 = arith.divf %262, %263 : vector<8x128xf32>
    %265 = vector.extract_strided_slice %254 {offsets = [0, 128], sizes = [8, 128], strides = [1, 1]} : vector<8x384xf32> to vector<8x128xf32>
    %266 = vector.extract_strided_slice %256 {offsets = [0, 128], sizes = [8, 128], strides = [1, 1]} : vector<8x384xf32> to vector<8x128xf32>
    %267 = arith.addf %265, %266 : vector<8x128xf32>
    %268 = arith.negf %267 : vector<8x128xf32>
    %269 = math.exp %268 : vector<8x128xf32>
    %cst_73 = arith.constant 1.000000e+00 : f32
    %270 = vector.broadcast %cst_73 : f32 to vector<8x128xf32>
    %271 = arith.addf %270, %269 : vector<8x128xf32>
    %272 = arith.divf %270, %271 : vector<8x128xf32>
    %273 = vector.extract_strided_slice %254 {offsets = [0, 256], sizes = [8, 128], strides = [1, 1]} : vector<8x384xf32> to vector<8x128xf32>
    %274 = vector.extract_strided_slice %256 {offsets = [0, 256], sizes = [8, 128], strides = [1, 1]} : vector<8x384xf32> to vector<8x128xf32>
    %275 = vector.broadcast %122 : vector<1x128xf32> to vector<8x128xf32>
    %276 = arith.addf %274, %275 : vector<8x128xf32>
    %277 = arith.mulf %264, %276 : vector<8x128xf32>
    %278 = arith.addf %273, %277 : vector<8x128xf32>
    %279 = math.tanh %278 : vector<8x128xf32>
    %cst_74 = arith.constant 1.000000e+00 : f32
    %280 = vector.broadcast %cst_74 : f32 to vector<8x128xf32>
    %281 = arith.subf %280, %272 : vector<8x128xf32>
    %282 = arith.mulf %281, %279 : vector<8x128xf32>
    %283 = arith.mulf %272, %252 : vector<8x128xf32>
    %284 = arith.addf %282, %283 : vector<8x128xf32>
    %c32 = arith.constant 32 : index
    %c0_75 = arith.constant 0 : index
    %285 = vector.load %arg23[%c32, %c0_75] : memref<64x128xf32, #tpu.memory_space<vmem>>, vector<8x128xf32>
    tpu.vector_store %arg23[%c32, %c0_75], %284 {strides = array<i32>} : memref<64x128xf32, #tpu.memory_space<vmem>>, vector<8x128xf32>,
    %286 = vector.extract_strided_slice %120 {offsets = [40, 0], sizes = [8, 384], strides = [1, 1]} : vector<64x384xf32> to vector<8x384xf32>
    %287 = arith.truncf %284 : vector<8x128xf32> to vector<8x128xbf16>
    %cst_76 = arith.constant dense<0.000000e+00> : vector<8x384xf32>
    %288 = tpu.matmul %287, %121, %cst_76 {dimension_numbers = #tpu.dot_dimension_numbers<[1], [0], [0], [1], [0, 0, 1, 1], [], []>} : vector<8x128xbf16>, vector<128x384xbf16>, vector<8x384xf32> -> vector<8x384xf32>
    %289 = vector.extract_strided_slice %286 {offsets = [0, 0], sizes = [8, 128], strides = [1, 1]} : vector<8x384xf32> to vector<8x128xf32>
    %290 = vector.extract_strided_slice %288 {offsets = [0, 0], sizes = [8, 128], strides = [1, 1]} : vector<8x384xf32> to vector<8x128xf32>
    %291 = arith.addf %289, %290 : vector<8x128xf32>
    %292 = arith.negf %291 : vector<8x128xf32>
    %293 = math.exp %292 : vector<8x128xf32>
    %cst_77 = arith.constant 1.000000e+00 : f32
    %294 = vector.broadcast %cst_77 : f32 to vector<8x128xf32>
    %295 = arith.addf %294, %293 : vector<8x128xf32>
    %296 = arith.divf %294, %295 : vector<8x128xf32>
    %297 = vector.extract_strided_slice %286 {offsets = [0, 128], sizes = [8, 128], strides = [1, 1]} : vector<8x384xf32> to vector<8x128xf32>
    %298 = vector.extract_strided_slice %288 {offsets = [0, 128], sizes = [8, 128], strides = [1, 1]} : vector<8x384xf32> to vector<8x128xf32>
    %299 = arith.addf %297, %298 : vector<8x128xf32>
    %300 = arith.negf %299 : vector<8x128xf32>
    %301 = math.exp %300 : vector<8x128xf32>
    %cst_78 = arith.constant 1.000000e+00 : f32
    %302 = vector.broadcast %cst_78 : f32 to vector<8x128xf32>
    %303 = arith.addf %302, %301 : vector<8x128xf32>
    %304 = arith.divf %302, %303 : vector<8x128xf32>
    %305 = vector.extract_strided_slice %286 {offsets = [0, 256], sizes = [8, 128], strides = [1, 1]} : vector<8x384xf32> to vector<8x128xf32>
    %306 = vector.extract_strided_slice %288 {offsets = [0, 256], sizes = [8, 128], strides = [1, 1]} : vector<8x384xf32> to vector<8x128xf32>
    %307 = vector.broadcast %122 : vector<1x128xf32> to vector<8x128xf32>
    %308 = arith.addf %306, %307 : vector<8x128xf32>
    %309 = arith.mulf %296, %308 : vector<8x128xf32>
    %310 = arith.addf %305, %309 : vector<8x128xf32>
    %311 = math.tanh %310 : vector<8x128xf32>
    %cst_79 = arith.constant 1.000000e+00 : f32
    %312 = vector.broadcast %cst_79 : f32 to vector<8x128xf32>
    %313 = arith.subf %312, %304 : vector<8x128xf32>
    %314 = arith.mulf %313, %311 : vector<8x128xf32>
    %315 = arith.mulf %304, %284 : vector<8x128xf32>
    %316 = arith.addf %314, %315 : vector<8x128xf32>
    %c40 = arith.constant 40 : index
    %c0_80 = arith.constant 0 : index
    %317 = vector.load %arg23[%c40, %c0_80] : memref<64x128xf32, #tpu.memory_space<vmem>>, vector<8x128xf32>
    tpu.vector_store %arg23[%c40, %c0_80], %316 {strides = array<i32>} : memref<64x128xf32, #tpu.memory_space<vmem>>, vector<8x128xf32>,
    %318 = vector.extract_strided_slice %120 {offsets = [48, 0], sizes = [8, 384], strides = [1, 1]} : vector<64x384xf32> to vector<8x384xf32>
    %319 = arith.truncf %316 : vector<8x128xf32> to vector<8x128xbf16>
    %cst_81 = arith.constant dense<0.000000e+00> : vector<8x384xf32>
    %320 = tpu.matmul %319, %121, %cst_81 {dimension_numbers = #tpu.dot_dimension_numbers<[1], [0], [0], [1], [0, 0, 1, 1], [], []>} : vector<8x128xbf16>, vector<128x384xbf16>, vector<8x384xf32> -> vector<8x384xf32>
    %321 = vector.extract_strided_slice %318 {offsets = [0, 0], sizes = [8, 128], strides = [1, 1]} : vector<8x384xf32> to vector<8x128xf32>
    %322 = vector.extract_strided_slice %320 {offsets = [0, 0], sizes = [8, 128], strides = [1, 1]} : vector<8x384xf32> to vector<8x128xf32>
    %323 = arith.addf %321, %322 : vector<8x128xf32>
    %324 = arith.negf %323 : vector<8x128xf32>
    %325 = math.exp %324 : vector<8x128xf32>
    %cst_82 = arith.constant 1.000000e+00 : f32
    %326 = vector.broadcast %cst_82 : f32 to vector<8x128xf32>
    %327 = arith.addf %326, %325 : vector<8x128xf32>
    %328 = arith.divf %326, %327 : vector<8x128xf32>
    %329 = vector.extract_strided_slice %318 {offsets = [0, 128], sizes = [8, 128], strides = [1, 1]} : vector<8x384xf32> to vector<8x128xf32>
    %330 = vector.extract_strided_slice %320 {offsets = [0, 128], sizes = [8, 128], strides = [1, 1]} : vector<8x384xf32> to vector<8x128xf32>
    %331 = arith.addf %329, %330 : vector<8x128xf32>
    %332 = arith.negf %331 : vector<8x128xf32>
    %333 = math.exp %332 : vector<8x128xf32>
    %cst_83 = arith.constant 1.000000e+00 : f32
    %334 = vector.broadcast %cst_83 : f32 to vector<8x128xf32>
    %335 = arith.addf %334, %333 : vector<8x128xf32>
    %336 = arith.divf %334, %335 : vector<8x128xf32>
    %337 = vector.extract_strided_slice %318 {offsets = [0, 256], sizes = [8, 128], strides = [1, 1]} : vector<8x384xf32> to vector<8x128xf32>
    %338 = vector.extract_strided_slice %320 {offsets = [0, 256], sizes = [8, 128], strides = [1, 1]} : vector<8x384xf32> to vector<8x128xf32>
    %339 = vector.broadcast %122 : vector<1x128xf32> to vector<8x128xf32>
    %340 = arith.addf %338, %339 : vector<8x128xf32>
    %341 = arith.mulf %328, %340 : vector<8x128xf32>
    %342 = arith.addf %337, %341 : vector<8x128xf32>
    %343 = math.tanh %342 : vector<8x128xf32>
    %cst_84 = arith.constant 1.000000e+00 : f32
    %344 = vector.broadcast %cst_84 : f32 to vector<8x128xf32>
    %345 = arith.subf %344, %336 : vector<8x128xf32>
    %346 = arith.mulf %345, %343 : vector<8x128xf32>
    %347 = arith.mulf %336, %316 : vector<8x128xf32>
    %348 = arith.addf %346, %347 : vector<8x128xf32>
    %c48 = arith.constant 48 : index
    %c0_85 = arith.constant 0 : index
    %349 = vector.load %arg23[%c48, %c0_85] : memref<64x128xf32, #tpu.memory_space<vmem>>, vector<8x128xf32>
    tpu.vector_store %arg23[%c48, %c0_85], %348 {strides = array<i32>} : memref<64x128xf32, #tpu.memory_space<vmem>>, vector<8x128xf32>,
    %350 = vector.extract_strided_slice %120 {offsets = [56, 0], sizes = [8, 384], strides = [1, 1]} : vector<64x384xf32> to vector<8x384xf32>
    %351 = arith.truncf %348 : vector<8x128xf32> to vector<8x128xbf16>
    %cst_86 = arith.constant dense<0.000000e+00> : vector<8x384xf32>
    %352 = tpu.matmul %351, %121, %cst_86 {dimension_numbers = #tpu.dot_dimension_numbers<[1], [0], [0], [1], [0, 0, 1, 1], [], []>} : vector<8x128xbf16>, vector<128x384xbf16>, vector<8x384xf32> -> vector<8x384xf32>
    %353 = vector.extract_strided_slice %350 {offsets = [0, 0], sizes = [8, 128], strides = [1, 1]} : vector<8x384xf32> to vector<8x128xf32>
    %354 = vector.extract_strided_slice %352 {offsets = [0, 0], sizes = [8, 128], strides = [1, 1]} : vector<8x384xf32> to vector<8x128xf32>
    %355 = arith.addf %353, %354 : vector<8x128xf32>
    %356 = arith.negf %355 : vector<8x128xf32>
    %357 = math.exp %356 : vector<8x128xf32>
    %cst_87 = arith.constant 1.000000e+00 : f32
    %358 = vector.broadcast %cst_87 : f32 to vector<8x128xf32>
    %359 = arith.addf %358, %357 : vector<8x128xf32>
    %360 = arith.divf %358, %359 : vector<8x128xf32>
    %361 = vector.extract_strided_slice %350 {offsets = [0, 128], sizes = [8, 128], strides = [1, 1]} : vector<8x384xf32> to vector<8x128xf32>
    %362 = vector.extract_strided_slice %352 {offsets = [0, 128], sizes = [8, 128], strides = [1, 1]} : vector<8x384xf32> to vector<8x128xf32>
    %363 = arith.addf %361, %362 : vector<8x128xf32>
    %364 = arith.negf %363 : vector<8x128xf32>
    %365 = math.exp %364 : vector<8x128xf32>
    %cst_88 = arith.constant 1.000000e+00 : f32
    %366 = vector.broadcast %cst_88 : f32 to vector<8x128xf32>
    %367 = arith.addf %366, %365 : vector<8x128xf32>
    %368 = arith.divf %366, %367 : vector<8x128xf32>
    %369 = vector.extract_strided_slice %350 {offsets = [0, 256], sizes = [8, 128], strides = [1, 1]} : vector<8x384xf32> to vector<8x128xf32>
    %370 = vector.extract_strided_slice %352 {offsets = [0, 256], sizes = [8, 128], strides = [1, 1]} : vector<8x384xf32> to vector<8x128xf32>
    %371 = vector.broadcast %122 : vector<1x128xf32> to vector<8x128xf32>
    %372 = arith.addf %370, %371 : vector<8x128xf32>
    %373 = arith.mulf %360, %372 : vector<8x128xf32>
    %374 = arith.addf %369, %373 : vector<8x128xf32>
    %375 = math.tanh %374 : vector<8x128xf32>
    %cst_89 = arith.constant 1.000000e+00 : f32
    %376 = vector.broadcast %cst_89 : f32 to vector<8x128xf32>
    %377 = arith.subf %376, %368 : vector<8x128xf32>
    %378 = arith.mulf %377, %375 : vector<8x128xf32>
    %379 = arith.mulf %368, %348 : vector<8x128xf32>
    %380 = arith.addf %378, %379 : vector<8x128xf32>
    %c56 = arith.constant 56 : index
    %c0_90 = arith.constant 0 : index
    %381 = vector.load %arg23[%c56, %c0_90] : memref<64x128xf32, #tpu.memory_space<vmem>>, vector<8x128xf32>
    tpu.vector_store %arg23[%c56, %c0_90], %380 {strides = array<i32>} : memref<64x128xf32, #tpu.memory_space<vmem>>, vector<8x128xf32>,
    %c0_91 = arith.constant 0 : index
    %c0_92 = arith.constant 0 : index
    %382 = vector.load %arg23[%c0_91, %c0_92] : memref<64x128xf32, #tpu.memory_space<vmem>>, vector<64x128xf32>
    %383 = arith.truncf %382 : vector<64x128xf32> to vector<64x128xbf16>
    %c0_93 = arith.constant 0 : index
    %c0_94 = arith.constant 0 : index
    %384 = vector.load %arg14[%c0_93, %c0_94] : memref<128x10xbf16, #tpu.memory_space<vmem>>, vector<128x10xbf16>
    %cst_95 = arith.constant dense<0.000000e+00> : vector<64x10xf32>
    %385 = tpu.matmul %383, %384, %cst_95 {dimension_numbers = #tpu.dot_dimension_numbers<[1], [0], [0], [1], [0, 0, 1, 1], [], []>} : vector<64x128xbf16>, vector<128x10xbf16>, vector<64x10xf32> -> vector<64x10xf32>
    %c0_96 = arith.constant 0 : index
    %c0_97 = arith.constant 0 : index
    %386 = vector.load %arg15[%c0_96, %c0_97] : memref<1x10xf32, #tpu.memory_space<vmem>>, vector<1x10xf32>
    %387 = vector.broadcast %386 : vector<1x10xf32> to vector<64x10xf32>
    %388 = arith.addf %385, %387 : vector<64x10xf32>
    %cst_98 = arith.constant 0.000000e+00 : f32
    %389 = vector.broadcast %cst_98 : f32 to vector<64x10xf32>
    %390 = arith.maximumf %388, %389 : vector<64x10xf32>
    %391 = vector.broadcast %cst_98 : f32 to vector<64x10xf32>
    %392 = arith.subf %388, %391 : vector<64x10xf32>
    %393 = arith.cmpf one, %392, %392 : vector<64x10xf32>
    %394 = vector.broadcast %cst_98 : f32 to vector<64x10xf32>
    %395 = arith.addf %388, %394 : vector<64x10xf32>
    %396 = math.absf %392 : vector<64x10xf32>
    %cst_99 = arith.constant 0.000000e+00 : f32
    %397 = vector.broadcast %cst_99 : f32 to vector<64x10xf32>
    %398 = arith.subf %397, %396 : vector<64x10xf32>
    %399 = math.exp %398 : vector<64x10xf32>
    %400 = math.log1p %399 : vector<64x10xf32>
    %401 = arith.addf %390, %400 : vector<64x10xf32>
    %402 = arith.select %393, %395, %401 : vector<64x10xi1>, vector<64x10xf32>
    %403 = vector.extract_strided_slice %402 {offsets = [8, 0], sizes = [8, 10], strides = [1, 1]} : vector<64x10xf32> to vector<8x10xf32>
    %cst_100 = arith.constant 5.000000e-01 : f32
    %404 = vector.broadcast %cst_100 : f32 to vector<8x10xf32>
    %405 = arith.mulf %404, %403 : vector<8x10xf32>
    %406 = vector.extract_strided_slice %402 {offsets = [0, 0], sizes = [8, 10], strides = [1, 1]} : vector<64x10xf32> to vector<8x10xf32>
    %cst_101 = arith.constant 5.000000e-01 : f32
    %407 = vector.broadcast %cst_101 : f32 to vector<8x10xf32>
    %408 = arith.mulf %407, %406 : vector<8x10xf32>
    %409 = arith.addf %405, %408 : vector<8x10xf32>
    %410 = vector.extract_strided_slice %402 {offsets = [8, 0], sizes = [56, 10], strides = [1, 1]} : vector<64x10xf32> to vector<56x10xf32>
    %411 = tpu.concatenate %409, %410 in 0 : vector<8x10xf32>, vector<56x10xf32> -> vector<64x10xf32>
    %412 = arith.mulf %112, %411 : vector<64x10xf32>
    %cst_102 = arith.constant dense<0.000000e+00> : vector<64xf32>
    %413 = vector.multi_reduction <add>, %412, %cst_102 [1] : vector<64x10xf32> to vector<64xf32>
    %414 = vector.shape_cast %413 : vector<64xf32> to vector<64x1xf32>
    %415 = arith.truncf %1 : vector<64x15xf32> to vector<64x15xbf16>
    %c0_103 = arith.constant 0 : index
    %c0_104 = arith.constant 0 : index
    %416 = vector.load %arg19[%c0_103, %c0_104] : memref<15x128xbf16, #tpu.memory_space<vmem>>, vector<15x128xbf16>
    %cst_105 = arith.constant dense<0.000000e+00> : vector<64x128xf32>
    %417 = tpu.matmul %415, %416, %cst_105 {dimension_numbers = #tpu.dot_dimension_numbers<[1], [0], [0], [1], [0, 0, 1, 1], [], []>} : vector<64x15xbf16>, vector<15x128xbf16>, vector<64x128xf32> -> vector<64x128xf32>
    %c0_106 = arith.constant 0 : index
    %c0_107 = arith.constant 0 : index
    %418 = vector.load %arg20[%c0_106, %c0_107] : memref<1x128xf32, #tpu.memory_space<vmem>>, vector<1x128xf32>
    %419 = vector.broadcast %418 : vector<1x128xf32> to vector<64x128xf32>
    %420 = arith.addf %417, %419 : vector<64x128xf32>
    %cst_108 = arith.constant 0.000000e+00 : f32
    %421 = vector.broadcast %cst_108 : f32 to vector<64x128xf32>
    %422 = arith.maximumf %420, %421 : vector<64x128xf32>
    %cst_109 = arith.constant dense<0.000000e+00> : vector<64xf32>
    %423 = vector.multi_reduction <add>, %422, %cst_109 [1] : vector<64x128xf32> to vector<64xf32>
    %424 = vector.shape_cast %423 : vector<64xf32> to vector<64x1xf32>
    %cst_110 = arith.constant 3.000000e-01 : f32
    %425 = vector.broadcast %cst_110 : f32 to vector<64x1xf32>
    %426 = arith.mulf %424, %425 : vector<64x1xf32>
    %427 = arith.addf %414, %426 : vector<64x1xf32>
    %cst_111 = arith.constant 0.000000e+00 : f32
    %428 = vector.broadcast %cst_111 : f32 to vector<64x107xf32>
    %429 = tpu.concatenate %411, %412, %427, %428 in 1 : vector<64x10xf32>, vector<64x10xf32>, vector<64x1xf32>, vector<64x107xf32> -> vector<64x128xf32>
    %c0_112 = arith.constant 0 : index
    %c0_113 = arith.constant 0 : index
    %430 = vector.load %arg22[%c0_112, %c0_113] : memref<64x128xf32, #tpu.memory_space<vmem>>, vector<64x128xf32>
    tpu.vector_store %arg22[%c0_112, %c0_113], %429 {strides = array<i32>} : memref<64x128xf32, #tpu.memory_space<vmem>>, vector<64x128xf32>,
    return
  }
  func.func @transform_0(%arg0: i32) -> (i32, i32) {
    %c0_i32 = arith.constant 0 : i32
    %c0_i32_0 = arith.constant 0 : i32
    return %arg0, %c0_i32 : i32, i32
  }
  func.func @transform_1(%arg0: i32) -> (i32, i32) {
    %c0_i32 = arith.constant 0 : i32
    %c0_i32_0 = arith.constant 0 : i32
    return %arg0, %c0_i32 : i32, i32
  }
  func.func @transform_2(%arg0: i32) -> (i32, i32) {
    %c0_i32 = arith.constant 0 : i32
    %c0_i32_0 = arith.constant 0 : i32
    %c0_i32_1 = arith.constant 0 : i32
    return %c0_i32, %c0_i32_0 : i32, i32
  }
  func.func @transform_3(%arg0: i32) -> (i32, i32) {
    %c0_i32 = arith.constant 0 : i32
    %c0_i32_0 = arith.constant 0 : i32
    %c0_i32_1 = arith.constant 0 : i32
    return %c0_i32, %c0_i32_0 : i32, i32
  }
  func.func @transform_4(%arg0: i32) -> (i32, i32) {
    %c0_i32 = arith.constant 0 : i32
    %c0_i32_0 = arith.constant 0 : i32
    %c0_i32_1 = arith.constant 0 : i32
    return %c0_i32, %c0_i32_0 : i32, i32
  }
  func.func @transform_5(%arg0: i32) -> (i32, i32) {
    %c0_i32 = arith.constant 0 : i32
    %c0_i32_0 = arith.constant 0 : i32
    %c0_i32_1 = arith.constant 0 : i32
    return %c0_i32, %c0_i32_0 : i32, i32
  }
  func.func @transform_6(%arg0: i32) -> (i32, i32) {
    %c0_i32 = arith.constant 0 : i32
    %c0_i32_0 = arith.constant 0 : i32
    %c0_i32_1 = arith.constant 0 : i32
    return %c0_i32, %c0_i32_0 : i32, i32
  }
  func.func @transform_7(%arg0: i32) -> (i32, i32) {
    %c0_i32 = arith.constant 0 : i32
    %c0_i32_0 = arith.constant 0 : i32
    %c0_i32_1 = arith.constant 0 : i32
    return %c0_i32, %c0_i32_0 : i32, i32
  }
  func.func @transform_8(%arg0: i32) -> (i32, i32) {
    %c0_i32 = arith.constant 0 : i32
    %c0_i32_0 = arith.constant 0 : i32
    %c0_i32_1 = arith.constant 0 : i32
    return %c0_i32, %c0_i32_0 : i32, i32
  }
  func.func @transform_9(%arg0: i32) -> (i32, i32) {
    %c0_i32 = arith.constant 0 : i32
    %c0_i32_0 = arith.constant 0 : i32
    %c0_i32_1 = arith.constant 0 : i32
    return %c0_i32, %c0_i32_0 : i32, i32
  }
  func.func @transform_10(%arg0: i32) -> (i32, i32) {
    %c0_i32 = arith.constant 0 : i32
    %c0_i32_0 = arith.constant 0 : i32
    %c0_i32_1 = arith.constant 0 : i32
    return %c0_i32, %c0_i32_0 : i32, i32
  }
  func.func @transform_11(%arg0: i32) -> (i32, i32) {
    %c0_i32 = arith.constant 0 : i32
    %c0_i32_0 = arith.constant 0 : i32
    %c0_i32_1 = arith.constant 0 : i32
    return %c0_i32, %c0_i32_0 : i32, i32
  }
  func.func @transform_12(%arg0: i32) -> (i32, i32) {
    %c0_i32 = arith.constant 0 : i32
    %c0_i32_0 = arith.constant 0 : i32
    %c0_i32_1 = arith.constant 0 : i32
    return %c0_i32, %c0_i32_0 : i32, i32
  }
  func.func @transform_13(%arg0: i32) -> (i32, i32) {
    %c0_i32 = arith.constant 0 : i32
    %c0_i32_0 = arith.constant 0 : i32
    %c0_i32_1 = arith.constant 0 : i32
    return %c0_i32, %c0_i32_0 : i32, i32
  }
  func.func @transform_14(%arg0: i32) -> (i32, i32) {
    %c0_i32 = arith.constant 0 : i32
    %c0_i32_0 = arith.constant 0 : i32
    %c0_i32_1 = arith.constant 0 : i32
    return %c0_i32, %c0_i32_0 : i32, i32
  }
  func.func @transform_15(%arg0: i32) -> (i32, i32) {
    %c0_i32 = arith.constant 0 : i32
    %c0_i32_0 = arith.constant 0 : i32
    %c0_i32_1 = arith.constant 0 : i32
    return %c0_i32, %c0_i32_0 : i32, i32
  }
  func.func @transform_16(%arg0: i32) -> (i32, i32) {
    %c0_i32 = arith.constant 0 : i32
    %c0_i32_0 = arith.constant 0 : i32
    %c0_i32_1 = arith.constant 0 : i32
    return %c0_i32, %c0_i32_0 : i32, i32
  }
  func.func @transform_17(%arg0: i32) -> (i32, i32) {
    %c0_i32 = arith.constant 0 : i32
    %c0_i32_0 = arith.constant 0 : i32
    %c0_i32_1 = arith.constant 0 : i32
    return %c0_i32, %c0_i32_0 : i32, i32
  }
  func.func @transform_18(%arg0: i32) -> (i32, i32) {
    %c0_i32 = arith.constant 0 : i32
    %c0_i32_0 = arith.constant 0 : i32
    %c0_i32_1 = arith.constant 0 : i32
    return %c0_i32, %c0_i32_0 : i32, i32
  }
  func.func @transform_19(%arg0: i32) -> (i32, i32) {
    %c0_i32 = arith.constant 0 : i32
    %c0_i32_0 = arith.constant 0 : i32
    %c0_i32_1 = arith.constant 0 : i32
    return %c0_i32, %c0_i32_0 : i32, i32
  }
  func.func @transform_20(%arg0: i32) -> (i32, i32) {
    %c0_i32 = arith.constant 0 : i32
    %c0_i32_0 = arith.constant 0 : i32
    %c0_i32_1 = arith.constant 0 : i32
    return %c0_i32, %c0_i32_0 : i32, i32
  }
  func.func @transform_21(%arg0: i32) -> (i32, i32) {
    %c0_i32 = arith.constant 0 : i32
    %c0_i32_0 = arith.constant 0 : i32
    return %arg0, %c0_i32 : i32, i32
  }
}

</mosaic_0001>

<llo_original>
// kernel: gru_causal_mmm_forward.1
$region0: #{gru_causal_mmm_forward.1}
  #allocation0 [shape = 'u32[]', space=smem, size = 0x4, offset = 0x4, fixed_abs, tag = 'smem constant byte address 0x4 - core index']
  #allocation1 [shape = 'u32[144,128]{1,0:T(1,128)}', space=vmem, size = 0x12000, scoped, tag = 'internal scratch']
  #allocation2 [shape = 'f32[64,128]{1,0:T(8,128)}', space=vmem, size = 0x8000, scoped, tag = 'scratch operand']
  %s0 = inlined_call_operand.vmem [shape: f32[64,10], index: 0, kind: input, shape index: {}]
  %s1 = inlined_call_operand.vmem [shape: f32[64,15], index: 1, kind: input, shape index: {}]
  %s2 = inlined_call_operand.vmem [shape: bf16[10,10], index: 2, kind: input, shape index: {}]
  %s3 = inlined_call_operand.vmem [shape: f32[1,10], index: 3, kind: input, shape index: {}]
  %s4 = inlined_call_operand.vmem [shape: bf16[10,10], index: 4, kind: input, shape index: {}]
  %s5 = inlined_call_operand.vmem [shape: f32[1,10], index: 5, kind: input, shape index: {}]
  %s6 = inlined_call_operand.vmem [shape: bf16[10,10], index: 6, kind: input, shape index: {}]
  %s7 = inlined_call_operand.vmem [shape: bf16[10,10], index: 7, kind: input, shape index: {}]
  %s8 = inlined_call_operand.vmem [shape: f32[1,10], index: 8, kind: input, shape index: {}]
  %s9 = inlined_call_operand.vmem [shape: bf16[25,384], index: 9, kind: input, shape index: {}]
  %s10 = inlined_call_operand.vmem [shape: f32[1,384], index: 10, kind: input, shape index: {}]
  %s11 = inlined_call_operand.vmem [shape: bf16[128,384], index: 11, kind: input, shape index: {}]
  %s12 = inlined_call_operand.vmem [shape: f32[1,128], index: 12, kind: input, shape index: {}]
  %s13 = inlined_call_operand.vmem [shape: bf16[128,10], index: 13, kind: input, shape index: {}]
  %s14 = inlined_call_operand.vmem [shape: f32[1,10], index: 14, kind: input, shape index: {}]
  %s15 = inlined_call_operand.vmem [shape: f32[1,10], index: 15, kind: input, shape index: {}]
  %s16 = inlined_call_operand.vmem [shape: f32[1,10], index: 16, kind: input, shape index: {}]
  %s17 = inlined_call_operand.vmem [shape: f32[1,10], index: 17, kind: input, shape index: {}]
  %s18 = inlined_call_operand.vmem [shape: bf16[15,128], index: 18, kind: input, shape index: {}]
  %s19 = inlined_call_operand.vmem [shape: f32[1,128], index: 19, kind: input, shape index: {}]
  %s20 = inlined_call_operand.vmem [shape: f32[1,128], index: 20, kind: input, shape index: {}]
  %s21 = inlined_call_operand.vmem [shape: f32[64,128], index: 21, kind: output, shape index: {}]
  %s22 = sld [smem:[#allocation0]]
  $region94: #{gru_causal_mmm_forward.1} parent=0
    _
  %s24 = ssub.s32 1, %s22
  %s25 = scalar_select 0, %s24, %s22
  // Predicated region
  $region2: #{gru_causal_mmm_forward.1} parent=0 // pred_check
    _
  $region3: #{gru_causal_mmm_forward.1} parent=0 // pred_check_branch
    %27 = sbr.rel (0) target = $region5
  $region4: #{gru_causal_mmm_forward.1} parent=0 // pred_region
    _
  $region5: #{gru_causal_mmm_forward.1} parent=0 // pred_fallthru
    _
  // Predicated region
  $region6: #{gru_causal_mmm_forward.1} parent=0 // pred_check
    _
  $region7: #{gru_causal_mmm_forward.1} parent=0 // pred_check_branch
    %29 = sbr.rel (0) target = $region9
  $region8: #{gru_causal_mmm_forward.1} parent=0 // pred_region
    _
  $region9: #{gru_causal_mmm_forward.1} parent=0 // pred_fallthru
    _
  // Predicated region
  $region10: #{gru_causal_mmm_forward.1} parent=0 // pred_check
    _
  $region11: #{gru_causal_mmm_forward.1} parent=0 // pred_check_branch
    %31 = sbr.rel (0) target = $region13
  $region12: #{gru_causal_mmm_forward.1} parent=0 // pred_region
    _
  $region13: #{gru_causal_mmm_forward.1} parent=0 // pred_fallthru
    _
  // Predicated region
  $region14: #{gru_causal_mmm_forward.1} parent=0 // pred_check
    _
  $region15: #{gru_causal_mmm_forward.1} parent=0 // pred_check_branch
    %33 = sbr.rel (0) target = $region17
  $region16: #{gru_causal_mmm_forward.1} parent=0 // pred_region
    _
  $region17: #{gru_causal_mmm_forward.1} parent=0 // pred_fallthru
    _
  // Predicated region
  $region18: #{gru_causal_mmm_forward.1} parent=0 // pred_check
    _
  $region19: #{gru_causal_mmm_forward.1} parent=0 // pred_check_branch
    %35 = sbr.rel (0) target = $region21
  $region20: #{gru_causal_mmm_forward.1} parent=0 // pred_region
    _
  $region21: #{gru_causal_mmm_forward.1} parent=0 // pred_fallthru
    _
  // Predicated region
  $region22: #{gru_causal_mmm_forward.1} parent=0 // pred_check
    _
  $region23: #{gru_causal_mmm_forward.1} parent=0 // pred_check_branch
    %37 = sbr.rel (0) target = $region25
  $region24: #{gru_causal_mmm_forward.1} parent=0 // pred_region
    _
  $region25: #{gru_causal_mmm_forward.1} parent=0 // pred_fallthru
    _
  // Predicated region
  $region26: #{gru_causal_mmm_forward.1} parent=0 // pred_check
    _
  $region27: #{gru_causal_mmm_forward.1} parent=0 // pred_check_branch
    %39 = sbr.rel (0) target = $region29
  $region28: #{gru_causal_mmm_forward.1} parent=0 // pred_region
    _
  $region29: #{gru_causal_mmm_forward.1} parent=0 // pred_fallthru
    _
  // Predicated region
  $region30: #{gru_causal_mmm_forward.1} parent=0 // pred_check
    _
  $region31: #{gru_causal_mmm_forward.1} parent=0 // pred_check_branch
    %41 = sbr.rel (0) target = $region33
  $region32: #{gru_causal_mmm_forward.1} parent=0 // pred_region
    _
  $region33: #{gru_causal_mmm_forward.1} parent=0 // pred_fallthru
    _
  // Predicated region
  $region34: #{gru_causal_mmm_forward.1} parent=0 // pred_check
    _
  $region35: #{gru_causal_mmm_forward.1} parent=0 // pred_check_branch
    %43 = sbr.rel (0) target = $region37
  $region36: #{gru_causal_mmm_forward.1} parent=0 // pred_region
    _
  $region37: #{gru_causal_mmm_forward.1} parent=0 // pred_fallthru
    _
  // Predicated region
  $region38: #{gru_causal_mmm_forward.1} parent=0 // pred_check
    _
  $region39: #{gru_causal_mmm_forward.1} parent=0 // pred_check_branch
    %45 = sbr.rel (0) target = $region41
  $region40: #{gru_causal_mmm_forward.1} parent=0 // pred_region
    _
  $region41: #{gru_causal_mmm_forward.1} parent=0 // pred_fallthru
    _
  // Predicated region
  $region42: #{gru_causal_mmm_forward.1} parent=0 // pred_check
    _
  $region43: #{gru_causal_mmm_forward.1} parent=0 // pred_check_branch
    %47 = sbr.rel (0) target = $region45
  $region44: #{gru_causal_mmm_forward.1} parent=0 // pred_region
    _
  $region45: #{gru_causal_mmm_forward.1} parent=0 // pred_fallthru
    _
  // Predicated region
  $region46: #{gru_causal_mmm_forward.1} parent=0 // pred_check
    _
  $region47: #{gru_causal_mmm_forward.1} parent=0 // pred_check_branch
    %49 = sbr.rel (0) target = $region49
  $region48: #{gru_causal_mmm_forward.1} parent=0 // pred_region
    _
  $region49: #{gru_causal_mmm_forward.1} parent=0 // pred_fallthru
    _
  // Predicated region
  $region50: #{gru_causal_mmm_forward.1} parent=0 // pred_check
    _
  $region51: #{gru_causal_mmm_forward.1} parent=0 // pred_check_branch
    %51 = sbr.rel (0) target = $region53
  $region52: #{gru_causal_mmm_forward.1} parent=0 // pred_region
    _
  $region53: #{gru_causal_mmm_forward.1} parent=0 // pred_fallthru
    _
  // Predicated region
  $region54: #{gru_causal_mmm_forward.1} parent=0 // pred_check
    _
  $region55: #{gru_causal_mmm_forward.1} parent=0 // pred_check_branch
    %53 = sbr.rel (0) target = $region57
  $region56: #{gru_causal_mmm_forward.1} parent=0 // pred_region
    _
  $region57: #{gru_causal_mmm_forward.1} parent=0 // pred_fallthru
    _
  // Predicated region
  $region58: #{gru_causal_mmm_forward.1} parent=0 // pred_check
    _
  $region59: #{gru_causal_mmm_forward.1} parent=0 // pred_check_branch
    %55 = sbr.rel (0) target = $region61
  $region60: #{gru_causal_mmm_forward.1} parent=0 // pred_region
    _
  $region61: #{gru_causal_mmm_forward.1} parent=0 // pred_fallthru
    _
  // Predicated region
  $region62: #{gru_causal_mmm_forward.1} parent=0 // pred_check
    _
  $region63: #{gru_causal_mmm_forward.1} parent=0 // pred_check_branch
    %57 = sbr.rel (0) target = $region65
  $region64: #{gru_causal_mmm_forward.1} parent=0 // pred_region
    _
  $region65: #{gru_causal_mmm_forward.1} parent=0 // pred_fallthru
    _
  // Predicated region
  $region66: #{gru_causal_mmm_forward.1} parent=0 // pred_check
    _
  $region67: #{gru_causal_mmm_forward.1} parent=0 // pred_check_branch
    %59 = sbr.rel (0) target = $region69
  $region68: #{gru_causal_mmm_forward.1} parent=0 // pred_region
    _
  $region69: #{gru_causal_mmm_forward.1} parent=0 // pred_fallthru
    _
  // Predicated region
  $region70: #{gru_causal_mmm_forward.1} parent=0 // pred_check
    _
  $region71: #{gru_causal_mmm_forward.1} parent=0 // pred_check_branch
    %61 = sbr.rel (0) target = $region73
  $region72: #{gru_causal_mmm_forward.1} parent=0 // pred_region
    _
  $region73: #{gru_causal_mmm_forward.1} parent=0 // pred_fallthru
    _
  // Predicated region
  $region74: #{gru_causal_mmm_forward.1} parent=0 // pred_check
    _
  $region75: #{gru_causal_mmm_forward.1} parent=0 // pred_check_branch
    %63 = sbr.rel (0) target = $region77
  $region76: #{gru_causal_mmm_forward.1} parent=0 // pred_region
    _
  $region77: #{gru_causal_mmm_forward.1} parent=0 // pred_fallthru
    _
  // Predicated region
  $region78: #{gru_causal_mmm_forward.1} parent=0 // pred_check
    _
  $region79: #{gru_causal_mmm_forward.1} parent=0 // pred_check_branch
    %65 = sbr.rel (0) target = $region81
  $region80: #{gru_causal_mmm_forward.1} parent=0 // pred_region
    _
  $region81: #{gru_causal_mmm_forward.1} parent=0 // pred_fallthru
    _
  // Predicated region
  $region82: #{gru_causal_mmm_forward.1} parent=0 // pred_check
    _
  $region83: #{gru_causal_mmm_forward.1} parent=0 // pred_check_branch
    %67 = sbr.rel (0) target = $region85
  $region84: #{gru_causal_mmm_forward.1} parent=0 // pred_region
    _
  $region85: #{gru_causal_mmm_forward.1} parent=0 // pred_fallthru
    _
  %v69 = vld [vmem:[%s0] sm:$0xff]
  %v70 = vld [vmem:[%s0 + $0x8] sm:$0xff]
  %v71 = vld [vmem:[%s0 + $0x10] sm:$0xff]
  %v72 = vld [vmem:[%s0 + $0x18] sm:$0xff]
  %v73 = vld [vmem:[%s0 + $0x20] sm:$0xff]
  %v74 = vld [vmem:[%s0 + $0x28] sm:$0xff]
  %v75 = vld [vmem:[%s0 + $0x30] sm:$0xff]
  %v76 = vld [vmem:[%s0 + $0x38] sm:$0xff]
  %v77 = vld [vmem:[%s1] sm:$0xff]
  %v78 = vld [vmem:[%s1 + $0x8] sm:$0xff]
  %v79 = vld [vmem:[%s1 + $0x10] sm:$0xff]
  %v80 = vld [vmem:[%s1 + $0x18] sm:$0xff]
  %v81 = vld [vmem:[%s1 + $0x20] sm:$0xff]
  %v82 = vld [vmem:[%s1 + $0x28] sm:$0xff]
  %v83 = vld [vmem:[%s1 + $0x30] sm:$0xff]
  %v84 = vld [vmem:[%s1 + $0x38] sm:$0xff]
  %v85 = vpack.c.bf16 %v70, %v69
  %v86 = vpack.c.bf16 %v72, %v71
  %v87 = vpack.c.bf16 %v74, %v73
  %v88 = vpack.c.bf16 %v76, %v75
  %v89 = vld [vmem:[%s2] sm:$0xf]
  %v90 = vld [vmem:[%s2 + $0x4] sm:$0x1]
  %v91 = vld [vmem:[%s3] sm:$0x1]
  %v93 = vlaneseq
  %v94 = vshrl.u32 %v93, 7
  %v95 = vsub.s32 0, %v94
  %v96 = vrot.slane %v91, %v95
  %v100 = vunpack.c.l.b16 %v89
  %v101 = vunpack.c.l.b16 %v90
  %v102 = vpack.c.b16 %v101, %v100
  %vm103 = vcmask 80896
  %v105 = vsel %vm103, %v85, 0
  %v108 = vsel %vm103, %v86, 0
  %v111 = vsel %vm103, %v87, 0
  %v114 = vsel %vm103, %v88, 0
  %vm116 = vcmask 1044480
  %v118 = vsel %vm116, %v102, 0
  %120 = vmatprep.subr.bf16.mxu0 0
  %121 = vmatpush1.bf16.msra.mxu0 0
  %122 = vmatprep.subr.bf16.mxu0 0
  %123 = vmatpush1.bf16.msra.mxu0 0
  %124 = vmatprep.subr.bf16.mxu0 0
  %125 = vmatpush1.bf16.msra.mxu0 0
  %126 = vmatprep.subr.bf16.mxu0 0
  %127 = vmatpush1.bf16.msra.mxu0 0
  %128 = vmatprep.subr.bf16.mxu0 0
  %129 = vmatpush1.bf16.msra.mxu0 0
  %130 = vmatprep.subr.bf16.mxu0 0
  %131 = vmatpush1.bf16.msra.mxu0 0
  %132 = vmatprep.subr.bf16.mxu0 0
  %133 = vmatpush1.bf16.msra.mxu0 0
  %134 = vmatprep.subr.bf16.mxu0 0
  %135 = vmatpush1.bf16.msra.mxu0 %v118
  %136 = vmatprep.subr.bf16.mxu0 0
  %137 = vmatpush2.bf16.msra.mxu0 0
  %138 = vmatprep.subr.bf16.mxu0 0
  %139 = vmatpush2.bf16.msra.mxu0 0
  %140 = vmatprep.subr.bf16.mxu0 0
  %141 = vmatpush2.bf16.msra.mxu0 0
  %142 = vmatprep.subr.bf16.mxu0 0
  %143 = vmatpush2.bf16.msra.mxu0 0
  %144 = vmatprep.subr.bf16.mxu0 0
  %145 = vmatpush2.bf16.msra.mxu0 0
  %146 = vmatprep.subr.bf16.mxu0 0
  %147 = vmatpush2.bf16.msra.mxu0 0
  %148 = vmatprep.subr.bf16.mxu0 0
  %149 = vmatpush2.bf16.msra.mxu0 0
  %150 = vmatprep.subr.bf16.mxu0 0
  %151 = vmatpush2.bf16.msra.mxu0 0
  %152 = vmatprep.mubr.bf16.mxu0 0
  %153 = vmatmul.mubr.bf16.gmra.mxu0 %v105
  %v154 = vpop.f32.mrf.mxu0
  %v155 = vadd.f32 %v96, %v154
  %v156 = vpop.f32.mrf.mxu0
  %v157 = vpop.f32.mrf.mxu0
  %v158 = vadd.f32 %v96, %v157
  %v159 = vpop.f32.mrf.mxu0
  %160 = vmatprep.mubr.bf16.mxu0 0
  %161 = vmatmul.mubr.bf16.gmra.mxu0 %v108
  %v162 = vpop.f32.mrf.mxu0
  %v163 = vadd.f32 %v96, %v162
  %v164 = vpop.f32.mrf.mxu0
  %v165 = vpop.f32.mrf.mxu0
  %v166 = vadd.f32 %v96, %v165
  %v167 = vpop.f32.mrf.mxu0
  %168 = vmatprep.mubr.bf16.mxu0 0
  %169 = vmatmul.mubr.bf16.gmra.mxu0 %v111
  %v170 = vpop.f32.mrf.mxu0
  %v171 = vadd.f32 %v96, %v170
  %v172 = vpop.f32.mrf.mxu0
  %v173 = vpop.f32.mrf.mxu0
  %v174 = vadd.f32 %v96, %v173
  %v175 = vpop.f32.mrf.mxu0
  %176 = vmatprep.mubr.bf16.mxu0 0
  %177 = vmatmul.mubr.bf16.gmra.mxu0 %v114
  %v178 = vpop.f32.mrf.mxu0
  %v179 = vadd.f32 %v96, %v178
  %v180 = vpop.f32.mrf.mxu0
  %v181 = vpop.f32.mrf.mxu0
  %v182 = vadd.f32 %v96, %v181
  %v183 = vpop.f32.mrf.mxu0
  %184 = vdwg.mxu0
  %v185 = vmax.f32 %v155, 0.0
  %v186 = vmax.f32 %v158, 0.0
  %v187 = vmax.f32 %v163, 0.0
  %v188 = vmax.f32 %v166, 0.0
  %v189 = vmax.f32 %v171, 0.0
  %v190 = vmax.f32 %v174, 0.0
  %v191 = vmax.f32 %v179, 0.0
  %v192 = vmax.f32 %v182, 0.0
  %v193 = vpack.c.bf16 %v186, %v185
  %v194 = vpack.c.bf16 %v188, %v187
  %v195 = vpack.c.bf16 %v190, %v189
  %v196 = vpack.c.bf16 %v192, %v191
  %v197 = vld [vmem:[%s4] sm:$0xf]
  %v198 = vld [vmem:[%s4 + $0x4] sm:$0x1]
  %v199 = vld [vmem:[%s5] sm:$0x1]
  %v201 = vlaneseq
  %v202 = vshrl.u32 %v201, 7
  %v203 = vsub.s32 0, %v202
  %v204 = vrot.slane %v199, %v203
  %v208 = vunpack.c.l.b16 %v197
  %v209 = vunpack.c.l.b16 %v198
  %v210 = vpack.c.b16 %v209, %v208
  %v212 = vsel %vm103, %v193, 0
  %v215 = vsel %vm103, %v194, 0
  %v218 = vsel %vm103, %v195, 0
  %v221 = vsel %vm103, %v196, 0
  %v224 = vsel %vm116, %v210, 0
  %226 = vmatprep.subr.bf16.mxu0 0
  %227 = vmatpush1.bf16.msra.mxu0 0
  %228 = vmatprep.subr.bf16.mxu0 0
  %229 = vmatpush1.bf16.msra.mxu0 0
  %230 = vmatprep.subr.bf16.mxu0 0
  %231 = vmatpush1.bf16.msra.mxu0 0
  %232 = vmatprep.subr.bf16.mxu0 0
  %233 = vmatpush1.bf16.msra.mxu0 0
  %234 = vmatprep.subr.bf16.mxu0 0
  %235 = vmatpush1.bf16.msra.mxu0 0
  %236 = vmatprep.subr.bf16.mxu0 0
  %237 = vmatpush1.bf16.msra.mxu0 0
  %238 = vmatprep.subr.bf16.mxu0 0
  %239 = vmatpush1.bf16.msra.mxu0 0
  %240 = vmatprep.subr.bf16.mxu0 0
  %241 = vmatpush1.bf16.msra.mxu0 %v224
  %242 = vmatprep.subr.bf16.mxu0 0
  %243 = vmatpush2.bf16.msra.mxu0 0
  %244 = vmatprep.subr.bf16.mxu0 0
  %245 = vmatpush2.bf16.msra.mxu0 0
  %246 = vmatprep.subr.bf16.mxu0 0
  %247 = vmatpush2.bf16.msra.mxu0 0
  %248 = vmatprep.subr.bf16.mxu0 0
  %249 = vmatpush2.bf16.msra.mxu0 0
  %250 = vmatprep.subr.bf16.mxu0 0
  %251 = vmatpush2.bf16.msra.mxu0 0
  %252 = vmatprep.subr.bf16.mxu0 0
  %253 = vmatpush2.bf16.msra.mxu0 0
  %254 = vmatprep.subr.bf16.mxu0 0
  %255 = vmatpush2.bf16.msra.mxu0 0
  %256 = vmatprep.subr.bf16.mxu0 0
  %257 = vmatpush2.bf16.msra.mxu0 0
  %258 = vmatprep.mubr.bf16.mxu0 0
  %259 = vmatmul.mubr.bf16.gmra.mxu0 %v212
  %v260 = vpop.f32.mrf.mxu0
  %v261 = vadd.f32 %v204, %v260
  %v262 = vpop.f32.mrf.mxu0
  %v263 = vpop.f32.mrf.mxu0
  %v264 = vadd.f32 %v204, %v263
  %v265 = vpop.f32.mrf.mxu0
  %266 = vmatprep.mubr.bf16.mxu0 0
  %267 = vmatmul.mubr.bf16.gmra.mxu0 %v215
  %v268 = vpop.f32.mrf.mxu0
  %v269 = vadd.f32 %v204, %v268
  %v270 = vpop.f32.mrf.mxu0
  %v271 = vpop.f32.mrf.mxu0
  %v272 = vadd.f32 %v204, %v271
  %v273 = vpop.f32.mrf.mxu0
  %274 = vmatprep.mubr.bf16.mxu0 0
  %275 = vmatmul.mubr.bf16.gmra.mxu0 %v218
  %v276 = vpop.f32.mrf.mxu0
  %v277 = vadd.f32 %v204, %v276
  %v278 = vpop.f32.mrf.mxu0
  %v279 = vpop.f32.mrf.mxu0
  %v280 = vadd.f32 %v204, %v279
  %v281 = vpop.f32.mrf.mxu0
  %282 = vmatprep.mubr.bf16.mxu0 0
  %283 = vmatmul.mubr.bf16.gmra.mxu0 %v221
  %v284 = vpop.f32.mrf.mxu0
  %v285 = vadd.f32 %v204, %v284
  %v286 = vpop.f32.mrf.mxu0
  %v287 = vpop.f32.mrf.mxu0
  %v288 = vadd.f32 %v204, %v287
  %v289 = vpop.f32.mrf.mxu0
  %290 = vdwg.mxu0
  %v291 = vmax.f32 %v261, 0.0
  %v292 = vmax.f32 %v264, 0.0
  %v293 = vmax.f32 %v269, 0.0
  %v294 = vmax.f32 %v272, 0.0
  %v295 = vmax.f32 %v277, 0.0
  %v296 = vmax.f32 %v280, 0.0
  %v297 = vmax.f32 %v285, 0.0
  %v298 = vmax.f32 %v288, 0.0
  %v299 = vld [vmem:[%s6] sm:$0xf]
  %v300 = vld [vmem:[%s6 + $0x4] sm:$0x1]
  %v301 = vpack.c.bf16 %v292, %v291
  %v302 = vpack.c.bf16 %v294, %v293
  %v303 = vpack.c.bf16 %v296, %v295
  %v304 = vpack.c.bf16 %v298, %v297
  %v305 = vld [vmem:[%s7] sm:$0xf]
  %v306 = vld [vmem:[%s7 + $0x4] sm:$0x1]
  %v309 = vunpack.c.l.b16 %v305
  %v310 = vunpack.c.l.b16 %v306
  %v311 = vpack.c.b16 %v310, %v309
  %v313 = vsel %vm103, %v301, 0
  %v316 = vsel %vm103, %v302, 0
  %v319 = vsel %vm103, %v303, 0
  %v322 = vsel %vm103, %v304, 0
  %v325 = vsel %vm116, %v311, 0
  %327 = vmatprep.subr.bf16.mxu0 0
  %328 = vmatpush1.bf16.msra.mxu0 0
  %329 = vmatprep.subr.bf16.mxu0 0
  %330 = vmatpush1.bf16.msra.mxu0 0
  %331 = vmatprep.subr.bf16.mxu0 0
  %332 = vmatpush1.bf16.msra.mxu0 0
  %333 = vmatprep.subr.bf16.mxu0 0
  %334 = vmatpush1.bf16.msra.mxu0 0
  %335 = vmatprep.subr.bf16.mxu0 0
  %336 = vmatpush1.bf16.msra.mxu0 0
  %337 = vmatprep.subr.bf16.mxu0 0
  %338 = vmatpush1.bf16.msra.mxu0 0
  %339 = vmatprep.subr.bf16.mxu0 0
  %340 = vmatpush1.bf16.msra.mxu0 0
  %341 = vmatprep.subr.bf16.mxu0 0
  %342 = vmatpush1.bf16.msra.mxu0 %v325
  %343 = vmatprep.subr.bf16.mxu0 0
  %344 = vmatpush2.bf16.msra.mxu0 0
  %345 = vmatprep.subr.bf16.mxu0 0
  %346 = vmatpush2.bf16.msra.mxu0 0
  %347 = vmatprep.subr.bf16.mxu0 0
  %348 = vmatpush2.bf16.msra.mxu0 0
  %349 = vmatprep.subr.bf16.mxu0 0
  %350 = vmatpush2.bf16.msra.mxu0 0
  %351 = vmatprep.subr.bf16.mxu0 0
  %352 = vmatpush2.bf16.msra.mxu0 0
  %353 = vmatprep.subr.bf16.mxu0 0
  %354 = vmatpush2.bf16.msra.mxu0 0
  %355 = vmatprep.subr.bf16.mxu0 0
  %356 = vmatpush2.bf16.msra.mxu0 0
  %357 = vmatprep.subr.bf16.mxu0 0
  %358 = vmatpush2.bf16.msra.mxu0 0
  %359 = vmatprep.mubr.bf16.mxu0 0
  %360 = vmatmul.mubr.bf16.gmra.mxu0 %v313
  %v361 = vpop.f32.mrf.mxu0
  %v362 = vadd.f32 0.0, %v361
  %v363 = vpop.f32.mrf.mxu0
  %v364 = vpop.f32.mrf.mxu0
  %v365 = vadd.f32 0.0, %v364
  %v366 = vpop.f32.mrf.mxu0
  %367 = vmatprep.mubr.bf16.mxu0 0
  %368 = vmatmul.mubr.bf16.gmra.mxu0 %v316
  %v369 = vpop.f32.mrf.mxu0
  %v370 = vadd.f32 0.0, %v369
  %v371 = vpop.f32.mrf.mxu0
  %v372 = vpop.f32.mrf.mxu0
  %v373 = vadd.f32 0.0, %v372
  %v374 = vpop.f32.mrf.mxu0
  %375 = vmatprep.mubr.bf16.mxu0 0
  %376 = vmatmul.mubr.bf16.gmra.mxu0 %v319
  %v377 = vpop.f32.mrf.mxu0
  %v378 = vadd.f32 0.0, %v377
  %v379 = vpop.f32.mrf.mxu0
  %v380 = vpop.f32.mrf.mxu0
  %v381 = vadd.f32 0.0, %v380
  %v382 = vpop.f32.mrf.mxu0
  %383 = vmatprep.mubr.bf16.mxu0 0
  %384 = vmatmul.mubr.bf16.gmra.mxu0 %v322
  %v385 = vpop.f32.mrf.mxu0
  %v386 = vadd.f32 0.0, %v385
  %v387 = vpop.f32.mrf.mxu0
  %v388 = vpop.f32.mrf.mxu0
  %v389 = vadd.f32 0.0, %v388
  %v390 = vpop.f32.mrf.mxu0
  %391 = vdwg.mxu0
  %v394 = vunpack.c.l.b16 %v299
  %v395 = vunpack.c.l.b16 %v300
  %v396 = vpack.c.b16 %v395, %v394
  %v398 = vsel %vm116, %v396, 0
  %400 = vmatprep.subr.bf16.mxu0 0
  %401 = vmatpush1.bf16.msra.mxu0 0
  %402 = vmatprep.subr.bf16.mxu0 0
  %403 = vmatpush1.bf16.msra.mxu0 0
  %404 = vmatprep.subr.bf16.mxu0 0
  %405 = vmatpush1.bf16.msra.mxu0 0
  %406 = vmatprep.subr.bf16.mxu0 0
  %407 = vmatpush1.bf16.msra.mxu0 0
  %408 = vmatprep.subr.bf16.mxu0 0
  %409 = vmatpush1.bf16.msra.mxu0 0
  %410 = vmatprep.subr.bf16.mxu0 0
  %411 = vmatpush1.bf16.msra.mxu0 0
  %412 = vmatprep.subr.bf16.mxu0 0
  %413 = vmatpush1.bf16.msra.mxu0 0
  %414 = vmatprep.subr.bf16.mxu0 0
  %415 = vmatpush1.bf16.msra.mxu0 %v398
  %416 = vmatprep.subr.bf16.mxu0 0
  %417 = vmatpush2.bf16.msra.mxu0 0
  %418 = vmatprep.subr.bf16.mxu0 0
  %419 = vmatpush2.bf16.msra.mxu0 0
  %420 = vmatprep.subr.bf16.mxu0 0
  %421 = vmatpush2.bf16.msra.mxu0 0
  %422 = vmatprep.subr.bf16.mxu0 0
  %423 = vmatpush2.bf16.msra.mxu0 0
  %424 = vmatprep.subr.bf16.mxu0 0
  %425 = vmatpush2.bf16.msra.mxu0 0
  %426 = vmatprep.subr.bf16.mxu0 0
  %427 = vmatpush2.bf16.msra.mxu0 0
  %428 = vmatprep.subr.bf16.mxu0 0
  %429 = vmatpush2.bf16.msra.mxu0 0
  %430 = vmatprep.subr.bf16.mxu0 0
  %431 = vmatpush2.bf16.msra.mxu0 0
  %432 = vmatprep.mubr.bf16.mxu0 0
  %433 = vmatmul.mubr.bf16.gmra.mxu0 %v105
  %v434 = vpop.f32.mrf.mxu0
  %v435 = vadd.f32 %v362, %v434
  %v436 = vpop.f32.mrf.mxu0
  %v437 = vpop.f32.mrf.mxu0
  %v438 = vadd.f32 %v365, %v437
  %v439 = vpop.f32.mrf.mxu0
  %440 = vmatprep.mubr.bf16.mxu0 0
  %441 = vmatmul.mubr.bf16.gmra.mxu0 %v108
  %v442 = vpop.f32.mrf.mxu0
  %v443 = vadd.f32 %v370, %v442
  %v444 = vpop.f32.mrf.mxu0
  %v445 = vpop.f32.mrf.mxu0
  %v446 = vadd.f32 %v373, %v445
  %v447 = vpop.f32.mrf.mxu0
  %448 = vmatprep.mubr.bf16.mxu0 0
  %449 = vmatmul.mubr.bf16.gmra.mxu0 %v111
  %v450 = vpop.f32.mrf.mxu0
  %v451 = vadd.f32 %v378, %v450
  %v452 = vpop.f32.mrf.mxu0
  %v453 = vpop.f32.mrf.mxu0
  %v454 = vadd.f32 %v381, %v453
  %v455 = vpop.f32.mrf.mxu0
  %456 = vmatprep.mubr.bf16.mxu0 0
  %457 = vmatmul.mubr.bf16.gmra.mxu0 %v114
  %v458 = vpop.f32.mrf.mxu0
  %v459 = vadd.f32 %v386, %v458
  %v460 = vpop.f32.mrf.mxu0
  %v461 = vpop.f32.mrf.mxu0
  %v462 = vadd.f32 %v389, %v461
  %v463 = vpop.f32.mrf.mxu0
  %464 = vdwg.mxu0
  %v465 = vld [vmem:[%s8] sm:$0x1]
  %v467 = vlaneseq
  %v468 = vshrl.u32 %v467, 7
  %v469 = vsub.s32 0, %v468
  %v470 = vrot.slane %v465, %v469
  %v472 = vadd.f32 %v435, %v470
  %v473 = vadd.f32 %v438, %v470
  %v474 = vadd.f32 %v443, %v470
  %v475 = vadd.f32 %v446, %v470
  %v476 = vadd.f32 %v451, %v470
  %v477 = vadd.f32 %v454, %v470
  %v478 = vadd.f32 %v459, %v470
  %v479 = vadd.f32 %v462, %v470
  %v480 = vmax.f32 %v472, 0.0
  %v481 = vmax.f32 %v473, 0.0
  %v482 = vmax.f32 %v474, 0.0
  %v483 = vmax.f32 %v475, 0.0
  %v484 = vmax.f32 %v476, 0.0
  %v485 = vmax.f32 %v477, 0.0
  %v486 = vmax.f32 %v478, 0.0
  %v487 = vmax.f32 %v479, 0.0
  %v488 = vld [vmem:[%s15] sm:$0x1]
  %v490 = vlaneseq
  %v491 = vshrl.u32 %v490, 7
  %v492 = vsub.s32 0, %v491
  %v493 = vrot.slane %v488, %v492
  %v495 = vmul.f32 %v493, %v69
  %v496 = vadd.f32 %v70, %v495
  %v497 = vmax.f32 %v69, %v496
  %v498 = vmul.f32 %v493, %v496
  %v499 = vadd.f32 %v71, %v498
  %v500 = vmax.f32 %v497, %v499
  %v501 = vmul.f32 %v493, %v499
  %v502 = vadd.f32 %v72, %v501
  %v503 = vmax.f32 %v500, %v502
  %v504 = vmul.f32 %v493, %v502
  %v505 = vadd.f32 %v73, %v504
  %v506 = vmax.f32 %v503, %v505
  %v507 = vmul.f32 %v493, %v505
  %v508 = vadd.f32 %v74, %v507
  %v509 = vmax.f32 %v506, %v508
  %v510 = vmul.f32 %v493, %v508
  %v511 = vadd.f32 %v75, %v510
  %v512 = vmax.f32 %v509, %v511
  %v513 = vmul.f32 %v493, %v511
  %v514 = vadd.f32 %v76, %v513
  %v515 = vmax.f32 %v512, %v514
  %v516 = vmax.f32 %v515, 1e-06
  %v517 = vlog2.pop %v516
  %v518 = vmul.f32 %v517, 0.6931472
  %v519 = vmax.f32 %v69, 0.0
  %v520 = vlog2.pop %v519
  %v521 = vmul.f32 %v520, 0.6931472
  %v522 = vsub.f32 %v521, %v518
  %v523 = vmax.f32 %v496, 0.0
  %v524 = vlog2.pop %v523
  %v525 = vmul.f32 %v524, 0.6931472
  %v526 = vsub.f32 %v525, %v518
  %v527 = vmax.f32 %v499, 0.0
  %v528 = vlog2.pop %v527
  %v529 = vmul.f32 %v528, 0.6931472
  %v530 = vsub.f32 %v529, %v518
  %v531 = vmax.f32 %v502, 0.0
  %v532 = vlog2.pop %v531
  %v533 = vmul.f32 %v532, 0.6931472
  %v534 = vsub.f32 %v533, %v518
  %v535 = vmax.f32 %v505, 0.0
  %v536 = vlog2.pop %v535
  %v537 = vmul.f32 %v536, 0.6931472
  %v538 = vsub.f32 %v537, %v518
  %v539 = vmax.f32 %v508, 0.0
  %v540 = vlog2.pop %v539
  %v541 = vmul.f32 %v540, 0.6931472
  %v542 = vsub.f32 %v541, %v518
  %v543 = vmax.f32 %v511, 0.0
  %v544 = vlog2.pop %v543
  %v545 = vmul.f32 %v544, 0.6931472
  %v546 = vsub.f32 %v545, %v518
  %v547 = vmax.f32 %v514, 0.0
  %v548 = vlog2.pop %v547
  %v549 = vmul.f32 %v548, 0.6931472
  %v550 = vsub.f32 %v549, %v518
  %v551 = vld [vmem:[%s16] sm:$0x1]
  %v553 = vlaneseq
  %v554 = vshrl.u32 %v553, 7
  %v555 = vsub.s32 0, %v554
  %v556 = vrot.slane %v551, %v555
  %v558 = vmul.f32 %v556, %v522
  %v559 = vmul.f32 %v556, %v526
  %v560 = vmul.f32 %v556, %v530
  %v561 = vmul.f32 %v556, %v534
  %v562 = vmul.f32 %v556, %v538
  %v563 = vmul.f32 %v556, %v542
  %v564 = vmul.f32 %v556, %v546
  %v565 = vmul.f32 %v556, %v550
  %v566 = vld [vmem:[%s17] sm:$0x1]
  %v568 = vlaneseq
  %v569 = vshrl.u32 %v568, 7
  %v570 = vsub.s32 0, %v569
  %v571 = vrot.slane %v566, %v570
  %v573 = vsub.f32 %v558, %v571
  %v574 = vsub.f32 %v559, %v571
  %v575 = vsub.f32 %v560, %v571
  %v576 = vsub.f32 %v561, %v571
  %v577 = vsub.f32 %v562, %v571
  %v578 = vsub.f32 %v563, %v571
  %v579 = vsub.f32 %v564, %v571
  %v580 = vsub.f32 %v565, %v571
  %v581 = vxor.u32 %v573, 2147483648
  %v582 = vxor.u32 %v574, 2147483648
  %v583 = vxor.u32 %v575, 2147483648
  %v584 = vxor.u32 %v576, 2147483648
  %v585 = vxor.u32 %v577, 2147483648
  %v586 = vxor.u32 %v578, 2147483648
  %v587 = vxor.u32 %v579, 2147483648
  %v588 = vxor.u32 %v580, 2147483648
  %v589 = vmul.f32 %v581, 1.442695
  %v590 = vpow.pop %v589
  %v591 = vmul.f32 %v582, 1.442695
  %v592 = vpow.pop %v591
  %v593 = vmul.f32 %v583, 1.442695
  %v594 = vpow.pop %v593
  %v595 = vmul.f32 %v584, 1.442695
  %v596 = vpow.pop %v595
  %v597 = vmul.f32 %v585, 1.442695
  %v598 = vpow.pop %v597
  %v599 = vmul.f32 %v586, 1.442695
  %v600 = vpow.pop %v599
  %v601 = vmul.f32 %v587, 1.442695
  %v602 = vpow.pop %v601
  %v603 = vmul.f32 %v588, 1.442695
  %v604 = vpow.pop %v603
  %v605 = vadd.f32 %v590, 1.0
  %v606 = vadd.f32 %v592, 1.0
  %v607 = vadd.f32 %v594, 1.0
  %v608 = vadd.f32 %v596, 1.0
  %v609 = vadd.f32 %v598, 1.0
  %v610 = vadd.f32 %v600, 1.0
  %v611 = vadd.f32 %v602, 1.0
  %v612 = vadd.f32 %v604, 1.0
  %v613 = vrcp.pop %v605
  %v614 = vmul.f32 1.0, %v613
  %v615 = vrcp.pop %v606
  %v616 = vmul.f32 1.0, %v615
  %v617 = vrcp.pop %v607
  %v618 = vmul.f32 1.0, %v617
  %v619 = vrcp.pop %v608
  %v620 = vmul.f32 1.0, %v619
  %v621 = vrcp.pop %v609
  %v622 = vmul.f32 1.0, %v621
  %v623 = vrcp.pop %v610
  %v624 = vmul.f32 1.0, %v623
  %v625 = vrcp.pop %v611
  %v626 = vmul.f32 1.0, %v625
  %v627 = vrcp.pop %v612
  %v628 = vmul.f32 1.0, %v627
  %v629 = vadd.f32 %v614, %v480
  %v630 = vadd.f32 %v616, %v481
  %v631 = vadd.f32 %v618, %v482
  %v632 = vadd.f32 %v620, %v483
  %v633 = vadd.f32 %v622, %v484
  %v634 = vadd.f32 %v624, %v485
  %v635 = vadd.f32 %v626, %v486
  %v636 = vadd.f32 %v628, %v487
  %645 = vrot.lane.b32.xlu0 %v77, 10
  %v646 = vpop.permute.xlu0 %645
  %647 = vrot.lane.b32.xlu0 %v78, 10
  %v648 = vpop.permute.xlu0 %647
  %649 = vrot.lane.b32.xlu0 %v79, 10
  %v650 = vpop.permute.xlu0 %649
  %651 = vrot.lane.b32.xlu0 %v80, 10
  %v652 = vpop.permute.xlu0 %651
  %653 = vrot.lane.b32.xlu0 %v81, 10
  %v654 = vpop.permute.xlu0 %653
  %655 = vrot.lane.b32.xlu0 %v82, 10
  %v656 = vpop.permute.xlu0 %655
  %657 = vrot.lane.b32.xlu0 %v83, 10
  %v658 = vpop.permute.xlu0 %657
  %659 = vrot.lane.b32.xlu0 %v84, 10
  %v660 = vpop.permute.xlu0 %659
  %v669 = vsel %vm103, %v629, %v646
  %v670 = vsel %vm103, %v630, %v648
  %v671 = vsel %vm103, %v631, %v650
  %v672 = vsel %vm103, %v632, %v652
  %v673 = vsel %vm103, %v633, %v654
  %v674 = vsel %vm103, %v634, %v656
  %v675 = vsel %vm103, %v635, %v658
  %v676 = vsel %vm103, %v636, %v660
  %v677 = vpack.c.bf16 %v670, %v669
  %v678 = vpack.c.bf16 %v672, %v671
  %v679 = vpack.c.bf16 %v674, %v673
  %v680 = vpack.c.bf16 %v676, %v675
  %v681 = vld [vmem:[%s9] sm:$0xff]
  %v682 = vld [vmem:[%s9 + $0x8] sm:$0xf]
  %v683 = vld [vmem:[%s9 + $0xc] sm:$0xff]
  %v684 = vld [vmem:[%s9 + $0x14] sm:$0xf]
  %v685 = vld [vmem:[%s9 + $0x18] sm:$0xff]
  %v686 = vld [vmem:[%s9 + $0x20] sm:$0xf]
  %v687 = vld [vmem:[%s9 + $0x24] sm:$0x11]
  %v688 = vld [vmem:[%s9 + $0x2c] sm:$0x1]
  %v689 = vld [vmem:[%s10] sm:$0x7]
  %v691 = vlaneseq
  %v692 = vshrl.u32 %v691, 7
  %v693 = vsub.s32 0, %v692
  %v694 = vrot.slane %v689, %v693
  %v695 = vlaneseq
  %v696 = vshrl.u32 %v695, 7
  %v697 = vsub.s32 1, %v696
  %v698 = vrot.slane %v689, %v697
  %v699 = vlaneseq
  %v700 = vshrl.u32 %v699, 7
  %v701 = vsub.s32 2, %v700
  %v702 = vrot.slane %v689, %v701
  %v714 = vunpack.c.l.b16 %v681
  %v715 = vunpack.c.h.b16 %v681
  %v716 = vunpack.c.l.b16 %v682
  %v717 = vunpack.c.l.b16 %v683
  %v718 = vunpack.c.h.b16 %v683
  %v719 = vunpack.c.l.b16 %v684
  %v720 = vunpack.c.l.b16 %v685
  %v721 = vunpack.c.h.b16 %v685
  %v722 = vunpack.c.l.b16 %v686
  %v723 = vunpack.c.l.b16 %v687
  %v724 = vunpack.c.h.b16 %v687
  %v725 = vunpack.c.l.b16 %v688
  %v726 = vpack.c.b16 %v717, %v714
  %v727 = vpack.c.b16 %v718, %v715
  %v728 = vpack.c.b16 %v719, %v716
  %v729 = vpack.c.b16 %v723, %v720
  %v730 = vpack.c.b16 %v724, %v721
  %v731 = vpack.c.b16 %v725, %v722
  %vm735 = vcmask 203776
  %v737 = vsel %vm735, %v677, 0
  %v740 = vsel %vm735, %v678, 0
  %v743 = vsel %vm735, %v679, 0
  %v746 = vsel %vm735, %v680, 0
  %vm748 = vcmask 1043456
  %v749 = vsel %vm748, 4294967295, 65535
  %v750 = vsel %vm116, %v749, 0
  %v752 = vand.u32 %v729, %v750
  %v755 = vand.u32 %v730, %v750
  %v758 = vand.u32 %v731, %v750
  %760 = vmatprep.subr.bf16.mxu0 0
  %761 = vmatpush1.bf16.msra.mxu0 0
  %762 = vmatprep.subr.bf16.mxu0 0
  %763 = vmatpush1.bf16.msra.mxu0 0
  %764 = vmatprep.subr.bf16.mxu0 0
  %765 = vmatpush1.bf16.msra.mxu0 0
  %766 = vmatprep.subr.bf16.mxu0 0
  %767 = vmatpush1.bf16.msra.mxu0 0
  %768 = vmatprep.subr.bf16.mxu0 0
  %769 = vmatpush1.bf16.msra.mxu0 0
  %770 = vmatprep.subr.bf16.mxu0 0
  %771 = vmatpush1.bf16.msra.mxu0 0
  %772 = vmatprep.subr.bf16.mxu0 %v755
  %773 = vmatpush1.bf16.msra.mxu0 %v752
  %774 = vmatprep.subr.bf16.mxu0 %v727
  %775 = vmatpush1.bf16.msra.mxu0 %v726
  %776 = vmatprep.subr.bf16.mxu0 0
  %777 = vmatpush2.bf16.msra.mxu0 0
  %778 = vmatprep.subr.bf16.mxu0 0
  %779 = vmatpush2.bf16.msra.mxu0 0
  %780 = vmatprep.subr.bf16.mxu0 0
  %781 = vmatpush2.bf16.msra.mxu0 0
  %782 = vmatprep.subr.bf16.mxu0 0
  %783 = vmatpush2.bf16.msra.mxu0 0
  %784 = vmatprep.subr.bf16.mxu0 0
  %785 = vmatpush2.bf16.msra.mxu0 0
  %786 = vmatprep.subr.bf16.mxu0 0
  %787 = vmatpush2.bf16.msra.mxu0 0
  %788 = vmatprep.subr.bf16.mxu0 0
  %789 = vmatpush2.bf16.msra.mxu0 0
  %790 = vmatprep.subr.bf16.mxu0 0
  %791 = vmatpush2.bf16.msra.mxu0 0
  %792 = vmatprep.mubr.bf16.mxu0 0
  %793 = vmatmul.mubr.bf16.gmra.mxu0 %v737
  %v794 = vpop.f32.mrf.mxu0
  %v795 = vadd.f32 %v694, %v794
  %v796 = vpop.f32.mrf.mxu0
  %v797 = vadd.f32 %v698, %v796
  %v798 = vpop.f32.mrf.mxu0
  %v799 = vadd.f32 %v694, %v798
  %v800 = vpop.f32.mrf.mxu0
  %v801 = vadd.f32 %v698, %v800
  %802 = vmatprep.mubr.bf16.mxu0 0
  %803 = vmatmul.mubr.bf16.gmra.mxu0 %v740
  %v804 = vpop.f32.mrf.mxu0
  %v805 = vadd.f32 %v694, %v804
  %v806 = vpop.f32.mrf.mxu0
  %v807 = vadd.f32 %v698, %v806
  %v808 = vpop.f32.mrf.mxu0
  %v809 = vadd.f32 %v694, %v808
  %v810 = vpop.f32.mrf.mxu0
  %v811 = vadd.f32 %v698, %v810
  %812 = vmatprep.mubr.bf16.mxu0 0
  %813 = vmatmul.mubr.bf16.gmra.mxu0 %v743
  %v814 = vpop.f32.mrf.mxu0
  %v815 = vadd.f32 %v694, %v814
  %v816 = vpop.f32.mrf.mxu0
  %v817 = vadd.f32 %v698, %v816
  %v818 = vpop.f32.mrf.mxu0
  %v819 = vadd.f32 %v694, %v818
  %v820 = vpop.f32.mrf.mxu0
  %v821 = vadd.f32 %v698, %v820
  %822 = vmatprep.mubr.bf16.mxu0 0
  %823 = vmatmul.mubr.bf16.gmra.mxu0 %v746
  %v824 = vpop.f32.mrf.mxu0
  %v825 = vadd.f32 %v694, %v824
  %v826 = vpop.f32.mrf.mxu0
  %v827 = vadd.f32 %v698, %v826
  %v828 = vpop.f32.mrf.mxu0
  %v829 = vadd.f32 %v694, %v828
  %v830 = vpop.f32.mrf.mxu0
  %v831 = vadd.f32 %v698, %v830
  %832 = vdwg.mxu0
  %833 = vmatprep.subr.bf16.mxu0 0
  %834 = vmatpush1.bf16.msra.mxu0 0
  %835 = vmatprep.subr.bf16.mxu0 0
  %836 = vmatpush1.bf16.msra.mxu0 0
  %837 = vmatprep.subr.bf16.mxu0 0
  %838 = vmatpush1.bf16.msra.mxu0 0
  %839 = vmatprep.subr.bf16.mxu0 0
  %840 = vmatpush1.bf16.msra.mxu0 0
  %841 = vmatprep.subr.bf16.mxu0 0
  %842 = vmatpush1.bf16.msra.mxu0 0
  %843 = vmatprep.subr.bf16.mxu0 0
  %844 = vmatpush1.bf16.msra.mxu0 0
  %845 = vmatprep.subr.bf16.mxu0 0
  %846 = vmatpush1.bf16.msra.mxu0 %v758
  %847 = vmatprep.subr.bf16.mxu0 0
  %848 = vmatpush1.bf16.msra.mxu0 %v728
  %849 = vmatprep.subr.bf16.mxu0 0
  %850 = vmatpush2.bf16.msra.mxu0 0
  %851 = vmatprep.subr.bf16.mxu0 0
  %852 = vmatpush2.bf16.msra.mxu0 0
  %853 = vmatprep.subr.bf16.mxu0 0
  %854 = vmatpush2.bf16.msra.mxu0 0
  %855 = vmatprep.subr.bf16.mxu0 0
  %856 = vmatpush2.bf16.msra.mxu0 0
  %857 = vmatprep.subr.bf16.mxu0 0
  %858 = vmatpush2.bf16.msra.mxu0 0
  %859 = vmatprep.subr.bf16.mxu0 0
  %860 = vmatpush2.bf16.msra.mxu0 0
  %861 = vmatprep.subr.bf16.mxu0 0
  %862 = vmatpush2.bf16.msra.mxu0 0
  %863 = vmatprep.subr.bf16.mxu0 0
  %864 = vmatpush2.bf16.msra.mxu0 0
  %865 = vmatprep.mubr.bf16.mxu0 0
  %866 = vmatmul.mubr.bf16.gmra.mxu0 %v737
  %v867 = vpop.f32.mrf.mxu0
  %v868 = vadd.f32 %v702, %v867
  %v869 = vpop.f32.mrf.mxu0
  %v870 = vpop.f32.mrf.mxu0
  %v871 = vadd.f32 %v702, %v870
  %v872 = vpop.f32.mrf.mxu0
  %873 = vmatprep.mubr.bf16.mxu0 0
  %874 = vmatmul.mubr.bf16.gmra.mxu0 %v740
  %v875 = vpop.f32.mrf.mxu0
  %v876 = vadd.f32 %v702, %v875
  %v877 = vpop.f32.mrf.mxu0
  %v878 = vpop.f32.mrf.mxu0
  %v879 = vadd.f32 %v702, %v878
  %v880 = vpop.f32.mrf.mxu0
  %881 = vmatprep.mubr.bf16.mxu0 0
  %882 = vmatmul.mubr.bf16.gmra.mxu0 %v743
  %v883 = vpop.f32.mrf.mxu0
  %v884 = vadd.f32 %v702, %v883
  %v885 = vpop.f32.mrf.mxu0
  %v886 = vpop.f32.mrf.mxu0
  %v887 = vadd.f32 %v702, %v886
  %v888 = vpop.f32.mrf.mxu0
  %889 = vmatprep.mubr.bf16.mxu0 0
  %890 = vmatmul.mubr.bf16.gmra.mxu0 %v746
  %v891 = vpop.f32.mrf.mxu0
  %v892 = vadd.f32 %v702, %v891
  %v893 = vpop.f32.mrf.mxu0
  %v894 = vpop.f32.mrf.mxu0
  %v895 = vadd.f32 %v702, %v894
  %v896 = vpop.f32.mrf.mxu0
  %897 = vdwg.mxu0
  %v898 = vld [vmem:[%s11] sm:$0xff]
  %v899 = vld [vmem:[%s11 + $0x8] sm:$0xf]
  %v900 = vld [vmem:[%s11 + $0xc] sm:$0xff]
  %v901 = vld [vmem:[%s11 + $0x14] sm:$0xf]
  %v902 = vld [vmem:[%s11 + $0x18] sm:$0xff]
  %v903 = vld [vmem:[%s11 + $0x20] sm:$0xf]
  %v904 = vld [vmem:[%s11 + $0x24] sm:$0xff]
  %v905 = vld [vmem:[%s11 + $0x2c] sm:$0xf]
  %v906 = vld [vmem:[%s11 + $0x30] sm:$0xff]
  %v907 = vld [vmem:[%s11 + $0x38] sm:$0xf]
  %v908 = vld [vmem:[%s11 + $0x3c] sm:$0xff]
  %v909 = vld [vmem:[%s11 + $0x44] sm:$0xf]
  %v910 = vld [vmem:[%s11 + $0x48] sm:$0xff]
  %v911 = vld [vmem:[%s11 + $0x50] sm:$0xf]
  %v912 = vld [vmem:[%s11 + $0x54] sm:$0xff]
  %v913 = vld [vmem:[%s11 + $0x5c] sm:$0xf]
  %v914 = vld [vmem:[%s11 + $0x60] sm:$0xff]
  %v915 = vld [vmem:[%s11 + $0x68] sm:$0xf]
  %v916 = vld [vmem:[%s11 + $0x6c] sm:$0xff]
  %v917 = vld [vmem:[%s11 + $0x74] sm:$0xf]
  %v918 = vld [vmem:[%s11 + $0x78] sm:$0xff]
  %v919 = vld [vmem:[%s11 + $0x80] sm:$0xf]
  %v920 = vld [vmem:[%s11 + $0x84] sm:$0xff]
  %v921 = vld [vmem:[%s11 + $0x8c] sm:$0xf]
  %v922 = vld [vmem:[%s11 + $0x90] sm:$0xff]
  %v923 = vld [vmem:[%s11 + $0x98] sm:$0xf]
  %v924 = vld [vmem:[%s11 + $0x9c] sm:$0xff]
  %v925 = vld [vmem:[%s11 + $0xa4] sm:$0xf]
  %v926 = vld [vmem:[%s11 + $0xa8] sm:$0xff]
  %v927 = vld [vmem:[%s11 + $0xb0] sm:$0xf]
  %v928 = vld [vmem:[%s11 + $0xb4] sm:$0xff]
  %v929 = vld [vmem:[%s11 + $0xbc] sm:$0xf]
  %v930 = vld [vmem:[%s12] sm:$0x1]
  %v931 = vld [vmem:[%s20] sm:$0x1]
  %v933 = vlaneseq
  %v934 = vshrl.u32 %v933, 7
  %v935 = vsub.s32 0, %v934
  %v936 = vrot.slane %v931, %v935
  %v938 = vpack.c.bf16 %v936, %v936
  %v971 = vunpack.c.l.b16 %v898
  %v972 = vunpack.c.h.b16 %v898
  %v973 = vunpack.c.l.b16 %v899
  %v974 = vunpack.c.l.b16 %v900
  %v975 = vunpack.c.h.b16 %v900
  %v976 = vunpack.c.l.b16 %v901
  %v977 = vunpack.c.l.b16 %v902
  %v978 = vunpack.c.h.b16 %v902
  %v979 = vunpack.c.l.b16 %v903
  %v980 = vunpack.c.l.b16 %v904
  %v981 = vunpack.c.h.b16 %v904
  %v982 = vunpack.c.l.b16 %v905
  %v983 = vunpack.c.l.b16 %v906
  %v984 = vunpack.c.h.b16 %v906
  %v985 = vunpack.c.l.b16 %v907
  %v986 = vunpack.c.l.b16 %v908
  %v987 = vunpack.c.h.b16 %v908
  %v988 = vunpack.c.l.b16 %v909
  %v989 = vunpack.c.l.b16 %v910
  %v990 = vunpack.c.h.b16 %v910
  %v991 = vunpack.c.l.b16 %v911
  %v992 = vunpack.c.l.b16 %v912
  %v993 = vunpack.c.h.b16 %v912
  %v994 = vunpack.c.l.b16 %v913
  %v995 = vunpack.c.l.b16 %v914
  %v996 = vunpack.c.h.b16 %v914
  %v997 = vunpack.c.l.b16 %v915
  %v998 = vunpack.c.l.b16 %v916
  %v999 = vunpack.c.h.b16 %v916
  %v1000 = vunpack.c.l.b16 %v917
  %v1001 = vunpack.c.l.b16 %v918
  %v1002 = vunpack.c.h.b16 %v918
  %v1003 = vunpack.c.l.b16 %v919
  %v1004 = vunpack.c.l.b16 %v920
  %v1005 = vunpack.c.h.b16 %v920
  %v1006 = vunpack.c.l.b16 %v921
  %v1007 = vunpack.c.l.b16 %v922
  %v1008 = vunpack.c.h.b16 %v922
  %v1009 = vunpack.c.l.b16 %v923
  %v1010 = vunpack.c.l.b16 %v924
  %v1011 = vunpack.c.h.b16 %v924
  %v1012 = vunpack.c.l.b16 %v925
  %v1013 = vunpack.c.l.b16 %v926
  %v1014 = vunpack.c.h.b16 %v926
  %v1015 = vunpack.c.l.b16 %v927
  %v1016 = vunpack.c.l.b16 %v928
  %v1017 = vunpack.c.h.b16 %v928
  %v1018 = vunpack.c.l.b16 %v929
  %v1019 = vpack.c.b16 %v974, %v971
  %v1020 = vpack.c.b16 %v975, %v972
  %v1021 = vpack.c.b16 %v976, %v973
  %v1022 = vpack.c.b16 %v980, %v977
  %v1023 = vpack.c.b16 %v981, %v978
  %v1024 = vpack.c.b16 %v982, %v979
  %v1025 = vpack.c.b16 %v986, %v983
  %v1026 = vpack.c.b16 %v987, %v984
  %v1027 = vpack.c.b16 %v988, %v985
  %v1028 = vpack.c.b16 %v992, %v989
  %v1029 = vpack.c.b16 %v993, %v990
  %v1030 = vpack.c.b16 %v994, %v991
  %v1031 = vpack.c.b16 %v998, %v995
  %v1032 = vpack.c.b16 %v999, %v996
  %v1033 = vpack.c.b16 %v1000, %v997
  %v1034 = vpack.c.b16 %v1004, %v1001
  %v1035 = vpack.c.b16 %v1005, %v1002
  %v1036 = vpack.c.b16 %v1006, %v1003
  %v1037 = vpack.c.b16 %v1010, %v1007
  %v1038 = vpack.c.b16 %v1011, %v1008
  %v1039 = vpack.c.b16 %v1012, %v1009
  %v1040 = vpack.c.b16 %v1016, %v1013
  %v1041 = vpack.c.b16 %v1017, %v1014
  %v1042 = vpack.c.b16 %v1018, %v1015
  %1067 = vmatprep.subr.bf16.mxu0 %v1041
  %1068 = vmatpush1.bf16.msra.mxu0 %v1040
  %1069 = vmatprep.subr.bf16.mxu0 %v1038
  %1070 = vmatpush1.bf16.msra.mxu0 %v1037
  %1071 = vmatprep.subr.bf16.mxu0 %v1035
  %1072 = vmatpush1.bf16.msra.mxu0 %v1034
  %1073 = vmatprep.subr.bf16.mxu0 %v1032
  %1074 = vmatpush1.bf16.msra.mxu0 %v1031
  %1075 = vmatprep.subr.bf16.mxu0 %v1029
  %1076 = vmatpush1.bf16.msra.mxu0 %v1028
  %1077 = vmatprep.subr.bf16.mxu0 %v1026
  %1078 = vmatpush1.bf16.msra.mxu0 %v1025
  %1079 = vmatprep.subr.bf16.mxu0 %v1023
  %1080 = vmatpush1.bf16.msra.mxu0 %v1022
  %1081 = vmatprep.subr.bf16.mxu0 %v1020
  %1082 = vmatpush1.bf16.msra.mxu0 %v1019
  %1083 = vmatprep.subr.bf16.mxu0 0
  %1084 = vmatpush2.bf16.msra.mxu0 0
  %1085 = vmatprep.subr.bf16.mxu0 0
  %1086 = vmatpush2.bf16.msra.mxu0 0
  %1087 = vmatprep.subr.bf16.mxu0 0
  %1088 = vmatpush2.bf16.msra.mxu0 0
  %1089 = vmatprep.subr.bf16.mxu0 0
  %1090 = vmatpush2.bf16.msra.mxu0 0
  %1091 = vmatprep.subr.bf16.mxu0 0
  %1092 = vmatpush2.bf16.msra.mxu0 0
  %1093 = vmatprep.subr.bf16.mxu0 0
  %1094 = vmatpush2.bf16.msra.mxu0 0
  %1095 = vmatprep.subr.bf16.mxu0 0
  %1096 = vmatpush2.bf16.msra.mxu0 0
  %1097 = vmatprep.subr.bf16.mxu0 0
  %1098 = vmatpush2.bf16.msra.mxu0 0
  %1099 = vmatprep.mubr.bf16.mxu0 0
  %1100 = vmatmul.mubr.bf16.gmra.mxu0 %v938
  %v1101 = vpop.f32.mrf.mxu0
  %v1102 = vadd.f32 0.0, %v1101
  %v1103 = vpop.f32.mrf.mxu0
  %v1104 = vadd.f32 0.0, %v1103
  %v1105 = vpop.f32.mrf.mxu0
  %v1106 = vpop.f32.mrf.mxu0
  %1107 = vdwg.mxu0
  %1108 = vmatprep.subr.bf16.mxu0 0
  %1109 = vmatpush1.bf16.msra.mxu0 %v1042
  %1110 = vmatprep.subr.bf16.mxu0 0
  %1111 = vmatpush1.bf16.msra.mxu0 %v1039
  %1112 = vmatprep.subr.bf16.mxu0 0
  %1113 = vmatpush1.bf16.msra.mxu0 %v1036
  %1114 = vmatprep.subr.bf16.mxu0 0
  %1115 = vmatpush1.bf16.msra.mxu0 %v1033
  %1116 = vmatprep.subr.bf16.mxu0 0
  %1117 = vmatpush1.bf16.msra.mxu0 %v1030
  %1118 = vmatprep.subr.bf16.mxu0 0
  %1119 = vmatpush1.bf16.msra.mxu0 %v1027
  %1120 = vmatprep.subr.bf16.mxu0 0
  %1121 = vmatpush1.bf16.msra.mxu0 %v1024
  %1122 = vmatprep.subr.bf16.mxu0 0
  %1123 = vmatpush1.bf16.msra.mxu0 %v1021
  %1124 = vmatprep.subr.bf16.mxu0 0
  %1125 = vmatpush2.bf16.msra.mxu0 0
  %1126 = vmatprep.subr.bf16.mxu0 0
  %1127 = vmatpush2.bf16.msra.mxu0 0
  %1128 = vmatprep.subr.bf16.mxu0 0
  %1129 = vmatpush2.bf16.msra.mxu0 0
  %1130 = vmatprep.subr.bf16.mxu0 0
  %1131 = vmatpush2.bf16.msra.mxu0 0
  %1132 = vmatprep.subr.bf16.mxu0 0
  %1133 = vmatpush2.bf16.msra.mxu0 0
  %1134 = vmatprep.subr.bf16.mxu0 0
  %1135 = vmatpush2.bf16.msra.mxu0 0
  %1136 = vmatprep.subr.bf16.mxu0 0
  %1137 = vmatpush2.bf16.msra.mxu0 0
  %1138 = vmatprep.subr.bf16.mxu0 0
  %1139 = vmatpush2.bf16.msra.mxu0 0
  %1140 = vmatprep.mubr.bf16.mxu0 0
  %1141 = vmatmul.mubr.bf16.gmra.mxu0 %v938
  %v1142 = vpop.f32.mrf.mxu0
  %v1143 = vadd.f32 0.0, %v1142
  %v1144 = vpop.f32.mrf.mxu0
  %v1145 = vpop.f32.mrf.mxu0
  %v1146 = vpop.f32.mrf.mxu0
  %1147 = vdwg.mxu0
  %v1148 = vadd.f32 %v795, %v1102
  %v1149 = vxor.u32 %v1148, 2147483648
  %v1150 = vmul.f32 %v1149, 1.442695
  %v1151 = vpow.pop %v1150
  %v1152 = vadd.f32 %v1151, 1.0
  %v1153 = vrcp.pop %v1152
  %v1154 = vmul.f32 1.0, %v1153
  %v1155 = vadd.f32 %v797, %v1104
  %v1156 = vxor.u32 %v1155, 2147483648
  %v1157 = vmul.f32 %v1156, 1.442695
  %v1158 = vpow.pop %v1157
  %v1159 = vadd.f32 %v1158, 1.0
  %v1160 = vrcp.pop %v1159
  %v1161 = vmul.f32 1.0, %v1160
  %v1163 = vlaneseq
  %v1164 = vshrl.u32 %v1163, 7
  %v1165 = vsub.s32 0, %v1164
  %v1166 = vrot.slane %v930, %v1165
  %v1168 = vadd.f32 %v1143, %v1166
  %v1169 = vmul.f32 %v1154, %v1168
  %v1170 = vadd.f32 %v868, %v1169
  %v1171 = vtanh.pop %v1170
  %v1172 = vsub.f32 1.0, %v1161
  %v1173 = vmul.f32 %v1172, %v1171
  %v1174 = vmul.f32 %v1161, %v936
  %v1175 = vadd.f32 %v1173, %v1174
  %1176 = vst [vmem:[#allocation2] sm:$0xff] %v1175
  %v1177 = vpack.c.bf16 %v1175, %v1175
  %1178 = vmatprep.subr.bf16.mxu0 %v1041
  %1179 = vmatpush1.bf16.msra.mxu0 %v1040
  %1180 = vmatprep.subr.bf16.mxu0 %v1038
  %1181 = vmatpush1.bf16.msra.mxu0 %v1037
  %1182 = vmatprep.subr.bf16.mxu0 %v1035
  %1183 = vmatpush1.bf16.msra.mxu0 %v1034
  %1184 = vmatprep.subr.bf16.mxu0 %v1032
  %1185 = vmatpush1.bf16.msra.mxu0 %v1031
  %1186 = vmatprep.subr.bf16.mxu0 %v1029
  %1187 = vmatpush1.bf16.msra.mxu0 %v1028
  %1188 = vmatprep.subr.bf16.mxu0 %v1026
  %1189 = vmatpush1.bf16.msra.mxu0 %v1025
  %1190 = vmatprep.subr.bf16.mxu0 %v1023
  %1191 = vmatpush1.bf16.msra.mxu0 %v1022
  %1192 = vmatprep.subr.bf16.mxu0 %v1020
  %1193 = vmatpush1.bf16.msra.mxu0 %v1019
  %1194 = vmatprep.subr.bf16.mxu0 0
  %1195 = vmatpush2.bf16.msra.mxu0 0
  %1196 = vmatprep.subr.bf16.mxu0 0
  %1197 = vmatpush2.bf16.msra.mxu0 0
  %1198 = vmatprep.subr.bf16.mxu0 0
  %1199 = vmatpush2.bf16.msra.mxu0 0
  %1200 = vmatprep.subr.bf16.mxu0 0
  %1201 = vmatpush2.bf16.msra.mxu0 0
  %1202 = vmatprep.subr.bf16.mxu0 0
  %1203 = vmatpush2.bf16.msra.mxu0 0
  %1204 = vmatprep.subr.bf16.mxu0 0
  %1205 = vmatpush2.bf16.msra.mxu0 0
  %1206 = vmatprep.subr.bf16.mxu0 0
  %1207 = vmatpush2.bf16.msra.mxu0 0
  %1208 = vmatprep.subr.bf16.mxu0 0
  %1209 = vmatpush2.bf16.msra.mxu0 0
  %1210 = vmatprep.mubr.bf16.mxu0 0
  %1211 = vmatmul.mubr.bf16.gmra.mxu0 %v1177
  %v1212 = vpop.f32.mrf.mxu0
  %v1213 = vadd.f32 0.0, %v1212
  %v1214 = vpop.f32.mrf.mxu0
  %v1215 = vadd.f32 0.0, %v1214
  %v1216 = vpop.f32.mrf.mxu0
  %v1217 = vpop.f32.mrf.mxu0
  %1218 = vdwg.mxu0
  %1219 = vmatprep.subr.bf16.mxu0 0
  %1220 = vmatpush1.bf16.msra.mxu0 %v1042
  %1221 = vmatprep.subr.bf16.mxu0 0
  %1222 = vmatpush1.bf16.msra.mxu0 %v1039
  %1223 = vmatprep.subr.bf16.mxu0 0
  %1224 = vmatpush1.bf16.msra.mxu0 %v1036
  %1225 = vmatprep.subr.bf16.mxu0 0
  %1226 = vmatpush1.bf16.msra.mxu0 %v1033
  %1227 = vmatprep.subr.bf16.mxu0 0
  %1228 = vmatpush1.bf16.msra.mxu0 %v1030
  %1229 = vmatprep.subr.bf16.mxu0 0
  %1230 = vmatpush1.bf16.msra.mxu0 %v1027
  %1231 = vmatprep.subr.bf16.mxu0 0
  %1232 = vmatpush1.bf16.msra.mxu0 %v1024
  %1233 = vmatprep.subr.bf16.mxu0 0
  %1234 = vmatpush1.bf16.msra.mxu0 %v1021
  %1235 = vmatprep.subr.bf16.mxu0 0
  %1236 = vmatpush2.bf16.msra.mxu0 0
  %1237 = vmatprep.subr.bf16.mxu0 0
  %1238 = vmatpush2.bf16.msra.mxu0 0
  %1239 = vmatprep.subr.bf16.mxu0 0
  %1240 = vmatpush2.bf16.msra.mxu0 0
  %1241 = vmatprep.subr.bf16.mxu0 0
  %1242 = vmatpush2.bf16.msra.mxu0 0
  %1243 = vmatprep.subr.bf16.mxu0 0
  %1244 = vmatpush2.bf16.msra.mxu0 0
  %1245 = vmatprep.subr.bf16.mxu0 0
  %1246 = vmatpush2.bf16.msra.mxu0 0
  %1247 = vmatprep.subr.bf16.mxu0 0
  %1248 = vmatpush2.bf16.msra.mxu0 0
  %1249 = vmatprep.subr.bf16.mxu0 0
  %1250 = vmatpush2.bf16.msra.mxu0 0
  %1251 = vmatprep.mubr.bf16.mxu0 0
  %1252 = vmatmul.mubr.bf16.gmra.mxu0 %v1177
  %v1253 = vpop.f32.mrf.mxu0
  %v1254 = vadd.f32 0.0, %v1253
  %v1255 = vpop.f32.mrf.mxu0
  %v1256 = vpop.f32.mrf.mxu0
  %v1257 = vpop.f32.mrf.mxu0
  %1258 = vdwg.mxu0
  %v1259 = vadd.f32 %v799, %v1213
  %v1260 = vxor.u32 %v1259, 2147483648
  %v1261 = vmul.f32 %v1260, 1.442695
  %v1262 = vpow.pop %v1261
  %v1263 = vadd.f32 %v1262, 1.0
  %v1264 = vrcp.pop %v1263
  %v1265 = vmul.f32 1.0, %v1264
  %v1266 = vadd.f32 %v801, %v1215
  %v1267 = vxor.u32 %v1266, 2147483648
  %v1268 = vmul.f32 %v1267, 1.442695
  %v1269 = vpow.pop %v1268
  %v1270 = vadd.f32 %v1269, 1.0
  %v1271 = vrcp.pop %v1270
  %v1272 = vmul.f32 1.0, %v1271
  %v1273 = vadd.f32 %v1254, %v1166
  %v1274 = vmul.f32 %v1265, %v1273
  %v1275 = vadd.f32 %v871, %v1274
  %v1276 = vtanh.pop %v1275
  %v1277 = vsub.f32 1.0, %v1272
  %v1278 = vmul.f32 %v1277, %v1276
  %v1279 = vmul.f32 %v1272, %v1175
  %v1280 = vadd.f32 %v1278, %v1279
  %1281 = vst [vmem:[#allocation2 + $0x8] sm:$0xff] %v1280
  %v1282 = vpack.c.bf16 %v1280, %v1280
  %1283 = vmatprep.subr.bf16.mxu0 %v1041
  %1284 = vmatpush1.bf16.msra.mxu0 %v1040
  %1285 = vmatprep.subr.bf16.mxu0 %v1038
  %1286 = vmatpush1.bf16.msra.mxu0 %v1037
  %1287 = vmatprep.subr.bf16.mxu0 %v1035
  %1288 = vmatpush1.bf16.msra.mxu0 %v1034
  %1289 = vmatprep.subr.bf16.mxu0 %v1032
  %1290 = vmatpush1.bf16.msra.mxu0 %v1031
  %1291 = vmatprep.subr.bf16.mxu0 %v1029
  %1292 = vmatpush1.bf16.msra.mxu0 %v1028
  %1293 = vmatprep.subr.bf16.mxu0 %v1026
  %1294 = vmatpush1.bf16.msra.mxu0 %v1025
  %1295 = vmatprep.subr.bf16.mxu0 %v1023
  %1296 = vmatpush1.bf16.msra.mxu0 %v1022
  %1297 = vmatprep.subr.bf16.mxu0 %v1020
  %1298 = vmatpush1.bf16.msra.mxu0 %v1019
  %1299 = vmatprep.subr.bf16.mxu0 0
  %1300 = vmatpush2.bf16.msra.mxu0 0
  %1301 = vmatprep.subr.bf16.mxu0 0
  %1302 = vmatpush2.bf16.msra.mxu0 0
  %1303 = vmatprep.subr.bf16.mxu0 0
  %1304 = vmatpush2.bf16.msra.mxu0 0
  %1305 = vmatprep.subr.bf16.mxu0 0
  %1306 = vmatpush2.bf16.msra.mxu0 0
  %1307 = vmatprep.subr.bf16.mxu0 0
  %1308 = vmatpush2.bf16.msra.mxu0 0
  %1309 = vmatprep.subr.bf16.mxu0 0
  %1310 = vmatpush2.bf16.msra.mxu0 0
  %1311 = vmatprep.subr.bf16.mxu0 0
  %1312 = vmatpush2.bf16.msra.mxu0 0
  %1313 = vmatprep.subr.bf16.mxu0 0
  %1314 = vmatpush2.bf16.msra.mxu0 0
  %1315 = vmatprep.mubr.bf16.mxu0 0
  %1316 = vmatmul.mubr.bf16.gmra.mxu0 %v1282
  %v1317 = vpop.f32.mrf.mxu0
  %v1318 = vadd.f32 0.0, %v1317
  %v1319 = vpop.f32.mrf.mxu0
  %v1320 = vadd.f32 0.0, %v1319
  %v1321 = vpop.f32.mrf.mxu0
  %v1322 = vpop.f32.mrf.mxu0
  %1323 = vdwg.mxu0
  %1324 = vmatprep.subr.bf16.mxu0 0
  %1325 = vmatpush1.bf16.msra.mxu0 %v1042
  %1326 = vmatprep.subr.bf16.mxu0 0
  %1327 = vmatpush1.bf16.msra.mxu0 %v1039
  %1328 = vmatprep.subr.bf16.mxu0 0
  %1329 = vmatpush1.bf16.msra.mxu0 %v1036
  %1330 = vmatprep.subr.bf16.mxu0 0
  %1331 = vmatpush1.bf16.msra.mxu0 %v1033
  %1332 = vmatprep.subr.bf16.mxu0 0
  %1333 = vmatpush1.bf16.msra.mxu0 %v1030
  %1334 = vmatprep.subr.bf16.mxu0 0
  %1335 = vmatpush1.bf16.msra.mxu0 %v1027
  %1336 = vmatprep.subr.bf16.mxu0 0
  %1337 = vmatpush1.bf16.msra.mxu0 %v1024
  %1338 = vmatprep.subr.bf16.mxu0 0
  %1339 = vmatpush1.bf16.msra.mxu0 %v1021
  %1340 = vmatprep.subr.bf16.mxu0 0
  %1341 = vmatpush2.bf16.msra.mxu0 0
  %1342 = vmatprep.subr.bf16.mxu0 0
  %1343 = vmatpush2.bf16.msra.mxu0 0
  %1344 = vmatprep.subr.bf16.mxu0 0
  %1345 = vmatpush2.bf16.msra.mxu0 0
  %1346 = vmatprep.subr.bf16.mxu0 0
  %1347 = vmatpush2.bf16.msra.mxu0 0
  %1348 = vmatprep.subr.bf16.mxu0 0
  %1349 = vmatpush2.bf16.msra.mxu0 0
  %1350 = vmatprep.subr.bf16.mxu0 0
  %1351 = vmatpush2.bf16.msra.mxu0 0
  %1352 = vmatprep.subr.bf16.mxu0 0
  %1353 = vmatpush2.bf16.msra.mxu0 0
  %1354 = vmatprep.subr.bf16.mxu0 0
  %1355 = vmatpush2.bf16.msra.mxu0 0
  %1356 = vmatprep.mubr.bf16.mxu0 0
  %1357 = vmatmul.mubr.bf16.gmra.mxu0 %v1282
  %v1358 = vpop.f32.mrf.mxu0
  %v1359 = vadd.f32 0.0, %v1358
  %v1360 = vpop.f32.mrf.mxu0
  %v1361 = vpop.f32.mrf.mxu0
  %v1362 = vpop.f32.mrf.mxu0
  %1363 = vdwg.mxu0
  %v1364 = vadd.f32 %v805, %v1318
  %v1365 = vxor.u32 %v1364, 2147483648
  %v1366 = vmul.f32 %v1365, 1.442695
  %v1367 = vpow.pop %v1366
  %v1368 = vadd.f32 %v1367, 1.0
  %v1369 = vrcp.pop %v1368
  %v1370 = vmul.f32 1.0, %v1369
  %v1371 = vadd.f32 %v807, %v1320
  %v1372 = vxor.u32 %v1371, 2147483648
  %v1373 = vmul.f32 %v1372, 1.442695
  %v1374 = vpow.pop %v1373
  %v1375 = vadd.f32 %v1374, 1.0
  %v1376 = vrcp.pop %v1375
  %v1377 = vmul.f32 1.0, %v1376
  %v1378 = vadd.f32 %v1359, %v1166
  %v1379 = vmul.f32 %v1370, %v1378
  %v1380 = vadd.f32 %v876, %v1379
  %v1381 = vtanh.pop %v1380
  %v1382 = vsub.f32 1.0, %v1377
  %v1383 = vmul.f32 %v1382, %v1381
  %v1384 = vmul.f32 %v1377, %v1280
  %v1385 = vadd.f32 %v1383, %v1384
  %1386 = vst [vmem:[#allocation2 + $0x10] sm:$0xff] %v1385
  %v1387 = vpack.c.bf16 %v1385, %v1385
  %1388 = vmatprep.subr.bf16.mxu0 %v1041
  %1389 = vmatpush1.bf16.msra.mxu0 %v1040
  %1390 = vmatprep.subr.bf16.mxu0 %v1038
  %1391 = vmatpush1.bf16.msra.mxu0 %v1037
  %1392 = vmatprep.subr.bf16.mxu0 %v1035
  %1393 = vmatpush1.bf16.msra.mxu0 %v1034
  %1394 = vmatprep.subr.bf16.mxu0 %v1032
  %1395 = vmatpush1.bf16.msra.mxu0 %v1031
  %1396 = vmatprep.subr.bf16.mxu0 %v1029
  %1397 = vmatpush1.bf16.msra.mxu0 %v1028
  %1398 = vmatprep.subr.bf16.mxu0 %v1026
  %1399 = vmatpush1.bf16.msra.mxu0 %v1025
  %1400 = vmatprep.subr.bf16.mxu0 %v1023
  %1401 = vmatpush1.bf16.msra.mxu0 %v1022
  %1402 = vmatprep.subr.bf16.mxu0 %v1020
  %1403 = vmatpush1.bf16.msra.mxu0 %v1019
  %1404 = vmatprep.subr.bf16.mxu0 0
  %1405 = vmatpush2.bf16.msra.mxu0 0
  %1406 = vmatprep.subr.bf16.mxu0 0
  %1407 = vmatpush2.bf16.msra.mxu0 0
  %1408 = vmatprep.subr.bf16.mxu0 0
  %1409 = vmatpush2.bf16.msra.mxu0 0
  %1410 = vmatprep.subr.bf16.mxu0 0
  %1411 = vmatpush2.bf16.msra.mxu0 0
  %1412 = vmatprep.subr.bf16.mxu0 0
  %1413 = vmatpush2.bf16.msra.mxu0 0
  %1414 = vmatprep.subr.bf16.mxu0 0
  %1415 = vmatpush2.bf16.msra.mxu0 0
  %1416 = vmatprep.subr.bf16.mxu0 0
  %1417 = vmatpush2.bf16.msra.mxu0 0
  %1418 = vmatprep.subr.bf16.mxu0 0
  %1419 = vmatpush2.bf16.msra.mxu0 0
  %1420 = vmatprep.mubr.bf16.mxu0 0
  %1421 = vmatmul.mubr.bf16.gmra.mxu0 %v1387
  %v1422 = vpop.f32.mrf.mxu0
  %v1423 = vadd.f32 0.0, %v1422
  %v1424 = vpop.f32.mrf.mxu0
  %v1425 = vadd.f32 0.0, %v1424
  %v1426 = vpop.f32.mrf.mxu0
  %v1427 = vpop.f32.mrf.mxu0
  %1428 = vdwg.mxu0
  %1429 = vmatprep.subr.bf16.mxu0 0
  %1430 = vmatpush1.bf16.msra.mxu0 %v1042
  %1431 = vmatprep.subr.bf16.mxu0 0
  %1432 = vmatpush1.bf16.msra.mxu0 %v1039
  %1433 = vmatprep.subr.bf16.mxu0 0
  %1434 = vmatpush1.bf16.msra.mxu0 %v1036
  %1435 = vmatprep.subr.bf16.mxu0 0
  %1436 = vmatpush1.bf16.msra.mxu0 %v1033
  %1437 = vmatprep.subr.bf16.mxu0 0
  %1438 = vmatpush1.bf16.msra.mxu0 %v1030
  %1439 = vmatprep.subr.bf16.mxu0 0
  %1440 = vmatpush1.bf16.msra.mxu0 %v1027
  %1441 = vmatprep.subr.bf16.mxu0 0
  %1442 = vmatpush1.bf16.msra.mxu0 %v1024
  %1443 = vmatprep.subr.bf16.mxu0 0
  %1444 = vmatpush1.bf16.msra.mxu0 %v1021
  %1445 = vmatprep.subr.bf16.mxu0 0
  %1446 = vmatpush2.bf16.msra.mxu0 0
  %1447 = vmatprep.subr.bf16.mxu0 0
  %1448 = vmatpush2.bf16.msra.mxu0 0
  %1449 = vmatprep.subr.bf16.mxu0 0
  %1450 = vmatpush2.bf16.msra.mxu0 0
  %1451 = vmatprep.subr.bf16.mxu0 0
  %1452 = vmatpush2.bf16.msra.mxu0 0
  %1453 = vmatprep.subr.bf16.mxu0 0
  %1454 = vmatpush2.bf16.msra.mxu0 0
  %1455 = vmatprep.subr.bf16.mxu0 0
  %1456 = vmatpush2.bf16.msra.mxu0 0
  %1457 = vmatprep.subr.bf16.mxu0 0
  %1458 = vmatpush2.bf16.msra.mxu0 0
  %1459 = vmatprep.subr.bf16.mxu0 0
  %1460 = vmatpush2.bf16.msra.mxu0 0
  %1461 = vmatprep.mubr.bf16.mxu0 0
  %1462 = vmatmul.mubr.bf16.gmra.mxu0 %v1387
  %v1463 = vpop.f32.mrf.mxu0
  %v1464 = vadd.f32 0.0, %v1463
  %v1465 = vpop.f32.mrf.mxu0
  %v1466 = vpop.f32.mrf.mxu0
  %v1467 = vpop.f32.mrf.mxu0
  %1468 = vdwg.mxu0
  %v1469 = vadd.f32 %v809, %v1423
  %v1470 = vxor.u32 %v1469, 2147483648
  %v1471 = vmul.f32 %v1470, 1.442695
  %v1472 = vpow.pop %v1471
  %v1473 = vadd.f32 %v1472, 1.0
  %v1474 = vrcp.pop %v1473
  %v1475 = vmul.f32 1.0, %v1474
  %v1476 = vadd.f32 %v811, %v1425
  %v1477 = vxor.u32 %v1476, 2147483648
  %v1478 = vmul.f32 %v1477, 1.442695
  %v1479 = vpow.pop %v1478
  %v1480 = vadd.f32 %v1479, 1.0
  %v1481 = vrcp.pop %v1480
  %v1482 = vmul.f32 1.0, %v1481
  %v1483 = vadd.f32 %v1464, %v1166
  %v1484 = vmul.f32 %v1475, %v1483
  %v1485 = vadd.f32 %v879, %v1484
  %v1486 = vtanh.pop %v1485
  %v1487 = vsub.f32 1.0, %v1482
  %v1488 = vmul.f32 %v1487, %v1486
  %v1489 = vmul.f32 %v1482, %v1385
  %v1490 = vadd.f32 %v1488, %v1489
  %1491 = vst [vmem:[#allocation2 + $0x18] sm:$0xff] %v1490
  %v1492 = vpack.c.bf16 %v1490, %v1490
  %1493 = vmatprep.subr.bf16.mxu0 %v1041
  %1494 = vmatpush1.bf16.msra.mxu0 %v1040
  %1495 = vmatprep.subr.bf16.mxu0 %v1038
  %1496 = vmatpush1.bf16.msra.mxu0 %v1037
  %1497 = vmatprep.subr.bf16.mxu0 %v1035
  %1498 = vmatpush1.bf16.msra.mxu0 %v1034
  %1499 = vmatprep.subr.bf16.mxu0 %v1032
  %1500 = vmatpush1.bf16.msra.mxu0 %v1031
  %1501 = vmatprep.subr.bf16.mxu0 %v1029
  %1502 = vmatpush1.bf16.msra.mxu0 %v1028
  %1503 = vmatprep.subr.bf16.mxu0 %v1026
  %1504 = vmatpush1.bf16.msra.mxu0 %v1025
  %1505 = vmatprep.subr.bf16.mxu0 %v1023
  %1506 = vmatpush1.bf16.msra.mxu0 %v1022
  %1507 = vmatprep.subr.bf16.mxu0 %v1020
  %1508 = vmatpush1.bf16.msra.mxu0 %v1019
  %1509 = vmatprep.subr.bf16.mxu0 0
  %1510 = vmatpush2.bf16.msra.mxu0 0
  %1511 = vmatprep.subr.bf16.mxu0 0
  %1512 = vmatpush2.bf16.msra.mxu0 0
  %1513 = vmatprep.subr.bf16.mxu0 0
  %1514 = vmatpush2.bf16.msra.mxu0 0
  %1515 = vmatprep.subr.bf16.mxu0 0
  %1516 = vmatpush2.bf16.msra.mxu0 0
  %1517 = vmatprep.subr.bf16.mxu0 0
  %1518 = vmatpush2.bf16.msra.mxu0 0
  %1519 = vmatprep.subr.bf16.mxu0 0
  %1520 = vmatpush2.bf16.msra.mxu0 0
  %1521 = vmatprep.subr.bf16.mxu0 0
  %1522 = vmatpush2.bf16.msra.mxu0 0
  %1523 = vmatprep.subr.bf16.mxu0 0
  %1524 = vmatpush2.bf16.msra.mxu0 0
  %1525 = vmatprep.mubr.bf16.mxu0 0
  %1526 = vmatmul.mubr.bf16.gmra.mxu0 %v1492
  %v1527 = vpop.f32.mrf.mxu0
  %v1528 = vadd.f32 0.0, %v1527
  %v1529 = vpop.f32.mrf.mxu0
  %v1530 = vadd.f32 0.0, %v1529
  %v1531 = vpop.f32.mrf.mxu0
  %v1532 = vpop.f32.mrf.mxu0
  %1533 = vdwg.mxu0
  %1534 = vmatprep.subr.bf16.mxu0 0
  %1535 = vmatpush1.bf16.msra.mxu0 %v1042
  %1536 = vmatprep.subr.bf16.mxu0 0
  %1537 = vmatpush1.bf16.msra.mxu0 %v1039
  %1538 = vmatprep.subr.bf16.mxu0 0
  %1539 = vmatpush1.bf16.msra.mxu0 %v1036
  %1540 = vmatprep.subr.bf16.mxu0 0
  %1541 = vmatpush1.bf16.msra.mxu0 %v1033
  %1542 = vmatprep.subr.bf16.mxu0 0
  %1543 = vmatpush1.bf16.msra.mxu0 %v1030
  %1544 = vmatprep.subr.bf16.mxu0 0
  %1545 = vmatpush1.bf16.msra.mxu0 %v1027
  %1546 = vmatprep.subr.bf16.mxu0 0
  %1547 = vmatpush1.bf16.msra.mxu0 %v1024
  %1548 = vmatprep.subr.bf16.mxu0 0
  %1549 = vmatpush1.bf16.msra.mxu0 %v1021
  %1550 = vmatprep.subr.bf16.mxu0 0
  %1551 = vmatpush2.bf16.msra.mxu0 0
  %1552 = vmatprep.subr.bf16.mxu0 0
  %1553 = vmatpush2.bf16.msra.mxu0 0
  %1554 = vmatprep.subr.bf16.mxu0 0
  %1555 = vmatpush2.bf16.msra.mxu0 0
  %1556 = vmatprep.subr.bf16.mxu0 0
  %1557 = vmatpush2.bf16.msra.mxu0 0
  %1558 = vmatprep.subr.bf16.mxu0 0
  %1559 = vmatpush2.bf16.msra.mxu0 0
  %1560 = vmatprep.subr.bf16.mxu0 0
  %1561 = vmatpush2.bf16.msra.mxu0 0
  %1562 = vmatprep.subr.bf16.mxu0 0
  %1563 = vmatpush2.bf16.msra.mxu0 0
  %1564 = vmatprep.subr.bf16.mxu0 0
  %1565 = vmatpush2.bf16.msra.mxu0 0
  %1566 = vmatprep.mubr.bf16.mxu0 0
  %1567 = vmatmul.mubr.bf16.gmra.mxu0 %v1492
  %v1568 = vpop.f32.mrf.mxu0
  %v1569 = vadd.f32 0.0, %v1568
  %v1570 = vpop.f32.mrf.mxu0
  %v1571 = vpop.f32.mrf.mxu0
  %v1572 = vpop.f32.mrf.mxu0
  %1573 = vdwg.mxu0
  %v1574 = vadd.f32 %v815, %v1528
  %v1575 = vxor.u32 %v1574, 2147483648
  %v1576 = vmul.f32 %v1575, 1.442695
  %v1577 = vpow.pop %v1576
  %v1578 = vadd.f32 %v1577, 1.0
  %v1579 = vrcp.pop %v1578
  %v1580 = vmul.f32 1.0, %v1579
  %v1581 = vadd.f32 %v817, %v1530
  %v1582 = vxor.u32 %v1581, 2147483648
  %v1583 = vmul.f32 %v1582, 1.442695
  %v1584 = vpow.pop %v1583
  %v1585 = vadd.f32 %v1584, 1.0
  %v1586 = vrcp.pop %v1585
  %v1587 = vmul.f32 1.0, %v1586
  %v1588 = vadd.f32 %v1569, %v1166
  %v1589 = vmul.f32 %v1580, %v1588
  %v1590 = vadd.f32 %v884, %v1589
  %v1591 = vtanh.pop %v1590
  %v1592 = vsub.f32 1.0, %v1587
  %v1593 = vmul.f32 %v1592, %v1591
  %v1594 = vmul.f32 %v1587, %v1490
  %v1595 = vadd.f32 %v1593, %v1594
  %1596 = vst [vmem:[#allocation2 + $0x20] sm:$0xff] %v1595
  %v1597 = vpack.c.bf16 %v1595, %v1595
  %1598 = vmatprep.subr.bf16.mxu0 %v1041
  %1599 = vmatpush1.bf16.msra.mxu0 %v1040
  %1600 = vmatprep.subr.bf16.mxu0 %v1038
  %1601 = vmatpush1.bf16.msra.mxu0 %v1037
  %1602 = vmatprep.subr.bf16.mxu0 %v1035
  %1603 = vmatpush1.bf16.msra.mxu0 %v1034
  %1604 = vmatprep.subr.bf16.mxu0 %v1032
  %1605 = vmatpush1.bf16.msra.mxu0 %v1031
  %1606 = vmatprep.subr.bf16.mxu0 %v1029
  %1607 = vmatpush1.bf16.msra.mxu0 %v1028
  %1608 = vmatprep.subr.bf16.mxu0 %v1026
  %1609 = vmatpush1.bf16.msra.mxu0 %v1025
  %1610 = vmatprep.subr.bf16.mxu0 %v1023
  %1611 = vmatpush1.bf16.msra.mxu0 %v1022
  %1612 = vmatprep.subr.bf16.mxu0 %v1020
  %1613 = vmatpush1.bf16.msra.mxu0 %v1019
  %1614 = vmatprep.subr.bf16.mxu0 0
  %1615 = vmatpush2.bf16.msra.mxu0 0
  %1616 = vmatprep.subr.bf16.mxu0 0
  %1617 = vmatpush2.bf16.msra.mxu0 0
  %1618 = vmatprep.subr.bf16.mxu0 0
  %1619 = vmatpush2.bf16.msra.mxu0 0
  %1620 = vmatprep.subr.bf16.mxu0 0
  %1621 = vmatpush2.bf16.msra.mxu0 0
  %1622 = vmatprep.subr.bf16.mxu0 0
  %1623 = vmatpush2.bf16.msra.mxu0 0
  %1624 = vmatprep.subr.bf16.mxu0 0
  %1625 = vmatpush2.bf16.msra.mxu0 0
  %1626 = vmatprep.subr.bf16.mxu0 0
  %1627 = vmatpush2.bf16.msra.mxu0 0
  %1628 = vmatprep.subr.bf16.mxu0 0
  %1629 = vmatpush2.bf16.msra.mxu0 0
  %1630 = vmatprep.mubr.bf16.mxu0 0
  %1631 = vmatmul.mubr.bf16.gmra.mxu0 %v1597
  %v1632 = vpop.f32.mrf.mxu0
  %v1633 = vadd.f32 0.0, %v1632
  %v1634 = vpop.f32.mrf.mxu0
  %v1635 = vadd.f32 0.0, %v1634
  %v1636 = vpop.f32.mrf.mxu0
  %v1637 = vpop.f32.mrf.mxu0
  %1638 = vdwg.mxu0
  %1639 = vmatprep.subr.bf16.mxu0 0
  %1640 = vmatpush1.bf16.msra.mxu0 %v1042
  %1641 = vmatprep.subr.bf16.mxu0 0
  %1642 = vmatpush1.bf16.msra.mxu0 %v1039
  %1643 = vmatprep.subr.bf16.mxu0 0
  %1644 = vmatpush1.bf16.msra.mxu0 %v1036
  %1645 = vmatprep.subr.bf16.mxu0 0
  %1646 = vmatpush1.bf16.msra.mxu0 %v1033
  %1647 = vmatprep.subr.bf16.mxu0 0
  %1648 = vmatpush1.bf16.msra.mxu0 %v1030
  %1649 = vmatprep.subr.bf16.mxu0 0
  %1650 = vmatpush1.bf16.msra.mxu0 %v1027
  %1651 = vmatprep.subr.bf16.mxu0 0
  %1652 = vmatpush1.bf16.msra.mxu0 %v1024
  %1653 = vmatprep.subr.bf16.mxu0 0
  %1654 = vmatpush1.bf16.msra.mxu0 %v1021
  %1655 = vmatprep.subr.bf16.mxu0 0
  %1656 = vmatpush2.bf16.msra.mxu0 0
  %1657 = vmatprep.subr.bf16.mxu0 0
  %1658 = vmatpush2.bf16.msra.mxu0 0
  %1659 = vmatprep.subr.bf16.mxu0 0
  %1660 = vmatpush2.bf16.msra.mxu0 0
  %1661 = vmatprep.subr.bf16.mxu0 0
  %1662 = vmatpush2.bf16.msra.mxu0 0
  %1663 = vmatprep.subr.bf16.mxu0 0
  %1664 = vmatpush2.bf16.msra.mxu0 0
  %1665 = vmatprep.subr.bf16.mxu0 0
  %1666 = vmatpush2.bf16.msra.mxu0 0
  %1667 = vmatprep.subr.bf16.mxu0 0
  %1668 = vmatpush2.bf16.msra.mxu0 0
  %1669 = vmatprep.subr.bf16.mxu0 0
  %1670 = vmatpush2.bf16.msra.mxu0 0
  %1671 = vmatprep.mubr.bf16.mxu0 0
  %1672 = vmatmul.mubr.bf16.gmra.mxu0 %v1597
  %v1673 = vpop.f32.mrf.mxu0
  %v1674 = vadd.f32 0.0, %v1673
  %v1675 = vpop.f32.mrf.mxu0
  %v1676 = vpop.f32.mrf.mxu0
  %v1677 = vpop.f32.mrf.mxu0
  %1678 = vdwg.mxu0
  %v1679 = vadd.f32 %v819, %v1633
  %v1680 = vxor.u32 %v1679, 2147483648
  %v1681 = vmul.f32 %v1680, 1.442695
  %v1682 = vpow.pop %v1681
  %v1683 = vadd.f32 %v1682, 1.0
  %v1684 = vrcp.pop %v1683
  %v1685 = vmul.f32 1.0, %v1684
  %v1686 = vadd.f32 %v821, %v1635
  %v1687 = vxor.u32 %v1686, 2147483648
  %v1688 = vmul.f32 %v1687, 1.442695
  %v1689 = vpow.pop %v1688
  %v1690 = vadd.f32 %v1689, 1.0
  %v1691 = vrcp.pop %v1690
  %v1692 = vmul.f32 1.0, %v1691
  %v1693 = vadd.f32 %v1674, %v1166
  %v1694 = vmul.f32 %v1685, %v1693
  %v1695 = vadd.f32 %v887, %v1694
  %v1696 = vtanh.pop %v1695
  %v1697 = vsub.f32 1.0, %v1692
  %v1698 = vmul.f32 %v1697, %v1696
  %v1699 = vmul.f32 %v1692, %v1595
  %v1700 = vadd.f32 %v1698, %v1699
  %1701 = vst [vmem:[#allocation2 + $0x28] sm:$0xff] %v1700
  %v1702 = vpack.c.bf16 %v1700, %v1700
  %1703 = vmatprep.subr.bf16.mxu0 %v1041
  %1704 = vmatpush1.bf16.msra.mxu0 %v1040
  %1705 = vmatprep.subr.bf16.mxu0 %v1038
  %1706 = vmatpush1.bf16.msra.mxu0 %v1037
  %1707 = vmatprep.subr.bf16.mxu0 %v1035
  %1708 = vmatpush1.bf16.msra.mxu0 %v1034
  %1709 = vmatprep.subr.bf16.mxu0 %v1032
  %1710 = vmatpush1.bf16.msra.mxu0 %v1031
  %1711 = vmatprep.subr.bf16.mxu0 %v1029
  %1712 = vmatpush1.bf16.msra.mxu0 %v1028
  %1713 = vmatprep.subr.bf16.mxu0 %v1026
  %1714 = vmatpush1.bf16.msra.mxu0 %v1025
  %1715 = vmatprep.subr.bf16.mxu0 %v1023
  %1716 = vmatpush1.bf16.msra.mxu0 %v1022
  %1717 = vmatprep.subr.bf16.mxu0 %v1020
  %1718 = vmatpush1.bf16.msra.mxu0 %v1019
  %1719 = vmatprep.subr.bf16.mxu0 0
  %1720 = vmatpush2.bf16.msra.mxu0 0
  %1721 = vmatprep.subr.bf16.mxu0 0
  %1722 = vmatpush2.bf16.msra.mxu0 0
  %1723 = vmatprep.subr.bf16.mxu0 0
  %1724 = vmatpush2.bf16.msra.mxu0 0
  %1725 = vmatprep.subr.bf16.mxu0 0
  %1726 = vmatpush2.bf16.msra.mxu0 0
  %1727 = vmatprep.subr.bf16.mxu0 0
  %1728 = vmatpush2.bf16.msra.mxu0 0
  %1729 = vmatprep.subr.bf16.mxu0 0
  %1730 = vmatpush2.bf16.msra.mxu0 0
  %1731 = vmatprep.subr.bf16.mxu0 0
  %1732 = vmatpush2.bf16.msra.mxu0 0
  %1733 = vmatprep.subr.bf16.mxu0 0
  %1734 = vmatpush2.bf16.msra.mxu0 0
  %1735 = vmatprep.mubr.bf16.mxu0 0
  %1736 = vmatmul.mubr.bf16.gmra.mxu0 %v1702
  %v1737 = vpop.f32.mrf.mxu0
  %v1738 = vadd.f32 0.0, %v1737
  %v1739 = vpop.f32.mrf.mxu0
  %v1740 = vadd.f32 0.0, %v1739
  %v1741 = vpop.f32.mrf.mxu0
  %v1742 = vpop.f32.mrf.mxu0
  %1743 = vdwg.mxu0
  %1744 = vmatprep.subr.bf16.mxu0 0
  %1745 = vmatpush1.bf16.msra.mxu0 %v1042
  %1746 = vmatprep.subr.bf16.mxu0 0
  %1747 = vmatpush1.bf16.msra.mxu0 %v1039
  %1748 = vmatprep.subr.bf16.mxu0 0
  %1749 = vmatpush1.bf16.msra.mxu0 %v1036
  %1750 = vmatprep.subr.bf16.mxu0 0
  %1751 = vmatpush1.bf16.msra.mxu0 %v1033
  %1752 = vmatprep.subr.bf16.mxu0 0
  %1753 = vmatpush1.bf16.msra.mxu0 %v1030
  %1754 = vmatprep.subr.bf16.mxu0 0
  %1755 = vmatpush1.bf16.msra.mxu0 %v1027
  %1756 = vmatprep.subr.bf16.mxu0 0
  %1757 = vmatpush1.bf16.msra.mxu0 %v1024
  %1758 = vmatprep.subr.bf16.mxu0 0
  %1759 = vmatpush1.bf16.msra.mxu0 %v1021
  %1760 = vmatprep.subr.bf16.mxu0 0
  %1761 = vmatpush2.bf16.msra.mxu0 0
  %1762 = vmatprep.subr.bf16.mxu0 0
  %1763 = vmatpush2.bf16.msra.mxu0 0
  %1764 = vmatprep.subr.bf16.mxu0 0
  %1765 = vmatpush2.bf16.msra.mxu0 0
  %1766 = vmatprep.subr.bf16.mxu0 0
  %1767 = vmatpush2.bf16.msra.mxu0 0
  %1768 = vmatprep.subr.bf16.mxu0 0
  %1769 = vmatpush2.bf16.msra.mxu0 0
  %1770 = vmatprep.subr.bf16.mxu0 0
  %1771 = vmatpush2.bf16.msra.mxu0 0
  %1772 = vmatprep.subr.bf16.mxu0 0
  %1773 = vmatpush2.bf16.msra.mxu0 0
  %1774 = vmatprep.subr.bf16.mxu0 0
  %1775 = vmatpush2.bf16.msra.mxu0 0
  %1776 = vmatprep.mubr.bf16.mxu0 0
  %1777 = vmatmul.mubr.bf16.gmra.mxu0 %v1702
  %v1778 = vpop.f32.mrf.mxu0
  %v1779 = vadd.f32 0.0, %v1778
  %v1780 = vpop.f32.mrf.mxu0
  %v1781 = vpop.f32.mrf.mxu0
  %v1782 = vpop.f32.mrf.mxu0
  %1783 = vdwg.mxu0
  %v1784 = vadd.f32 %v825, %v1738
  %v1785 = vxor.u32 %v1784, 2147483648
  %v1786 = vmul.f32 %v1785, 1.442695
  %v1787 = vpow.pop %v1786
  %v1788 = vadd.f32 %v1787, 1.0
  %v1789 = vrcp.pop %v1788
  %v1790 = vmul.f32 1.0, %v1789
  %v1791 = vadd.f32 %v827, %v1740
  %v1792 = vxor.u32 %v1791, 2147483648
  %v1793 = vmul.f32 %v1792, 1.442695
  %v1794 = vpow.pop %v1793
  %v1795 = vadd.f32 %v1794, 1.0
  %v1796 = vrcp.pop %v1795
  %v1797 = vmul.f32 1.0, %v1796
  %v1798 = vadd.f32 %v1779, %v1166
  %v1799 = vmul.f32 %v1790, %v1798
  %v1800 = vadd.f32 %v892, %v1799
  %v1801 = vtanh.pop %v1800
  %v1802 = vsub.f32 1.0, %v1797
  %v1803 = vmul.f32 %v1802, %v1801
  %v1804 = vmul.f32 %v1797, %v1700
  %v1805 = vadd.f32 %v1803, %v1804
  %1806 = vst [vmem:[#allocation2 + $0x30] sm:$0xff] %v1805
  %v1807 = vpack.c.bf16 %v1805, %v1805
  %1808 = vmatprep.subr.bf16.mxu0 %v1041
  %1809 = vmatpush1.bf16.msra.mxu0 %v1040
  %1810 = vmatprep.subr.bf16.mxu0 %v1038
  %1811 = vmatpush1.bf16.msra.mxu0 %v1037
  %1812 = vmatprep.subr.bf16.mxu0 %v1035
  %1813 = vmatpush1.bf16.msra.mxu0 %v1034
  %1814 = vmatprep.subr.bf16.mxu0 %v1032
  %1815 = vmatpush1.bf16.msra.mxu0 %v1031
  %1816 = vmatprep.subr.bf16.mxu0 %v1029
  %1817 = vmatpush1.bf16.msra.mxu0 %v1028
  %1818 = vmatprep.subr.bf16.mxu0 %v1026
  %1819 = vmatpush1.bf16.msra.mxu0 %v1025
  %1820 = vmatprep.subr.bf16.mxu0 %v1023
  %1821 = vmatpush1.bf16.msra.mxu0 %v1022
  %1822 = vmatprep.subr.bf16.mxu0 %v1020
  %1823 = vmatpush1.bf16.msra.mxu0 %v1019
  %1824 = vmatprep.subr.bf16.mxu0 0
  %1825 = vmatpush2.bf16.msra.mxu0 0
  %1826 = vmatprep.subr.bf16.mxu0 0
  %1827 = vmatpush2.bf16.msra.mxu0 0
  %1828 = vmatprep.subr.bf16.mxu0 0
  %1829 = vmatpush2.bf16.msra.mxu0 0
  %1830 = vmatprep.subr.bf16.mxu0 0
  %1831 = vmatpush2.bf16.msra.mxu0 0
  %1832 = vmatprep.subr.bf16.mxu0 0
  %1833 = vmatpush2.bf16.msra.mxu0 0
  %1834 = vmatprep.subr.bf16.mxu0 0
  %1835 = vmatpush2.bf16.msra.mxu0 0
  %1836 = vmatprep.subr.bf16.mxu0 0
  %1837 = vmatpush2.bf16.msra.mxu0 0
  %1838 = vmatprep.subr.bf16.mxu0 0
  %1839 = vmatpush2.bf16.msra.mxu0 0
  %1840 = vmatprep.mubr.bf16.mxu0 0
  %1841 = vmatmul.mubr.bf16.gmra.mxu0 %v1807
  %v1842 = vpop.f32.mrf.mxu0
  %v1843 = vadd.f32 0.0, %v1842
  %v1844 = vpop.f32.mrf.mxu0
  %v1845 = vadd.f32 0.0, %v1844
  %v1846 = vpop.f32.mrf.mxu0
  %v1847 = vpop.f32.mrf.mxu0
  %1848 = vdwg.mxu0
  %1849 = vmatprep.subr.bf16.mxu0 0
  %1850 = vmatpush1.bf16.msra.mxu0 %v1042
  %1851 = vmatprep.subr.bf16.mxu0 0
  %1852 = vmatpush1.bf16.msra.mxu0 %v1039
  %1853 = vmatprep.subr.bf16.mxu0 0
  %1854 = vmatpush1.bf16.msra.mxu0 %v1036
  %1855 = vmatprep.subr.bf16.mxu0 0
  %1856 = vmatpush1.bf16.msra.mxu0 %v1033
  %1857 = vmatprep.subr.bf16.mxu0 0
  %1858 = vmatpush1.bf16.msra.mxu0 %v1030
  %1859 = vmatprep.subr.bf16.mxu0 0
  %1860 = vmatpush1.bf16.msra.mxu0 %v1027
  %1861 = vmatprep.subr.bf16.mxu0 0
  %1862 = vmatpush1.bf16.msra.mxu0 %v1024
  %1863 = vmatprep.subr.bf16.mxu0 0
  %1864 = vmatpush1.bf16.msra.mxu0 %v1021
  %1865 = vmatprep.subr.bf16.mxu0 0
  %1866 = vmatpush2.bf16.msra.mxu0 0
  %1867 = vmatprep.subr.bf16.mxu0 0
  %1868 = vmatpush2.bf16.msra.mxu0 0
  %1869 = vmatprep.subr.bf16.mxu0 0
  %1870 = vmatpush2.bf16.msra.mxu0 0
  %1871 = vmatprep.subr.bf16.mxu0 0
  %1872 = vmatpush2.bf16.msra.mxu0 0
  %1873 = vmatprep.subr.bf16.mxu0 0
  %1874 = vmatpush2.bf16.msra.mxu0 0
  %1875 = vmatprep.subr.bf16.mxu0 0
  %1876 = vmatpush2.bf16.msra.mxu0 0
  %1877 = vmatprep.subr.bf16.mxu0 0
  %1878 = vmatpush2.bf16.msra.mxu0 0
  %1879 = vmatprep.subr.bf16.mxu0 0
  %1880 = vmatpush2.bf16.msra.mxu0 0
  %1881 = vmatprep.mubr.bf16.mxu0 0
  %1882 = vmatmul.mubr.bf16.gmra.mxu0 %v1807
  %v1883 = vpop.f32.mrf.mxu0
  %v1884 = vadd.f32 0.0, %v1883
  %v1885 = vpop.f32.mrf.mxu0
  %v1886 = vpop.f32.mrf.mxu0
  %v1887 = vpop.f32.mrf.mxu0
  %1888 = vdwg.mxu0
  %v1889 = vadd.f32 %v829, %v1843
  %v1890 = vxor.u32 %v1889, 2147483648
  %v1891 = vmul.f32 %v1890, 1.442695
  %v1892 = vpow.pop %v1891
  %v1893 = vadd.f32 %v1892, 1.0
  %v1894 = vrcp.pop %v1893
  %v1895 = vmul.f32 1.0, %v1894
  %v1896 = vadd.f32 %v831, %v1845
  %v1897 = vxor.u32 %v1896, 2147483648
  %v1898 = vmul.f32 %v1897, 1.442695
  %v1899 = vpow.pop %v1898
  %v1900 = vadd.f32 %v1899, 1.0
  %v1901 = vrcp.pop %v1900
  %v1902 = vmul.f32 1.0, %v1901
  %v1903 = vadd.f32 %v1884, %v1166
  %v1904 = vmul.f32 %v1895, %v1903
  %v1905 = vadd.f32 %v895, %v1904
  %v1906 = vtanh.pop %v1905
  %v1907 = vsub.f32 1.0, %v1902
  %v1908 = vmul.f32 %v1907, %v1906
  %v1909 = vmul.f32 %v1902, %v1805
  %v1910 = vadd.f32 %v1908, %v1909
  %1911 = vst [vmem:[#allocation2 + $0x38] sm:$0xff] %v1910
  %v1912 = vld [vmem:[#allocation2] sm:$0xff]
  %v1913 = vld [vmem:[#allocation2 + $0x8] sm:$0xff]
  %v1914 = vld [vmem:[#allocation2 + $0x10] sm:$0xff]
  %v1915 = vld [vmem:[#allocation2 + $0x18] sm:$0xff]
  %v1916 = vld [vmem:[#allocation2 + $0x20] sm:$0xff]
  %v1917 = vld [vmem:[#allocation2 + $0x28] sm:$0xff]
  %v1918 = vld [vmem:[#allocation2 + $0x30] sm:$0xff]
  %v1919 = vld [vmem:[#allocation2 + $0x38] sm:$0xff]
  %v1920 = vpack.c.bf16 %v1913, %v1912
  %v1921 = vpack.c.bf16 %v1915, %v1914
  %v1922 = vpack.c.bf16 %v1917, %v1916
  %v1923 = vpack.c.bf16 %v1919, %v1918
  %v1924 = vld [vmem:[%s13] sm:$0xf]
  %v1925 = vld [vmem:[%s13 + $0x4] sm:$0xf]
  %v1926 = vld [vmem:[%s13 + $0x8] sm:$0xf]
  %v1927 = vld [vmem:[%s13 + $0xc] sm:$0xf]
  %v1928 = vld [vmem:[%s13 + $0x10] sm:$0xf]
  %v1929 = vld [vmem:[%s13 + $0x14] sm:$0xf]
  %v1930 = vld [vmem:[%s13 + $0x18] sm:$0xf]
  %v1931 = vld [vmem:[%s13 + $0x1c] sm:$0xf]
  %v1932 = vld [vmem:[%s13 + $0x20] sm:$0xf]
  %v1933 = vld [vmem:[%s13 + $0x24] sm:$0xf]
  %v1934 = vld [vmem:[%s13 + $0x28] sm:$0xf]
  %v1935 = vld [vmem:[%s13 + $0x2c] sm:$0xf]
  %v1936 = vld [vmem:[%s13 + $0x30] sm:$0xf]
  %v1937 = vld [vmem:[%s13 + $0x34] sm:$0xf]
  %v1938 = vld [vmem:[%s13 + $0x38] sm:$0xf]
  %v1939 = vld [vmem:[%s13 + $0x3c] sm:$0xf]
  %v1940 = vld [vmem:[%s14] sm:$0x1]
  %v1942 = vlaneseq
  %v1943 = vshrl.u32 %v1942, 7
  %v1944 = vsub.s32 0, %v1943
  %v1945 = vrot.slane %v1940, %v1944
  %v1963 = vunpack.c.l.b16 %v1924
  %v1964 = vunpack.c.l.b16 %v1925
  %v1965 = vunpack.c.l.b16 %v1926
  %v1966 = vunpack.c.l.b16 %v1927
  %v1967 = vunpack.c.l.b16 %v1928
  %v1968 = vunpack.c.l.b16 %v1929
  %v1969 = vunpack.c.l.b16 %v1930
  %v1970 = vunpack.c.l.b16 %v1931
  %v1971 = vunpack.c.l.b16 %v1932
  %v1972 = vunpack.c.l.b16 %v1933
  %v1973 = vunpack.c.l.b16 %v1934
  %v1974 = vunpack.c.l.b16 %v1935
  %v1975 = vunpack.c.l.b16 %v1936
  %v1976 = vunpack.c.l.b16 %v1937
  %v1977 = vunpack.c.l.b16 %v1938
  %v1978 = vunpack.c.l.b16 %v1939
  %v1979 = vpack.c.b16 %v1964, %v1963
  %v1980 = vpack.c.b16 %v1966, %v1965
  %v1981 = vpack.c.b16 %v1968, %v1967
  %v1982 = vpack.c.b16 %v1970, %v1969
  %v1983 = vpack.c.b16 %v1972, %v1971
  %v1984 = vpack.c.b16 %v1974, %v1973
  %v1985 = vpack.c.b16 %v1976, %v1975
  %v1986 = vpack.c.b16 %v1978, %v1977
  %1995 = vmatprep.subr.bf16.mxu0 0
  %1996 = vmatpush1.bf16.msra.mxu0 %v1986
  %1997 = vmatprep.subr.bf16.mxu0 0
  %1998 = vmatpush1.bf16.msra.mxu0 %v1985
  %1999 = vmatprep.subr.bf16.mxu0 0
  %2000 = vmatpush1.bf16.msra.mxu0 %v1984
  %2001 = vmatprep.subr.bf16.mxu0 0
  %2002 = vmatpush1.bf16.msra.mxu0 %v1983
  %2003 = vmatprep.subr.bf16.mxu0 0
  %2004 = vmatpush1.bf16.msra.mxu0 %v1982
  %2005 = vmatprep.subr.bf16.mxu0 0
  %2006 = vmatpush1.bf16.msra.mxu0 %v1981
  %2007 = vmatprep.subr.bf16.mxu0 0
  %2008 = vmatpush1.bf16.msra.mxu0 %v1980
  %2009 = vmatprep.subr.bf16.mxu0 0
  %2010 = vmatpush1.bf16.msra.mxu0 %v1979
  %2011 = vmatprep.subr.bf16.mxu0 0
  %2012 = vmatpush2.bf16.msra.mxu0 0
  %2013 = vmatprep.subr.bf16.mxu0 0
  %2014 = vmatpush2.bf16.msra.mxu0 0
  %2015 = vmatprep.subr.bf16.mxu0 0
  %2016 = vmatpush2.bf16.msra.mxu0 0
  %2017 = vmatprep.subr.bf16.mxu0 0
  %2018 = vmatpush2.bf16.msra.mxu0 0
  %2019 = vmatprep.subr.bf16.mxu0 0
  %2020 = vmatpush2.bf16.msra.mxu0 0
  %2021 = vmatprep.subr.bf16.mxu0 0
  %2022 = vmatpush2.bf16.msra.mxu0 0
  %2023 = vmatprep.subr.bf16.mxu0 0
  %2024 = vmatpush2.bf16.msra.mxu0 0
  %2025 = vmatprep.subr.bf16.mxu0 0
  %2026 = vmatpush2.bf16.msra.mxu0 0
  %2027 = vmatprep.mubr.bf16.mxu0 0
  %2028 = vmatmul.mubr.bf16.gmra.mxu0 %v1920
  %v2029 = vpop.f32.mrf.mxu0
  %v2030 = vadd.f32 %v1945, %v2029
  %v2031 = vpop.f32.mrf.mxu0
  %v2032 = vpop.f32.mrf.mxu0
  %v2033 = vadd.f32 %v1945, %v2032
  %v2034 = vpop.f32.mrf.mxu0
  %2035 = vmatprep.mubr.bf16.mxu0 0
  %2036 = vmatmul.mubr.bf16.gmra.mxu0 %v1921
  %v2037 = vpop.f32.mrf.mxu0
  %v2038 = vadd.f32 %v1945, %v2037
  %v2039 = vpop.f32.mrf.mxu0
  %v2040 = vpop.f32.mrf.mxu0
  %v2041 = vadd.f32 %v1945, %v2040
  %v2042 = vpop.f32.mrf.mxu0
  %2043 = vmatprep.mubr.bf16.mxu0 0
  %2044 = vmatmul.mubr.bf16.gmra.mxu0 %v1922
  %v2045 = vpop.f32.mrf.mxu0
  %v2046 = vadd.f32 %v1945, %v2045
  %v2047 = vpop.f32.mrf.mxu0
  %v2048 = vpop.f32.mrf.mxu0
  %v2049 = vadd.f32 %v1945, %v2048
  %v2050 = vpop.f32.mrf.mxu0
  %2051 = vmatprep.mubr.bf16.mxu0 0
  %2052 = vmatmul.mubr.bf16.gmra.mxu0 %v1923
  %v2053 = vpop.f32.mrf.mxu0
  %v2054 = vadd.f32 %v1945, %v2053
  %v2055 = vpop.f32.mrf.mxu0
  %v2056 = vpop.f32.mrf.mxu0
  %v2057 = vadd.f32 %v1945, %v2056
  %v2058 = vpop.f32.mrf.mxu0
  %2059 = vdwg.mxu0
  %v2060 = vmax.f32 %v2030, 0.0
  %v2061 = vmax.f32 %v2033, 0.0
  %v2062 = vmax.f32 %v2038, 0.0
  %v2063 = vmax.f32 %v2041, 0.0
  %v2064 = vmax.f32 %v2046, 0.0
  %v2065 = vmax.f32 %v2049, 0.0
  %v2066 = vmax.f32 %v2054, 0.0
  %v2067 = vmax.f32 %v2057, 0.0
  %vm2068 = vcmp.ne.f32.partialorder %v2030, %v2030
  %vm2069 = vcmp.ne.f32.partialorder %v2033, %v2033
  %vm2070 = vcmp.ne.f32.partialorder %v2038, %v2038
  %vm2071 = vcmp.ne.f32.partialorder %v2041, %v2041
  %vm2072 = vcmp.ne.f32.partialorder %v2046, %v2046
  %vm2073 = vcmp.ne.f32.partialorder %v2049, %v2049
  %vm2074 = vcmp.ne.f32.partialorder %v2054, %v2054
  %vm2075 = vcmp.ne.f32.partialorder %v2057, %v2057
  %v2076 = vadd.f32 %v2030, 0.0
  %v2077 = vadd.f32 %v2033, 0.0
  %v2078 = vadd.f32 %v2038, 0.0
  %v2079 = vadd.f32 %v2041, 0.0
  %v2080 = vadd.f32 %v2046, 0.0
  %v2081 = vadd.f32 %v2049, 0.0
  %v2082 = vadd.f32 %v2054, 0.0
  %v2083 = vadd.f32 %v2057, 0.0
  %v2084 = vand.u32 2147483647, %v2030
  %v2085 = vand.u32 2147483647, %v2033
  %v2086 = vand.u32 2147483647, %v2038
  %v2087 = vand.u32 2147483647, %v2041
  %v2088 = vand.u32 2147483647, %v2046
  %v2089 = vand.u32 2147483647, %v2049
  %v2090 = vand.u32 2147483647, %v2054
  %v2091 = vand.u32 2147483647, %v2057
  %v2092 = vsub.f32 0.0, %v2084
  %v2093 = vsub.f32 0.0, %v2085
  %v2094 = vsub.f32 0.0, %v2086
  %v2095 = vsub.f32 0.0, %v2087
  %v2096 = vsub.f32 0.0, %v2088
  %v2097 = vsub.f32 0.0, %v2089
  %v2098 = vsub.f32 0.0, %v2090
  %v2099 = vsub.f32 0.0, %v2091
  %v2100 = vmul.f32 %v2092, 1.442695
  %v2101 = vpow.pop %v2100
  %v2102 = vmul.f32 %v2093, 1.442695
  %v2103 = vpow.pop %v2102
  %v2104 = vmul.f32 %v2094, 1.442695
  %v2105 = vpow.pop %v2104
  %v2106 = vmul.f32 %v2095, 1.442695
  %v2107 = vpow.pop %v2106
  %v2108 = vmul.f32 %v2096, 1.442695
  %v2109 = vpow.pop %v2108
  %v2110 = vmul.f32 %v2097, 1.442695
  %v2111 = vpow.pop %v2110
  %v2112 = vmul.f32 %v2098, 1.442695
  %v2113 = vpow.pop %v2112
  %v2114 = vmul.f32 %v2099, 1.442695
  %v2115 = vpow.pop %v2114
  %v2116 = vadd.f32 %v2101, 1.0
  %v2117 = vlog2.pop %v2116
  %v2118 = vmul.f32 %v2117, 0.6931472
  %v2119 = vmul.f32 -0.5, %v2101
  %v2120 = vadd.f32 %v2119, 1.0
  %v2121 = vmul.f32 %v2120, %v2101
  %v2122 = vand.u32 2147483647, %v2101
  %vm2123 = vcmp.lt.f32.partialorder %v2122, 0.0004427343
  %v2124 = vsel %vm2123, %v2121, %v2118
  %v2125 = vadd.f32 %v2103, 1.0
  %v2126 = vlog2.pop %v2125
  %v2127 = vmul.f32 %v2126, 0.6931472
  %v2128 = vmul.f32 -0.5, %v2103
  %v2129 = vadd.f32 %v2128, 1.0
  %v2130 = vmul.f32 %v2129, %v2103
  %v2131 = vand.u32 2147483647, %v2103
  %vm2132 = vcmp.lt.f32.partialorder %v2131, 0.0004427343
  %v2133 = vsel %vm2132, %v2130, %v2127
  %v2134 = vadd.f32 %v2105, 1.0
  %v2135 = vlog2.pop %v2134
  %v2136 = vmul.f32 %v2135, 0.6931472
  %v2137 = vmul.f32 -0.5, %v2105
  %v2138 = vadd.f32 %v2137, 1.0
  %v2139 = vmul.f32 %v2138, %v2105
  %v2140 = vand.u32 2147483647, %v2105
  %vm2141 = vcmp.lt.f32.partialorder %v2140, 0.0004427343
  %v2142 = vsel %vm2141, %v2139, %v2136
  %v2143 = vadd.f32 %v2107, 1.0
  %v2144 = vlog2.pop %v2143
  %v2145 = vmul.f32 %v2144, 0.6931472
  %v2146 = vmul.f32 -0.5, %v2107
  %v2147 = vadd.f32 %v2146, 1.0
  %v2148 = vmul.f32 %v2147, %v2107
  %v2149 = vand.u32 2147483647, %v2107
  %vm2150 = vcmp.lt.f32.partialorder %v2149, 0.0004427343
  %v2151 = vsel %vm2150, %v2148, %v2145
  %v2152 = vadd.f32 %v2109, 1.0
  %v2153 = vlog2.pop %v2152
  %v2154 = vmul.f32 %v2153, 0.6931472
  %v2155 = vmul.f32 -0.5, %v2109
  %v2156 = vadd.f32 %v2155, 1.0
  %v2157 = vmul.f32 %v2156, %v2109
  %v2158 = vand.u32 2147483647, %v2109
  %vm2159 = vcmp.lt.f32.partialorder %v2158, 0.0004427343
  %v2160 = vsel %vm2159, %v2157, %v2154
  %v2161 = vadd.f32 %v2111, 1.0
  %v2162 = vlog2.pop %v2161
  %v2163 = vmul.f32 %v2162, 0.6931472
  %v2164 = vmul.f32 -0.5, %v2111
  %v2165 = vadd.f32 %v2164, 1.0
  %v2166 = vmul.f32 %v2165, %v2111
  %v2167 = vand.u32 2147483647, %v2111
  %vm2168 = vcmp.lt.f32.partialorder %v2167, 0.0004427343
  %v2169 = vsel %vm2168, %v2166, %v2163
  %v2170 = vadd.f32 %v2113, 1.0
  %v2171 = vlog2.pop %v2170
  %v2172 = vmul.f32 %v2171, 0.6931472
  %v2173 = vmul.f32 -0.5, %v2113
  %v2174 = vadd.f32 %v2173, 1.0
  %v2175 = vmul.f32 %v2174, %v2113
  %v2176 = vand.u32 2147483647, %v2113
  %vm2177 = vcmp.lt.f32.partialorder %v2176, 0.0004427343
  %v2178 = vsel %vm2177, %v2175, %v2172
  %v2179 = vadd.f32 %v2115, 1.0
  %v2180 = vlog2.pop %v2179
  %v2181 = vmul.f32 %v2180, 0.6931472
  %v2182 = vmul.f32 -0.5, %v2115
  %v2183 = vadd.f32 %v2182, 1.0
  %v2184 = vmul.f32 %v2183, %v2115
  %v2185 = vand.u32 2147483647, %v2115
  %vm2186 = vcmp.lt.f32.partialorder %v2185, 0.0004427343
  %v2187 = vsel %vm2186, %v2184, %v2181
  %v2188 = vadd.f32 %v2060, %v2124
  %v2189 = vadd.f32 %v2061, %v2133
  %v2190 = vadd.f32 %v2062, %v2142
  %v2191 = vadd.f32 %v2063, %v2151
  %v2192 = vadd.f32 %v2064, %v2160
  %v2193 = vadd.f32 %v2065, %v2169
  %v2194 = vadd.f32 %v2066, %v2178
  %v2195 = vadd.f32 %v2067, %v2187
  %v2196 = vsel %vm2068, %v2076, %v2188
  %v2197 = vsel %vm2069, %v2077, %v2189
  %v2198 = vsel %vm2070, %v2078, %v2190
  %v2199 = vsel %vm2071, %v2079, %v2191
  %v2200 = vsel %vm2072, %v2080, %v2192
  %v2201 = vsel %vm2073, %v2081, %v2193
  %v2202 = vsel %vm2074, %v2082, %v2194
  %v2203 = vsel %vm2075, %v2083, %v2195
  %v2204 = vmul.f32 %v2197, 0.5
  %v2205 = vmul.f32 %v2196, 0.5
  %v2206 = vadd.f32 %v2204, %v2205
  %v2207 = vmul.f32 %v614, %v2206
  %v2208 = vmul.f32 %v616, %v2197
  %v2209 = vmul.f32 %v618, %v2198
  %v2210 = vmul.f32 %v620, %v2199
  %v2211 = vmul.f32 %v622, %v2200
  %v2212 = vmul.f32 %v624, %v2201
  %v2213 = vmul.f32 %v626, %v2202
  %v2214 = vmul.f32 %v628, %v2203
  %v2215 = vsel %vm103, %v2207, 0.0
  %2216 = vadd.xlane.f32.xlu0 %v2215
  %v2217 = vpop.xlane.xlu0 %2216
  %v2218 = vsel %vm103, %v2208, 0.0
  %2219 = vadd.xlane.f32.xlu0 %v2218
  %v2220 = vpop.xlane.xlu0 %2219
  %v2221 = vsel %vm103, %v2209, 0.0
  %2222 = vadd.xlane.f32.xlu0 %v2221
  %v2223 = vpop.xlane.xlu0 %2222
  %v2224 = vsel %vm103, %v2210, 0.0
  %2225 = vadd.xlane.f32.xlu0 %v2224
  %v2226 = vpop.xlane.xlu0 %2225
  %v2227 = vsel %vm103, %v2211, 0.0
  %2228 = vadd.xlane.f32.xlu0 %v2227
  %v2229 = vpop.xlane.xlu0 %2228
  %v2230 = vsel %vm103, %v2212, 0.0
  %2231 = vadd.xlane.f32.xlu0 %v2230
  %v2232 = vpop.xlane.xlu0 %2231
  %v2233 = vsel %vm103, %v2213, 0.0
  %2234 = vadd.xlane.f32.xlu0 %v2233
  %v2235 = vpop.xlane.xlu0 %2234
  %v2236 = vsel %vm103, %v2214, 0.0
  %2237 = vadd.xlane.f32.xlu0 %v2236
  %v2238 = vpop.xlane.xlu0 %2237
  %v2239 = vpack.c.bf16 %v78, %v77
  %v2240 = vpack.c.bf16 %v80, %v79
  %v2241 = vpack.c.bf16 %v82, %v81
  %v2242 = vpack.c.bf16 %v84, %v83
  %v2243 = vld [vmem:[%s18] sm:$0xf]
  %v2244 = vld [vmem:[%s18 + $0x4] sm:$0xf]
  %v2245 = vld [vmem:[%s19] sm:$0x1]
  %v2247 = vlaneseq
  %v2248 = vshrl.u32 %v2247, 7
  %v2249 = vsub.s32 0, %v2248
  %v2250 = vrot.slane %v2245, %v2249
  %v2254 = vunpack.c.l.b16 %v2243
  %v2255 = vunpack.c.l.b16 %v2244
  %v2256 = vpack.c.b16 %v2255, %v2254
  %vm2257 = vcmask 121856
  %v2259 = vsel %vm2257, %v2239, 0
  %v2262 = vsel %vm2257, %v2240, 0
  %v2265 = vsel %vm2257, %v2241, 0
  %v2268 = vsel %vm2257, %v2242, 0
  %vm2270 = vcmask 1046528
  %vm2271 = vcmask 1047552
  %v2272 = vsel %vm2270, 4294967295, 65535
  %v2273 = vsel %vm2271, %v2272, 0
  %v2275 = vand.u32 %v2256, %v2273
  %2277 = vmatprep.subr.bf16.mxu0 0
  %2278 = vmatpush1.bf16.msra.mxu0 0
  %2279 = vmatprep.subr.bf16.mxu0 0
  %2280 = vmatpush1.bf16.msra.mxu0 0
  %2281 = vmatprep.subr.bf16.mxu0 0
  %2282 = vmatpush1.bf16.msra.mxu0 0
  %2283 = vmatprep.subr.bf16.mxu0 0
  %2284 = vmatpush1.bf16.msra.mxu0 0
  %2285 = vmatprep.subr.bf16.mxu0 0
  %2286 = vmatpush1.bf16.msra.mxu0 0
  %2287 = vmatprep.subr.bf16.mxu0 0
  %2288 = vmatpush1.bf16.msra.mxu0 0
  %2289 = vmatprep.subr.bf16.mxu0 0
  %2290 = vmatpush1.bf16.msra.mxu0 0
  %2291 = vmatprep.subr.bf16.mxu0 0
  %2292 = vmatpush1.bf16.msra.mxu0 %v2275
  %2293 = vmatprep.subr.bf16.mxu0 0
  %2294 = vmatpush2.bf16.msra.mxu0 0
  %2295 = vmatprep.subr.bf16.mxu0 0
  %2296 = vmatpush2.bf16.msra.mxu0 0
  %2297 = vmatprep.subr.bf16.mxu0 0
  %2298 = vmatpush2.bf16.msra.mxu0 0
  %2299 = vmatprep.subr.bf16.mxu0 0
  %2300 = vmatpush2.bf16.msra.mxu0 0
  %2301 = vmatprep.subr.bf16.mxu0 0
  %2302 = vmatpush2.bf16.msra.mxu0 0
  %2303 = vmatprep.subr.bf16.mxu0 0
  %2304 = vmatpush2.bf16.msra.mxu0 0
  %2305 = vmatprep.subr.bf16.mxu0 0
  %2306 = vmatpush2.bf16.msra.mxu0 0
  %2307 = vmatprep.subr.bf16.mxu0 0
  %2308 = vmatpush2.bf16.msra.mxu0 0
  %2309 = vmatprep.mubr.bf16.mxu0 0
  %2310 = vmatmul.mubr.bf16.gmra.mxu0 %v2259
  %v2311 = vpop.f32.mrf.mxu0
  %v2312 = vadd.f32 %v2250, %v2311
  %v2313 = vpop.f32.mrf.mxu0
  %v2314 = vpop.f32.mrf.mxu0
  %v2315 = vadd.f32 %v2250, %v2314
  %v2316 = vpop.f32.mrf.mxu0
  %2317 = vmatprep.mubr.bf16.mxu0 0
  %2318 = vmatmul.mubr.bf16.gmra.mxu0 %v2262
  %v2319 = vpop.f32.mrf.mxu0
  %v2320 = vadd.f32 %v2250, %v2319
  %v2321 = vpop.f32.mrf.mxu0
  %v2322 = vpop.f32.mrf.mxu0
  %v2323 = vadd.f32 %v2250, %v2322
  %v2324 = vpop.f32.mrf.mxu0
  %2325 = vmatprep.mubr.bf16.mxu0 0
  %2326 = vmatmul.mubr.bf16.gmra.mxu0 %v2265
  %v2327 = vpop.f32.mrf.mxu0
  %v2328 = vadd.f32 %v2250, %v2327
  %v2329 = vpop.f32.mrf.mxu0
  %v2330 = vpop.f32.mrf.mxu0
  %v2331 = vadd.f32 %v2250, %v2330
  %v2332 = vpop.f32.mrf.mxu0
  %2333 = vmatprep.mubr.bf16.mxu0 0
  %2334 = vmatmul.mubr.bf16.gmra.mxu0 %v2268
  %v2335 = vpop.f32.mrf.mxu0
  %v2336 = vadd.f32 %v2250, %v2335
  %v2337 = vpop.f32.mrf.mxu0
  %v2338 = vpop.f32.mrf.mxu0
  %v2339 = vadd.f32 %v2250, %v2338
  %v2340 = vpop.f32.mrf.mxu0
  %2341 = vdwg.mxu0
  %v2342 = vmax.f32 %v2312, 0.0
  %v2343 = vmax.f32 %v2315, 0.0
  %v2344 = vmax.f32 %v2320, 0.0
  %v2345 = vmax.f32 %v2323, 0.0
  %v2346 = vmax.f32 %v2328, 0.0
  %v2347 = vmax.f32 %v2331, 0.0
  %v2348 = vmax.f32 %v2336, 0.0
  %v2349 = vmax.f32 %v2339, 0.0
  %2350 = vadd.xlane.f32.xlu0 %v2342
  %v2351 = vpop.xlane.xlu0 %2350
  %2352 = vadd.xlane.f32.xlu0 %v2343
  %v2353 = vpop.xlane.xlu0 %2352
  %2354 = vadd.xlane.f32.xlu0 %v2344
  %v2355 = vpop.xlane.xlu0 %2354
  %2356 = vadd.xlane.f32.xlu0 %v2345
  %v2357 = vpop.xlane.xlu0 %2356
  %2358 = vadd.xlane.f32.xlu0 %v2346
  %v2359 = vpop.xlane.xlu0 %2358
  %2360 = vadd.xlane.f32.xlu0 %v2347
  %v2361 = vpop.xlane.xlu0 %2360
  %2362 = vadd.xlane.f32.xlu0 %v2348
  %v2363 = vpop.xlane.xlu0 %2362
  %2364 = vadd.xlane.f32.xlu0 %v2349
  %v2365 = vpop.xlane.xlu0 %2364
  %v2366 = vmul.f32 %v2351, 0.3
  %v2367 = vmul.f32 %v2353, 0.3
  %v2368 = vmul.f32 %v2355, 0.3
  %v2369 = vmul.f32 %v2357, 0.3
  %v2370 = vmul.f32 %v2359, 0.3
  %v2371 = vmul.f32 %v2361, 0.3
  %v2372 = vmul.f32 %v2363, 0.3
  %v2373 = vmul.f32 %v2365, 0.3
  %v2374 = vadd.f32 %v2217, %v2366
  %v2375 = vadd.f32 %v2220, %v2367
  %v2376 = vadd.f32 %v2223, %v2368
  %v2377 = vadd.f32 %v2226, %v2369
  %v2378 = vadd.f32 %v2229, %v2370
  %v2379 = vadd.f32 %v2232, %v2371
  %v2380 = vadd.f32 %v2235, %v2372
  %v2381 = vadd.f32 %v2238, %v2373
  %2390 = vrot.lane.b32.xlu0 %v2207, 10
  %v2391 = vpop.permute.xlu0 %2390
  %2392 = vrot.lane.b32.xlu0 %v2208, 10
  %v2393 = vpop.permute.xlu0 %2392
  %2394 = vrot.lane.b32.xlu0 %v2209, 10
  %v2395 = vpop.permute.xlu0 %2394
  %2396 = vrot.lane.b32.xlu0 %v2210, 10
  %v2397 = vpop.permute.xlu0 %2396
  %2398 = vrot.lane.b32.xlu0 %v2211, 10
  %v2399 = vpop.permute.xlu0 %2398
  %2400 = vrot.lane.b32.xlu0 %v2212, 10
  %v2401 = vpop.permute.xlu0 %2400
  %2402 = vrot.lane.b32.xlu0 %v2213, 10
  %v2403 = vpop.permute.xlu0 %2402
  %2404 = vrot.lane.b32.xlu0 %v2214, 10
  %v2405 = vpop.permute.xlu0 %2404
  %v2414 = vsel %vm103, %v2206, %v2391
  %v2415 = vsel %vm103, %v2197, %v2393
  %v2416 = vsel %vm103, %v2198, %v2395
  %v2417 = vsel %vm103, %v2199, %v2397
  %v2418 = vsel %vm103, %v2200, %v2399
  %v2419 = vsel %vm103, %v2201, %v2401
  %v2420 = vsel %vm103, %v2202, %v2403
  %v2421 = vsel %vm103, %v2203, %v2405
  %vm2422 = vcmask 162816
  %v2423 = vsel %vm2422, %v2414, %v2374
  %v2424 = vsel %vm2422, %v2415, %v2375
  %v2425 = vsel %vm2422, %v2416, %v2376
  %v2426 = vsel %vm2422, %v2417, %v2377
  %v2427 = vsel %vm2422, %v2418, %v2378
  %v2428 = vsel %vm2422, %v2419, %v2379
  %v2429 = vsel %vm2422, %v2420, %v2380
  %v2430 = vsel %vm2422, %v2421, %v2381
  %vm2431 = vcmask 171008
  %v2432 = vsel %vm2431, %v2423, 0.0
  %v2433 = vsel %vm2431, %v2424, 0.0
  %v2434 = vsel %vm2431, %v2425, 0.0
  %v2435 = vsel %vm2431, %v2426, 0.0
  %v2436 = vsel %vm2431, %v2427, 0.0
  %v2437 = vsel %vm2431, %v2428, 0.0
  %v2438 = vsel %vm2431, %v2429, 0.0
  %v2439 = vsel %vm2431, %v2430, 0.0
  %2440 = vst [vmem:[%s21] sm:$0xff] %v2432
  %2441 = vst [vmem:[%s21 + $0x8] sm:$0xff] %v2433
  %2442 = vst [vmem:[%s21 + $0x10] sm:$0xff] %v2434
  %2443 = vst [vmem:[%s21 + $0x18] sm:$0xff] %v2435
  %2444 = vst [vmem:[%s21 + $0x20] sm:$0xff] %v2436
  %2445 = vst [vmem:[%s21 + $0x28] sm:$0xff] %v2437
  %2446 = vst [vmem:[%s21 + $0x30] sm:$0xff] %v2438
  %2447 = vst [vmem:[%s21 + $0x38] sm:$0xff] %v2439
  // Predicated region
  $region86: #{gru_causal_mmm_forward.1} parent=0 // pred_check
    _
  $region87: #{gru_causal_mmm_forward.1} parent=0 // pred_check_branch
    %2449 = sbr.rel (0) target = $region89
  $region88: #{gru_causal_mmm_forward.1} parent=0 // pred_region
    _
  $region89: #{gru_causal_mmm_forward.1} parent=0 // pred_fallthru
    _
  // Predicated region
  $region90: #{gru_causal_mmm_forward.1} parent=0 // pred_check
    _
  $region91: #{gru_causal_mmm_forward.1} parent=0 // pred_check_branch
    %2451 = sbr.rel (0) target = $region93
  $region92: #{gru_causal_mmm_forward.1} parent=0 // pred_region
    _
  $region93: #{gru_causal_mmm_forward.1} parent=0 // pred_fallthru
    _

</llo_original>
